<compile_context>
chip_gen: v7x
topology: tpu7x:2x2x1
jax: 0.10.0
libtpu: 0.0.40
codegen_flags: <defaults>
</compile_context>

<pallas_src>
import math
import functools

import jax
import jax.numpy as jnp
from jax import lax
from jax.experimental import pallas as pl
from jax.experimental.pallas import tpu as pltpu


# ----------------------------------------------------------------------------
# Generation-aware configuration
# ----------------------------------------------------------------------------
@functools.lru_cache(maxsize=1)
def _chip_config():
    """Tile preferences / scoped-VMEM limit per TPU generation.

    v4/v5/v6 class chips have 128 MiB VMEM per core -> large scoped limit.
    v7x has 64 MiB per TensorCore -> conservative limit (also the fallback
    for unknown chips / interpret mode).  With bf16 QKV, 512-row q tiles are
    safe on every generation.
    """
    kind = ""
    try:
        kind = jax.devices()[0].device_kind.lower()
    except Exception:
        pass
    is_v5e = ("v5e" in kind) or ("v5 lite" in kind) or ("v5lite" in kind)
    big_vmem = any(tag in kind for tag in ("v4", "v5", "v6"))
    return {
        "vmem_limit": (100 if big_vmem else 48) * 1024 * 1024,
        "tm_pref": 512,
        "tn_pref": 256,
        "tk_pref": 512,
        "tq_pref": 512,      # bf16 K/V makes 512-row q tiles safe even on v7x
        "tkv_pref": 256,     # keep (tq,tkv) score intermediates register-sized
        "kv_buffers": 3 if is_v5e else 2,   # extra K/V pipeline depth on v5e
    }


def _tile(dim, pref, aligns=(128, 8)):
    """Largest tile <= pref that divides `dim`, preferring 128-aligned
    extents (full MXU M dim, lane-dense unmasked stores) and falling back to
    8-aligned; the full dim is always a legal block extent."""
    if dim <= pref:
        return dim
    for a in aligns:
        t = (pref // a) * a
        while t >= a:
            if dim % t == 0:
                return t
            t -= a
    return dim


# ----------------------------------------------------------------------------
# Kernel 1: tiled linear layer  y = x @ W + bias   (x flattened to (B*T, Cin))
# ----------------------------------------------------------------------------
def _linear_kernel(x_ref, w_ref, b_ref, o_ref, acc_ref, *, compute_dtype):
    # x_ref: (tm, tk), w_ref: (tk, tn), b_ref: (1, tn), o_ref/acc_ref: (tm, tn)
    k = pl.program_id(2)

    @pl.when(k == 0)
    def _():
        acc_ref[...] = jnp.zeros_like(acc_ref)

    acc_ref[...] += jnp.dot(
        x_ref[...].astype(compute_dtype),
        w_ref[...].astype(compute_dtype),
        preferred_element_type=jnp.float32,
    )

    @pl.when(k == pl.num_programs(2) - 1)
    def _():
        o_ref[...] = (acc_ref[...] + b_ref[...].astype(jnp.float32)).astype(o_ref.dtype)


def linear(x, w, b, *, out_dtype=None, compute_dtype=jnp.bfloat16):
    """x: (B,T,Cin), w: (Cin,Cout), b: (Cout,) -> (B,T,Cout) in out_dtype."""
    B, T, Cin = x.shape
    Cout = w.shape[1]
    out_dtype = x.dtype if out_dtype is None else out_dtype
    cfg = _chip_config()

    # Flatten (B, T) -> M so row tiles span batch boundaries: fewer weight
    # re-streams from HBM, fewer grid steps, single clean parallel axis.
    M = B * T
    x2 = x.reshape(M, Cin)
    tm = _tile(M, cfg["tm_pref"])
    tn = _tile(Cout, cfg["tn_pref"])
    tk = _tile(Cin, cfg["tk_pref"])
    b2 = b.reshape(1, Cout)

    grid = (M // tm, Cout // tn, Cin // tk)
    kernel = functools.partial(_linear_kernel, compute_dtype=compute_dtype)

    out = pl.pallas_call(
        kernel,
        out_shape=jax.ShapeDtypeStruct((M, Cout), out_dtype),
        grid=grid,
        in_specs=[
            pl.BlockSpec((tm, tk), lambda i, j, k: (i, k)),
            pl.BlockSpec((tk, tn), lambda i, j, k: (k, j)),
            pl.BlockSpec((1, tn), lambda i, j, k: (0, j)),
        ],
        out_specs=pl.BlockSpec((tm, tn), lambda i, j, k: (i, j)),
        scratch_shapes=[pltpu.VMEM((tm, tn), jnp.float32)],
        compiler_params=pltpu.CompilerParams(
            dimension_semantics=("parallel", "parallel", "arbitrary"),
            vmem_limit_bytes=cfg["vmem_limit"],
        ),
        cost_estimate=pl.CostEstimate(
            flops=2 * M * Cin * Cout,
            transcendentals=0,
            bytes_accessed=(
                x.size * x.dtype.itemsize
                + w.size * w.dtype.itemsize * (M // tm)   # W re-streamed per row tile
                + b.size * b.dtype.itemsize
                + M * Cout * jnp.dtype(out_dtype).itemsize
            ),
        ),
    )(x2, w, b2)
    return out.reshape(B, T, Cout)


# ----------------------------------------------------------------------------
# Kernel 2: flash attention (non-causal), head split/merge fused via BlockSpec
# ----------------------------------------------------------------------------
def _flash_attn_kernel(q_ref, k_ref, v_ref, o_ref,
                       qs_sc, m_sc, l_sc, acc_sc, *,
                       scale, compute_dtype, exp_dtype):
    # q_ref: (tq, D), k_ref/v_ref: (tkv, D), o_ref: (tq, D)
    # scratch: qs_sc: (tq, D) compute_dtype (scaled q, reused across ki),
    #          m_sc/l_sc: (tq, 1) f32, acc_sc: (tq, D) f32
    ki = pl.program_id(3)

    @pl.when(ki == 0)
    def _():
        # Fold the softmax scale into q once per (b, h, qi) block; reused for
        # every kv step (removes a (tq, tkv) f32 multiply and a q cast from
        # the inner loop).
        qs_sc[...] = (q_ref[...].astype(jnp.float32) * scale).astype(compute_dtype)
        m_sc[...] = jnp.full_like(m_sc, -jnp.inf)
        l_sc[...] = jnp.zeros_like(l_sc)
        acc_sc[...] = jnp.zeros_like(acc_sc)

    k = k_ref[...].astype(compute_dtype)
    # Contract the last axes of q and k directly (no k.T / XLU transpose).
    s = lax.dot_general(qs_sc[...], k, (((1,), (1,)), ((), ())),
                        preferred_element_type=jnp.float32)          # (tq, tkv)

    m_prev = m_sc[...]
    m_new = jnp.maximum(m_prev, jnp.max(s, axis=-1, keepdims=True))  # (tq, 1)
    alpha = jnp.exp(m_prev - m_new)                                  # (tq, 1)
    # exp_dtype=bf16 is an option on v6e/v7x if profiling shows the EUP as the
    # saturating slot; default stays f32 for accuracy.
    p = jnp.exp((s - m_new).astype(exp_dtype))

    l_sc[...] = alpha * l_sc[...] + jnp.sum(p.astype(jnp.float32),
                                            axis=-1, keepdims=True)
    pv = jnp.dot(p.astype(compute_dtype), v_ref[...].astype(compute_dtype),
                 preferred_element_type=jnp.float32)                 # (tq, D)
    acc_sc[...] = alpha * acc_sc[...] + pv
    m_sc[...] = m_new

    @pl.when(ki == pl.num_programs(3) - 1)
    def _():
        inv = pl.reciprocal(l_sc[...], approx=True)   # EUP slot, nearly free
        o_ref[...] = (acc_sc[...] * inv).astype(o_ref.dtype)


def flash_attention_fused(qkv, *, n_head, n_embd,
                          compute_dtype=jnp.bfloat16,
                          exp_dtype=jnp.float32):
    """qkv: (B, T, 3C) fused projection -> (B, T, C) attention output.

    Head split (q/k/v, per-head D-slice) and merge are expressed entirely in
    the BlockSpec index_maps, so no transposes / splits touch HBM."""
    B, T, C3 = qkv.shape
    C = n_embd
    assert C3 == 3 * C
    H = n_head
    D = C // H
    # TODO(synk): for D < 128, pack several heads per block (or use a full-C
    # block) to keep lane-dense (128) tiles; not needed for this config.
    assert D % 128 == 0, "head dim must be a multiple of 128"

    cfg = _chip_config()
    tq = _tile(T, cfg["tq_pref"])
    tkv = _tile(T, cfg["tkv_pref"])
    scale = 1.0 / math.sqrt(D)
    # Parallel grid extents (B*H*(T//tq)) should be even so both v7x
    # TensorCores get work; true for any even B or H.
    grid = (B, H, T // tq, T // tkv)

    kernel = functools.partial(_flash_attn_kernel, scale=scale,
                               compute_dtype=compute_dtype, exp_dtype=exp_dtype)

    def _kv_spec(idx_map):
        if cfg["kv_buffers"] != 2:
            # Deeper K/V pipelining on v5e (slower HBM, plenty of VMEM).
            return pl.BlockSpec((None, tkv, D), idx_map,
                                pipeline_mode=pl.Buffered(cfg["kv_buffers"]))
        return pl.BlockSpec((None, tkv, D), idx_map)

    itemsize = qkv.dtype.itemsize
    qkv_third_bytes = B * T * C * itemsize        # bytes in each of Q, K, V
    kv_rereads = T // tq                          # K/V streamed once per q tile

    return pl.pallas_call(
        kernel,
        out_shape=jax.ShapeDtypeStruct((B, T, C), qkv.dtype),
        grid=grid,
        in_specs=[
            # channel block index:  q -> h,  k -> H + h,  v -> 2H + h
            pl.BlockSpec((None, tq, D), lambda b, h, qi, ki: (b, qi, h)),
            _kv_spec(lambda b, h, qi, ki: (b, ki, h + H)),
            _kv_spec(lambda b, h, qi, ki: (b, ki, h + 2 * H)),
        ],
        # head merge: write the (tq, D) tile at column block h of (B, T, C)
        out_specs=pl.BlockSpec((None, tq, D), lambda b, h, qi, ki: (b, qi, h)),
        scratch_shapes=[
            pltpu.VMEM((tq, D), compute_dtype),   # scaled q (reused across ki)
            pltpu.VMEM((tq, 1), jnp.float32),     # running max
            pltpu.VMEM((tq, 1), jnp.float32),     # running denom
            pltpu.VMEM((tq, D), jnp.float32),     # accumulator
        ],
        compiler_params=pltpu.CompilerParams(
            dimension_semantics=("parallel", "parallel", "parallel", "arbitrary"),
            vmem_limit_bytes=cfg["vmem_limit"],
        ),
        cost_estimate=pl.CostEstimate(
            flops=4 * B * H * T * T * D,
            transcendentals=B * H * T * T,
            bytes_accessed=(qkv_third_bytes                     # Q, read once
                            + 2 * qkv_third_bytes * kv_rereads  # K, V re-streamed
                            + B * T * C * itemsize),            # output
        ),
    )(qkv, qkv, qkv)


# ----------------------------------------------------------------------------
# Full SelfAttention forward
# ----------------------------------------------------------------------------
def self_attention_forward(x, params, n_head):
    B, T, C = x.shape
    assert C % n_head == 0

    # c_attn: (B,T,C) -> (B,T,3C) fused QKV, emitted in bf16 so the attention
    # kernel streams K/V at half width (accumulation stays f32 throughout).
    qkv = linear(x, params["w_attn"], params["b_attn"], out_dtype=jnp.bfloat16)
    # attention: (B,T,3C) -> (B,T,C) bf16, heads split/merged via index_maps
    y = flash_attention_fused(qkv, n_head=n_head, n_embd=C)
    # c_proj, output back in the input dtype (module semantics)
    return linear(y, params["w_proj"], params["b_proj"], out_dtype=x.dtype)
    # (resid_dropout is identity in eval mode)


def init_params(key, n_embd, *, weight_dtype=jnp.bfloat16):
    """Deterministic PyTorch-Linear-style init (uniform +/- 1/sqrt(fan_in)).
    Weights are stored pre-transposed as (in, out) and in bf16 (halves weight
    HBM traffic; matmul accumulation stays f32).  Biases stay f32."""
    k1, k2, k3, k4 = jax.random.split(key, 4)
    bound = 1.0 / math.sqrt(n_embd)
    return {
        "w_attn": jax.random.uniform(k1, (n_embd, 3 * n_embd), jnp.float32,
                                     -bound, bound).astype(weight_dtype),
        "b_attn": jax.random.uniform(k2, (3 * n_embd,), jnp.float32,
                                     -bound, bound),
        "w_proj": jax.random.uniform(k3, (n_embd, n_embd), jnp.float32,
                                     -bound, bound).astype(weight_dtype),
        "b_proj": jax.random.uniform(k4, (n_embd,), jnp.float32,
                                     -bound, bound),
    }


def reference_forward(x, params, n_head):
    """Pure-JAX f32 reference for sanity checking."""
    B, T, C = x.shape
    D = C // n_head
    w_attn = params["w_attn"].astype(jnp.float32)
    w_proj = params["w_proj"].astype(jnp.float32)
    qkv = jnp.einsum("btc,cd->btd", x, w_attn) + params["b_attn"]
    q, k, v = jnp.split(qkv, 3, axis=2)
    sh = lambda t: t.reshape(B, T, n_head, D).transpose(0, 2, 1, 3)
    q, k, v = sh(q), sh(k), sh(v)
    s = jnp.einsum("bhqd,bhkd->bhqk", q, k) / math.sqrt(D)
    p = jax.nn.softmax(s, axis=-1)
    y = jnp.einsum("bhqk,bhkd->bhqd", p, v)
    y = y.transpose(0, 2, 1, 3).reshape(B, T, C)
    return jnp.einsum("btc,cd->btd", y, w_proj) + params["b_proj"]


if __name__ == "__main__":
    # Small but TPU-friendly config: n_embd % n_head == 0 and head dim = 128
    # so every block is (8,128)-aligned and lane-dense.
    B, T, C, H = 2, 128, 256, 2   # head dim D = 128

    key = jax.random.PRNGKey(0)
    kx, kp = jax.random.split(key)
    x = jax.random.normal(kx, (B, T, C), jnp.float32)
    params = init_params(kp, C)

    fwd = jax.jit(functools.partial(self_attention_forward, n_head=H))
    y = jax.block_until_ready(fwd(x, params))

    y_ref = reference_forward(x, params, H)
    assert y.shape == (B, T, C)
    max_err = float(jnp.max(jnp.abs(y - y_ref)))
    assert jnp.allclose(y, y_ref, atol=3e-2, rtol=3e-2), (
        f"mismatch vs reference (max abs err {max_err})")

    print("KERNEL_OK")
</pallas_src>

<mosaic_0001>
module attributes {stable_mosaic.version = 11 : i64} {
  func.func @_flash_attn_kernel(%arg0: i32, %arg1: i32, %arg2: i32, %arg3: i32, %arg4: memref<1x128x128xbf16, #tpu.memory_space<vmem>>, %arg5: memref<1x128x128xbf16, #tpu.memory_space<vmem>>, %arg6: memref<1x128x128xbf16, #tpu.memory_space<vmem>>, %arg7: memref<1x128x128xbf16, #tpu.memory_space<vmem>>, %arg8: memref<128x128xbf16, #tpu.memory_space<vmem>>, %arg9: memref<128x1xf32, #tpu.memory_space<vmem>>, %arg10: memref<128x1xf32, #tpu.memory_space<vmem>>, %arg11: memref<128x128xf32, #tpu.memory_space<vmem>>) attributes {dimension_semantics = [#tpu.dimension_semantics<parallel>, #tpu.dimension_semantics<parallel>, #tpu.dimension_semantics<parallel>, #tpu.dimension_semantics<arbitrary>], iteration_bounds = array<i64: 2, 2, 1, 1>, scalar_prefetch = 0 : i64, scratch_operands = 4 : i64, tpu.core_type = #tpu.core_type<tc>, window_params = [{transform_indices = @transform_0, window_bounds = array<i64: 1, 128, 128>}, {transform_indices = @transform_1, window_bounds = array<i64: 1, 128, 128>}, {transform_indices = @transform_2, window_bounds = array<i64: 1, 128, 128>}, {transform_indices = @transform_3, window_bounds = array<i64: 1, 128, 128>}]} {
    %c0_i32 = arith.constant 0 : i32
    %0 = arith.cmpi eq, %arg3, %c0_i32 : i32
    %1 = arith.extui %0 : i1 to i32
    %c0_i32_0 = arith.constant 0 : i32
    %2 = arith.cmpi ne, %1, %c0_i32_0 : i32
    scf.if %2 {
      %c0_25 = arith.constant 0 : index
      %c0_26 = arith.constant 0 : index
      %c0_27 = arith.constant 0 : index
      %35 = vector.load %arg4[%c0_25, %c0_26, %c0_27] : memref<1x128x128xbf16, #tpu.memory_space<vmem>>, vector<1x128x128xbf16>
      %36 = vector.shape_cast %35 : vector<1x128x128xbf16> to vector<128x128xbf16>
      %37 = arith.extf %36 : vector<128x128xbf16> to vector<128x128xf32>
      %cst_28 = arith.constant 0.0883883461 : f32
      %38 = vector.broadcast %cst_28 : f32 to vector<128x128xf32>
      %39 = arith.mulf %37, %38 : vector<128x128xf32>
      %40 = arith.truncf %39 : vector<128x128xf32> to vector<128x128xbf16>
      %c0_29 = arith.constant 0 : index
      %c0_30 = arith.constant 0 : index
      %41 = vector.load %arg8[%c0_29, %c0_30] : memref<128x128xbf16, #tpu.memory_space<vmem>>, vector<128x128xbf16>
      tpu.vector_store %arg8[%c0_29, %c0_30], %40 {strides = array<i32>} : memref<128x128xbf16, #tpu.memory_space<vmem>>, vector<128x128xbf16>,
      %cst_31 = arith.constant 0xFF800000 : f32
      %42 = vector.broadcast %cst_31 : f32 to vector<128x1xf32>
      %c0_32 = arith.constant 0 : index
      %c0_33 = arith.constant 0 : index
      %43 = vector.load %arg9[%c0_32, %c0_33] : memref<128x1xf32, #tpu.memory_space<vmem>>, vector<128x1xf32>
      tpu.vector_store %arg9[%c0_32, %c0_33], %42 {strides = array<i32>} : memref<128x1xf32, #tpu.memory_space<vmem>>, vector<128x1xf32>,
      %cst_34 = arith.constant 0.000000e+00 : f32
      %44 = vector.broadcast %cst_34 : f32 to vector<128x1xf32>
      %c0_35 = arith.constant 0 : index
      %c0_36 = arith.constant 0 : index
      %45 = vector.load %arg10[%c0_35, %c0_36] : memref<128x1xf32, #tpu.memory_space<vmem>>, vector<128x1xf32>
      tpu.vector_store %arg10[%c0_35, %c0_36], %44 {strides = array<i32>} : memref<128x1xf32, #tpu.memory_space<vmem>>, vector<128x1xf32>,
      %cst_37 = arith.constant 0.000000e+00 : f32
      %46 = vector.broadcast %cst_37 : f32 to vector<128x128xf32>
      %c0_38 = arith.constant 0 : index
      %c0_39 = arith.constant 0 : index
      %47 = vector.load %arg11[%c0_38, %c0_39] : memref<128x128xf32, #tpu.memory_space<vmem>>, vector<128x128xf32>
      tpu.vector_store %arg11[%c0_38, %c0_39], %46 {strides = array<i32>} : memref<128x128xf32, #tpu.memory_space<vmem>>, vector<128x128xf32>,
    } else {
    }
    %c0 = arith.constant 0 : index
    %c0_1 = arith.constant 0 : index
    %c0_2 = arith.constant 0 : index
    %3 = vector.load %arg5[%c0, %c0_1, %c0_2] : memref<1x128x128xbf16, #tpu.memory_space<vmem>>, vector<1x128x128xbf16>
    %4 = vector.shape_cast %3 : vector<1x128x128xbf16> to vector<128x128xbf16>
    %c0_3 = arith.constant 0 : index
    %c0_4 = arith.constant 0 : index
    %5 = vector.load %arg8[%c0_3, %c0_4] : memref<128x128xbf16, #tpu.memory_space<vmem>>, vector<128x128xbf16>
    %cst = arith.constant dense<0.000000e+00> : vector<128x128xf32>
    %6 = tpu.matmul %5, %4, %cst {dimension_numbers = #tpu.dot_dimension_numbers<[1], [1], [0], [0], [0, 0, 1, 0], [], []>} : vector<128x128xbf16>, vector<128x128xbf16>, vector<128x128xf32> -> vector<128x128xf32>
    %c0_5 = arith.constant 0 : index
    %c0_6 = arith.constant 0 : index
    %7 = vector.load %arg9[%c0_5, %c0_6] : memref<128x1xf32, #tpu.memory_space<vmem>>, vector<128x1xf32>
    %cst_7 = arith.constant dense<0xFF800000> : vector<128xf32>
    %8 = vector.multi_reduction <maximumf>, %6, %cst_7 [1] : vector<128x128xf32> to vector<128xf32>
    %9 = vector.shape_cast %8 : vector<128xf32> to vector<128x1xf32>
    %10 = arith.maximumf %7, %9 : vector<128x1xf32>
    %11 = arith.subf %7, %10 : vector<128x1xf32>
    %12 = math.exp %11 : vector<128x1xf32>
    %13 = vector.broadcast %10 : vector<128x1xf32> to vector<128x128xf32>
    %14 = arith.subf %6, %13 : vector<128x128xf32>
    %15 = math.exp %14 : vector<128x128xf32>
    %c0_8 = arith.constant 0 : index
    %c0_9 = arith.constant 0 : index
    %16 = vector.load %arg10[%c0_8, %c0_9] : memref<128x1xf32, #tpu.memory_space<vmem>>, vector<128x1xf32>
    %17 = arith.mulf %12, %16 : vector<128x1xf32>
    %cst_10 = arith.constant dense<0.000000e+00> : vector<128xf32>
    %18 = vector.multi_reduction <add>, %15, %cst_10 [1] : vector<128x128xf32> to vector<128xf32>
    %19 = vector.shape_cast %18 : vector<128xf32> to vector<128x1xf32>
    %20 = arith.addf %17, %19 : vector<128x1xf32>
    %c0_11 = arith.constant 0 : index
    %c0_12 = arith.constant 0 : index
    %21 = vector.load %arg10[%c0_11, %c0_12] : memref<128x1xf32, #tpu.memory_space<vmem>>, vector<128x1xf32>
    tpu.vector_store %arg10[%c0_11, %c0_12], %20 {strides = array<i32>} : memref<128x1xf32, #tpu.memory_space<vmem>>, vector<128x1xf32>,
    %22 = arith.truncf %15 : vector<128x128xf32> to vector<128x128xbf16>
    %c0_13 = arith.constant 0 : index
    %c0_14 = arith.constant 0 : index
    %c0_15 = arith.constant 0 : index
    %23 = vector.load %arg6[%c0_13, %c0_14, %c0_15] : memref<1x128x128xbf16, #tpu.memory_space<vmem>>, vector<1x128x128xbf16>
    %24 = vector.shape_cast %23 : vector<1x128x128xbf16> to vector<128x128xbf16>
    %cst_16 = arith.constant dense<0.000000e+00> : vector<128x128xf32>
    %25 = tpu.matmul %22, %24, %cst_16 {dimension_numbers = #tpu.dot_dimension_numbers<[1], [0], [0], [1], [0, 0, 1, 1], [], []>} : vector<128x128xbf16>, vector<128x128xbf16>, vector<128x128xf32> -> vector<128x128xf32>
    %c0_17 = arith.constant 0 : index
    %c0_18 = arith.constant 0 : index
    %26 = vector.load %arg11[%c0_17, %c0_18] : memref<128x128xf32, #tpu.memory_space<vmem>>, vector<128x128xf32>
    %27 = vector.broadcast %12 : vector<128x1xf32> to vector<128x128xf32>
    %28 = arith.mulf %27, %26 : vector<128x128xf32>
    %29 = arith.addf %28, %25 : vector<128x128xf32>
    %c0_19 = arith.constant 0 : index
    %c0_20 = arith.constant 0 : index
    %30 = vector.load %arg11[%c0_19, %c0_20] : memref<128x128xf32, #tpu.memory_space<vmem>>, vector<128x128xf32>
    tpu.vector_store %arg11[%c0_19, %c0_20], %29 {strides = array<i32>} : memref<128x128xf32, #tpu.memory_space<vmem>>, vector<128x128xf32>,
    %c0_21 = arith.constant 0 : index
    %c0_22 = arith.constant 0 : index
    %31 = vector.load %arg9[%c0_21, %c0_22] : memref<128x1xf32, #tpu.memory_space<vmem>>, vector<128x1xf32>
    tpu.vector_store %arg9[%c0_21, %c0_22], %10 {strides = array<i32>} : memref<128x1xf32, #tpu.memory_space<vmem>>, vector<128x1xf32>,
    %c0_i32_23 = arith.constant 0 : i32
    %32 = arith.cmpi eq, %arg3, %c0_i32_23 : i32
    %33 = arith.extui %32 : i1 to i32
    %c0_i32_24 = arith.constant 0 : i32
    %34 = arith.cmpi ne, %33, %c0_i32_24 : i32
    scf.if %34 {
      %c0_25 = arith.constant 0 : index
      %c0_26 = arith.constant 0 : index
      %35 = vector.load %arg10[%c0_25, %c0_26] : memref<128x1xf32, #tpu.memory_space<vmem>>, vector<128x1xf32>
      %36 = tpu.reciprocal %35 {approx = true} : vector<128x1xf32> -> vector<128x1xf32>
      %c0_27 = arith.constant 0 : index
      %c0_28 = arith.constant 0 : index
      %37 = vector.load %arg11[%c0_27, %c0_28] : memref<128x128xf32, #tpu.memory_space<vmem>>, vector<128x128xf32>
      %38 = vector.broadcast %36 : vector<128x1xf32> to vector<128x128xf32>
      %39 = arith.mulf %37, %38 : vector<128x128xf32>
      %40 = arith.truncf %39 : vector<128x128xf32> to vector<128x128xbf16>
      %c0_29 = arith.constant 0 : index
      %c0_30 = arith.constant 0 : index
      %c0_31 = arith.constant 0 : index
      %41 = vector.load %arg7[%c0_29, %c0_30, %c0_31] : memref<1x128x128xbf16, #tpu.memory_space<vmem>>, vector<1x128x128xbf16>
      %42 = vector.shape_cast %41 : vector<1x128x128xbf16> to vector<128x128xbf16>
      %43 = vector.shape_cast %40 : vector<128x128xbf16> to vector<1x128x128xbf16>
      tpu.vector_store %arg7[%c0_29, %c0_30, %c0_31], %43 {strides = array<i32>} : memref<1x128x128xbf16, #tpu.memory_space<vmem>>, vector<1x128x128xbf16>,
    } else {
    }
    return
  }
  func.func @transform_0(%arg0: i32, %arg1: i32, %arg2: i32, %arg3: i32) -> (i32, i32, i32) {
    %c0_i32 = arith.constant 0 : i32
    return %arg0, %arg2, %arg1 : i32, i32, i32
  }
  func.func @transform_1(%arg0: i32, %arg1: i32, %arg2: i32, %arg3: i32) -> (i32, i32, i32) {
    %c2_i32 = arith.constant 2 : i32
    %0 = arith.addi %arg1, %c2_i32 : i32
    %c0_i32 = arith.constant 0 : i32
    return %arg0, %arg3, %0 : i32, i32, i32
  }
  func.func @transform_2(%arg0: i32, %arg1: i32, %arg2: i32, %arg3: i32) -> (i32, i32, i32) {
    %c4_i32 = arith.constant 4 : i32
    %0 = arith.addi %arg1, %c4_i32 : i32
    %c0_i32 = arith.constant 0 : i32
    return %arg0, %arg3, %0 : i32, i32, i32
  }
  func.func @transform_3(%arg0: i32, %arg1: i32, %arg2: i32, %arg3: i32) -> (i32, i32, i32) {
    %c0_i32 = arith.constant 0 : i32
    return %arg0, %arg2, %arg1 : i32, i32, i32
  }
}

module attributes {stable_mosaic.version = 11 : i64} {
  func.func @_linear_kernel(%arg0: i32, %arg1: i32, %arg2: i32, %arg3: memref<256x256xbf16, #tpu.memory_space<vmem>>, %arg4: memref<256x256xbf16, #tpu.memory_space<vmem>>, %arg5: memref<1x256xf32, #tpu.memory_space<vmem>>, %arg6: memref<256x256xf32, #tpu.memory_space<vmem>>, %arg7: memref<256x256xf32, #tpu.memory_space<vmem>>) attributes {dimension_semantics = [#tpu.dimension_semantics<parallel>, #tpu.dimension_semantics<parallel>, #tpu.dimension_semantics<arbitrary>], iteration_bounds = array<i64: 1, 1, 1>, scalar_prefetch = 0 : i64, scratch_operands = 1 : i64, tpu.core_type = #tpu.core_type<tc>, window_params = [{transform_indices = @transform_0, window_bounds = array<i64: 256, 256>}, {transform_indices = @transform_1, window_bounds = array<i64: 256, 256>}, {transform_indices = @transform_2, window_bounds = array<i64: 1, 256>}, {transform_indices = @transform_3, window_bounds = array<i64: 256, 256>}]} {
    %c0_i32 = arith.constant 0 : i32
    %0 = arith.cmpi eq, %arg2, %c0_i32 : i32
    %1 = arith.extui %0 : i1 to i32
    %c0_i32_0 = arith.constant 0 : i32
    %2 = arith.cmpi ne, %1, %c0_i32_0 : i32
    scf.if %2 {
      %cst_10 = arith.constant 0.000000e+00 : f32
      %12 = vector.broadcast %cst_10 : f32 to vector<256x256xf32>
      %c0_11 = arith.constant 0 : index
      %c0_12 = arith.constant 0 : index
      %13 = vector.load %arg7[%c0_11, %c0_12] : memref<256x256xf32, #tpu.memory_space<vmem>>, vector<256x256xf32>
      tpu.vector_store %arg7[%c0_11, %c0_12], %12 {strides = array<i32>} : memref<256x256xf32, #tpu.memory_space<vmem>>, vector<256x256xf32>,
    } else {
    }
    %c0 = arith.constant 0 : index
    %c0_1 = arith.constant 0 : index
    %3 = vector.load %arg7[%c0, %c0_1] : memref<256x256xf32, #tpu.memory_space<vmem>>, vector<256x256xf32>
    %c0_2 = arith.constant 0 : index
    %c0_3 = arith.constant 0 : index
    %4 = vector.load %arg3[%c0_2, %c0_3] : memref<256x256xbf16, #tpu.memory_space<vmem>>, vector<256x256xbf16>
    %c0_4 = arith.constant 0 : index
    %c0_5 = arith.constant 0 : index
    %5 = vector.load %arg4[%c0_4, %c0_5] : memref<256x256xbf16, #tpu.memory_space<vmem>>, vector<256x256xbf16>
    %cst = arith.constant dense<0.000000e+00> : vector<256x256xf32>
    %6 = tpu.matmul %4, %5, %cst {dimension_numbers = #tpu.dot_dimension_numbers<[1], [0], [0], [1], [0, 0, 1, 1], [], []>} : vector<256x256xbf16>, vector<256x256xbf16>, vector<256x256xf32> -> vector<256x256xf32>
    %7 = arith.addf %3, %6 : vector<256x256xf32>
    %c0_6 = arith.constant 0 : index
    %c0_7 = arith.constant 0 : index
    %8 = vector.load %arg7[%c0_6, %c0_7] : memref<256x256xf32, #tpu.memory_space<vmem>>, vector<256x256xf32>
    tpu.vector_store %arg7[%c0_6, %c0_7], %7 {strides = array<i32>} : memref<256x256xf32, #tpu.memory_space<vmem>>, vector<256x256xf32>,
    %c0_i32_8 = arith.constant 0 : i32
    %9 = arith.cmpi eq, %arg2, %c0_i32_8 : i32
    %10 = arith.extui %9 : i1 to i32
    %c0_i32_9 = arith.constant 0 : i32
    %11 = arith.cmpi ne, %10, %c0_i32_9 : i32
    scf.if %11 {
      %c0_10 = arith.constant 0 : index
      %c0_11 = arith.constant 0 : index
      %12 = vector.load %arg7[%c0_10, %c0_11] : memref<256x256xf32, #tpu.memory_space<vmem>>, vector<256x256xf32>
      %c0_12 = arith.constant 0 : index
      %c0_13 = arith.constant 0 : index
      %13 = vector.load %arg5[%c0_12, %c0_13] : memref<1x256xf32, #tpu.memory_space<vmem>>, vector<1x256xf32>
      %14 = vector.broadcast %13 : vector<1x256xf32> to vector<256x256xf32>
      %15 = arith.addf %12, %14 : vector<256x256xf32>
      %c0_14 = arith.constant 0 : index
      %c0_15 = arith.constant 0 : index
      %16 = vector.load %arg6[%c0_14, %c0_15] : memref<256x256xf32, #tpu.memory_space<vmem>>, vector<256x256xf32>
      tpu.vector_store %arg6[%c0_14, %c0_15], %15 {strides = array<i32>} : memref<256x256xf32, #tpu.memory_space<vmem>>, vector<256x256xf32>,
    } else {
    }
    return
  }
  func.func @transform_0(%arg0: i32, %arg1: i32, %arg2: i32) -> (i32, i32) {
    %c0_i32 = arith.constant 0 : i32
    return %arg0, %arg2 : i32, i32
  }
  func.func @transform_1(%arg0: i32, %arg1: i32, %arg2: i32) -> (i32, i32) {
    %c0_i32 = arith.constant 0 : i32
    return %arg2, %arg1 : i32, i32
  }
  func.func @transform_2(%arg0: i32, %arg1: i32, %arg2: i32) -> (i32, i32) {
    %c0_i32 = arith.constant 0 : i32
    %c0_i32_0 = arith.constant 0 : i32
    return %c0_i32, %arg1 : i32, i32
  }
  func.func @transform_3(%arg0: i32, %arg1: i32, %arg2: i32) -> (i32, i32) {
    %c0_i32 = arith.constant 0 : i32
    return %arg0, %arg1 : i32, i32
  }
}

module attributes {stable_mosaic.version = 11 : i64} {
  func.func @_linear_kernel(%arg0: i32, %arg1: i32, %arg2: i32, %arg3: memref<256x256xf32, #tpu.memory_space<vmem>>, %arg4: memref<256x256xbf16, #tpu.memory_space<vmem>>, %arg5: memref<1x256xf32, #tpu.memory_space<vmem>>, %arg6: memref<256x256xbf16, #tpu.memory_space<vmem>>, %arg7: memref<256x256xf32, #tpu.memory_space<vmem>>) attributes {dimension_semantics = [#tpu.dimension_semantics<parallel>, #tpu.dimension_semantics<parallel>, #tpu.dimension_semantics<arbitrary>], iteration_bounds = array<i64: 1, 3, 1>, scalar_prefetch = 0 : i64, scratch_operands = 1 : i64, tpu.core_type = #tpu.core_type<tc>, window_params = [{transform_indices = @transform_0, window_bounds = array<i64: 256, 256>}, {transform_indices = @transform_1, window_bounds = array<i64: 256, 256>}, {transform_indices = @transform_2, window_bounds = array<i64: 1, 256>}, {transform_indices = @transform_3, window_bounds = array<i64: 256, 256>}]} {
    %c0_i32 = arith.constant 0 : i32
    %0 = arith.cmpi eq, %arg2, %c0_i32 : i32
    %1 = arith.extui %0 : i1 to i32
    %c0_i32_0 = arith.constant 0 : i32
    %2 = arith.cmpi ne, %1, %c0_i32_0 : i32
    scf.if %2 {
      %cst_10 = arith.constant 0.000000e+00 : f32
      %13 = vector.broadcast %cst_10 : f32 to vector<256x256xf32>
      %c0_11 = arith.constant 0 : index
      %c0_12 = arith.constant 0 : index
      %14 = vector.load %arg7[%c0_11, %c0_12] : memref<256x256xf32, #tpu.memory_space<vmem>>, vector<256x256xf32>
      tpu.vector_store %arg7[%c0_11, %c0_12], %13 {strides = array<i32>} : memref<256x256xf32, #tpu.memory_space<vmem>>, vector<256x256xf32>,
    } else {
    }
    %c0 = arith.constant 0 : index
    %c0_1 = arith.constant 0 : index
    %3 = vector.load %arg7[%c0, %c0_1] : memref<256x256xf32, #tpu.memory_space<vmem>>, vector<256x256xf32>
    %c0_2 = arith.constant 0 : index
    %c0_3 = arith.constant 0 : index
    %4 = vector.load %arg3[%c0_2, %c0_3] : memref<256x256xf32, #tpu.memory_space<vmem>>, vector<256x256xf32>
    %5 = arith.truncf %4 : vector<256x256xf32> to vector<256x256xbf16>
    %c0_4 = arith.constant 0 : index
    %c0_5 = arith.constant 0 : index
    %6 = vector.load %arg4[%c0_4, %c0_5] : memref<256x256xbf16, #tpu.memory_space<vmem>>, vector<256x256xbf16>
    %cst = arith.constant dense<0.000000e+00> : vector<256x256xf32>
    %7 = tpu.matmul %5, %6, %cst {dimension_numbers = #tpu.dot_dimension_numbers<[1], [0], [0], [1], [0, 0, 1, 1], [], []>} : vector<256x256xbf16>, vector<256x256xbf16>, vector<256x256xf32> -> vector<256x256xf32>
    %8 = arith.addf %3, %7 : vector<256x256xf32>
    %c0_6 = arith.constant 0 : index
    %c0_7 = arith.constant 0 : index
    %9 = vector.load %arg7[%c0_6, %c0_7] : memref<256x256xf32, #tpu.memory_space<vmem>>, vector<256x256xf32>
    tpu.vector_store %arg7[%c0_6, %c0_7], %8 {strides = array<i32>} : memref<256x256xf32, #tpu.memory_space<vmem>>, vector<256x256xf32>,
    %c0_i32_8 = arith.constant 0 : i32
    %10 = arith.cmpi eq, %arg2, %c0_i32_8 : i32
    %11 = arith.extui %10 : i1 to i32
    %c0_i32_9 = arith.constant 0 : i32
    %12 = arith.cmpi ne, %11, %c0_i32_9 : i32
    scf.if %12 {
      %c0_10 = arith.constant 0 : index
      %c0_11 = arith.constant 0 : index
      %13 = vector.load %arg7[%c0_10, %c0_11] : memref<256x256xf32, #tpu.memory_space<vmem>>, vector<256x256xf32>
      %c0_12 = arith.constant 0 : index
      %c0_13 = arith.constant 0 : index
      %14 = vector.load %arg5[%c0_12, %c0_13] : memref<1x256xf32, #tpu.memory_space<vmem>>, vector<1x256xf32>
      %15 = vector.broadcast %14 : vector<1x256xf32> to vector<256x256xf32>
      %16 = arith.addf %13, %15 : vector<256x256xf32>
      %17 = arith.truncf %16 : vector<256x256xf32> to vector<256x256xbf16>
      %c0_14 = arith.constant 0 : index
      %c0_15 = arith.constant 0 : index
      %18 = vector.load %arg6[%c0_14, %c0_15] : memref<256x256xbf16, #tpu.memory_space<vmem>>, vector<256x256xbf16>
      tpu.vector_store %arg6[%c0_14, %c0_15], %17 {strides = array<i32>} : memref<256x256xbf16, #tpu.memory_space<vmem>>, vector<256x256xbf16>,
    } else {
    }
    return
  }
  func.func @transform_0(%arg0: i32, %arg1: i32, %arg2: i32) -> (i32, i32) {
    %c0_i32 = arith.constant 0 : i32
    return %arg0, %arg2 : i32, i32
  }
  func.func @transform_1(%arg0: i32, %arg1: i32, %arg2: i32) -> (i32, i32) {
    %c0_i32 = arith.constant 0 : i32
    return %arg2, %arg1 : i32, i32
  }
  func.func @transform_2(%arg0: i32, %arg1: i32, %arg2: i32) -> (i32, i32) {
    %c0_i32 = arith.constant 0 : i32
    %c0_i32_0 = arith.constant 0 : i32
    return %c0_i32, %arg1 : i32, i32
  }
  func.func @transform_3(%arg0: i32, %arg1: i32, %arg2: i32) -> (i32, i32) {
    %c0_i32 = arith.constant 0 : i32
    return %arg0, %arg1 : i32, i32
  }
}

</mosaic_0001>

<llo_original>
// kernel: self_attention_forward.4
$region0: #{self_attention_forward.4}
  #allocation0 [shape = 'u32[]', space=smem, size = 0x4, offset = 0x4, fixed_abs, tag = 'smem constant byte address 0x4 - core index']
  #allocation1 [shape = 'u32[144,128]{1,0:T(1,128)}', space=vmem, size = 0x12000, scoped, tag = 'internal scratch']
  #allocation2 [shape = 'bf16[128,128]{1,0:T(16,128)(2,1)}', space=vmem, size = 0x8000, scoped, tag = 'scratch operand']
  #allocation3 [shape = 'f32[128,1]{1,0:T(8,128)}', space=vmem, size = 0x10000, scoped, tag = 'scratch operand']
  #allocation4 [shape = 'f32[128,1]{1,0:T(8,128)}', space=vmem, size = 0x10000, scoped, tag = 'scratch operand']
  #allocation5 [shape = 'f32[128,128]{1,0:T(8,128)}', space=vmem, size = 0x10000, scoped, tag = 'scratch operand']
  %s0 = inlined_call_operand.vmem [shape: bf16[2,128,768], index: 0, kind: input, shape index: {}, may-alias: {0,1,2}]
  %s1 = inlined_call_operand.vmem [shape: bf16[2,128,768], index: 1, kind: input, shape index: {}, may-alias: {0,1,2}]
  %s2 = inlined_call_operand.vmem [shape: bf16[2,128,768], index: 2, kind: input, shape index: {}, may-alias: {0,1,2}]
  %s3 = inlined_call_operand.vmem [shape: bf16[2,128,256], index: 3, kind: output, shape index: {}]
  %s4 = sld [smem:[#allocation0]]
  $region213: #{self_attention_forward.4} parent=0
    _
  %s6 = ssub.s32 1, %s4
  %s7 = scalar_select 0, %s6, %s4
  $region1: #{self_attention_forward.4} parent=0
    #allocation6 [shape = 'u8[65536]{0}', space=vmem, size = 0x10000, scoped, tag = 'input window, operand 0']
    #allocation7 [shape = 'u8[65536]{0}', space=vmem, size = 0x10000, scoped, tag = 'input window, operand 1']
    #allocation8 [shape = 'u8[65536]{0}', space=vmem, size = 0x10000, scoped, tag = 'input window, operand 2']
    #allocation9 [shape = 'u8[65536]{0}', space=vmem, size = 0x10000, scoped, tag = 'output window, operand 0']
    loop: start=0, step=1, limit=6
    $region2: #{self_attention_forward.4} parent=1 // loop_pre_header
      _
    $region3: #{self_attention_forward.4} parent=1 // loop_header
      %s9 = sphi 0, %s13
      %p10 = scmp.ge.s32.totalorder %s9, 6
      %s16 = sphi 0, %s42
      %s17 = sphi 0, %s38
      %s18 = sphi 0, %s34
      %s19 = sphi 0, %s30
      %s20 = sphi 0, %s16
      %s21 = sphi 0, %s17
      %s22 = sphi 0, %s18
      %s23 = sphi 0, %s19
      %s24 = sphi 0, %s20
      %s25 = sphi 0, %s21
      %s26 = sphi 0, %s22
      %s27 = sphi 0, %s23
      %s49 = sphi 0, %s51
      %s52 = sphi 0, %s49
      %s53 = sphi 0, %s52
      %s69 = sphi 0, %s53
      %s81 = sphi 0, %s83
      %s84 = sphi 0, %s81
      %s85 = sphi 0, %s84
      %s101 = sphi 0, %s85
      %s113 = sphi 0, %s115
      %s116 = sphi 0, %s113
      %s117 = sphi 0, %s116
      %s133 = sphi 0, %s117
      %s143 = sphi 0, %s145
      %s146 = sphi 0, %s143
      %s147 = sphi 0, %s146
      %s163 = sphi 0, %s147
    $region4: #{self_attention_forward.4} parent=1 // loop_header_branch
      %12 = sbr.rel (%p10) target = $region8
    $region5: #{self_attention_forward.4} parent=1 // loop_body
      %s14 = ssub.s32 %s9, 1
      %s15 = ssub.s32 %s9, 2
      %s28 = sadd.s32 1, %s19
      %p29 = scmp.ge.s32.totalorder %s28, 1
      %s30 = scalar_select %p29, 0, %s28
      %s31 = sadd.s32 1, %s18
      %s32 = scalar_select %p29, %s31, %s18
      %p33 = scmp.ge.s32.totalorder %s32, 1
      %s34 = scalar_select %p33, 0, %s32
      %s35 = sadd.s32 1, %s17
      %s36 = scalar_select %p33, %s35, %s17
      %p37 = scmp.ge.s32.totalorder %s36, 2
      %s38 = scalar_select %p37, 0, %s36
      %s39 = sadd.s32 1, %s16
      %s40 = scalar_select %p37, %s39, %s16
      %p41 = scmp.ge.s32.totalorder %s40, 2
      %s42 = scalar_select %p41, 0, %s40
      %s43 = ssub.s32 %s16, %s42
      %s44 = ssub.s32 %s18, %s34
      %s45 = sor.u32 %s43, %s44
      %s46 = ssub.s32 %s17, %s38
      %s47 = sor.u32 %s45, %s46
      %p48 = scmp.eq.s32.totalorder %s47, 0
      %s50 = sadd.s32 %s49, 1
      %s51 = scalar_select %p48, %s49, %s50
      %p54 = pneg %p48
      %p55 = scmp.eq.s32.totalorder %s9, 3
      %p56 = por %p54, %p55
      %p57 = scmp.ne.s32.totalorder %s49, %s52
      %p58 = scmp.eq.s32.totalorder %s9, 0
      %p59 = por %p57, %p58
      %p60 = scmp.ne.s32.totalorder %s49, %s52
      %p61 = scmp.eq.s32.totalorder %s14, 3
      %p62 = por %p60, %p61
      %p63 = scmp.ne.s32.totalorder %s52, %s53
      %p64 = scmp.eq.s32.totalorder %s14, 0
      %p65 = por %p63, %p64
      %p66 = scmp.ne.s32.totalorder %s52, %s53
      %p67 = scmp.eq.s32.totalorder %s15, 3
      %p68 = por %p66, %p67
      %p70 = scmp.ne.s32.totalorder %s53, %s69
      %p71 = scmp.eq.s32.totalorder %s15, 0
      %p72 = por %p70, %p71
      %s73 = sadd.s32 %s17, 2
      %s74 = sadd.s32 %s38, 2
      %s75 = ssub.s32 %s16, %s42
      %s76 = ssub.s32 %s19, %s30
      %s77 = sor.u32 %s75, %s76
      %s78 = ssub.s32 %s73, %s74
      %s79 = sor.u32 %s77, %s78
      %p80 = scmp.eq.s32.totalorder %s79, 0
      %s82 = sadd.s32 %s81, 1
      %s83 = scalar_select %p80, %s81, %s82
      %p86 = pneg %p80
      %p87 = scmp.eq.s32.totalorder %s9, 3
      %p88 = por %p86, %p87
      %p89 = scmp.ne.s32.totalorder %s81, %s84
      %p90 = scmp.eq.s32.totalorder %s9, 0
      %p91 = por %p89, %p90
      %p92 = scmp.ne.s32.totalorder %s81, %s84
      %p93 = scmp.eq.s32.totalorder %s14, 3
      %p94 = por %p92, %p93
      %p95 = scmp.ne.s32.totalorder %s84, %s85
      %p96 = scmp.eq.s32.totalorder %s14, 0
      %p97 = por %p95, %p96
      %p98 = scmp.ne.s32.totalorder %s84, %s85
      %p99 = scmp.eq.s32.totalorder %s15, 3
      %p100 = por %p98, %p99
      %p102 = scmp.ne.s32.totalorder %s85, %s101
      %p103 = scmp.eq.s32.totalorder %s15, 0
      %p104 = por %p102, %p103
      %s105 = sadd.s32 %s17, 4
      %s106 = sadd.s32 %s38, 4
      %s107 = ssub.s32 %s16, %s42
      %s108 = ssub.s32 %s19, %s30
      %s109 = sor.u32 %s107, %s108
      %s110 = ssub.s32 %s105, %s106
      %s111 = sor.u32 %s109, %s110
      %p112 = scmp.eq.s32.totalorder %s111, 0
      %s114 = sadd.s32 %s113, 1
      %s115 = scalar_select %p112, %s113, %s114
      %p118 = pneg %p112
      %p119 = scmp.eq.s32.totalorder %s9, 3
      %p120 = por %p118, %p119
      %p121 = scmp.ne.s32.totalorder %s113, %s116
      %p122 = scmp.eq.s32.totalorder %s9, 0
      %p123 = por %p121, %p122
      %p124 = scmp.ne.s32.totalorder %s113, %s116
      %p125 = scmp.eq.s32.totalorder %s14, 3
      %p126 = por %p124, %p125
      %p127 = scmp.ne.s32.totalorder %s116, %s117
      %p128 = scmp.eq.s32.totalorder %s14, 0
      %p129 = por %p127, %p128
      %p130 = scmp.ne.s32.totalorder %s116, %s117
      %p131 = scmp.eq.s32.totalorder %s15, 3
      %p132 = por %p130, %p131
      %p134 = scmp.ne.s32.totalorder %s117, %s133
      %p135 = scmp.eq.s32.totalorder %s15, 0
      %p136 = por %p134, %p135
      %s137 = ssub.s32 %s16, %s42
      %s138 = ssub.s32 %s18, %s34
      %s139 = sor.u32 %s137, %s138
      %s140 = ssub.s32 %s17, %s38
      %s141 = sor.u32 %s139, %s140
      %p142 = scmp.eq.s32.totalorder %s141, 0
      %s144 = sadd.s32 %s143, 1
      %s145 = scalar_select %p142, %s143, %s144
      %p148 = pneg %p142
      %p149 = scmp.eq.s32.totalorder %s9, 3
      %p150 = por %p148, %p149
      %p151 = scmp.ne.s32.totalorder %s143, %s146
      %p152 = scmp.eq.s32.totalorder %s9, 0
      %p153 = por %p151, %p152
      %p154 = scmp.ne.s32.totalorder %s143, %s146
      %p155 = scmp.eq.s32.totalorder %s14, 3
      %p156 = por %p154, %p155
      %p157 = scmp.ne.s32.totalorder %s146, %s147
      %p158 = scmp.eq.s32.totalorder %s14, 0
      %p159 = por %p157, %p158
      %p160 = scmp.ne.s32.totalorder %s146, %s147
      %p161 = scmp.eq.s32.totalorder %s15, 3
      %p162 = por %p160, %p161
      %p164 = scmp.ne.s32.totalorder %s147, %s163
      %p165 = scmp.eq.s32.totalorder %s15, 0
      %p166 = por %p164, %p165
      %p167 = scmp.le.s32.totalorder 1, %s9
      %p168 = scmp.lt.s32.totalorder %s9, 5
      %p169 = pnand %p167, %p168
      %p170 = pneg %p169
      // Predicated region
      $region9: #{self_attention_forward.4} parent=5 // pred_check
        _
      $region10: #{self_attention_forward.4} parent=5 // pred_check_branch
        %172 = sbr.rel (%p169) target = $region12
      $region11: #{self_attention_forward.4} parent=5 // pred_region
        %s173 = ssub.s32 %s9, 1
      $region12: #{self_attention_forward.4} parent=5 // pred_fallthru
        _
      %p174 = scmp.lt.s32.totalorder %s9, 4
      // Predicated region
      $region13: #{self_attention_forward.4} parent=5 // pred_check
        %p175 = pneg %p174
      $region14: #{self_attention_forward.4} parent=5 // pred_check_branch
        %177 = sbr.rel (%p175) target = $region16
      $region15: #{self_attention_forward.4} parent=5 // pred_region
        // Predicated region
        $region17: #{self_attention_forward.4} parent=15 // pred_check
          %p178 = pneg %p59
        $region18: #{self_attention_forward.4} parent=15 // pred_check_branch
          %180 = sbr.rel (%p178) target = $region20
        $region19: #{self_attention_forward.4} parent=15 // pred_region
          %s181 = sand.u32 %s49, 1
          %s182 = sand.u32 %s49, 1
          %s183 = smul.addr %s182, 64
          %s184 = scalar_lea.vmem [#allocation6], %s183
          %s185 = smul.u32 16, %s18
          %s186 = smul.addr %s185, 6
          %s187 = sadd.s32 %s17, %s186
          %s188 = smul.addr %s16, 96
          %s189 = sadd.s32 %s187, %s188
          %s190 = smul.addr %s189, 4
          %s191 = scalar_lea.vmem %s0, %s190
          // Predicated region
          $region21: #{self_attention_forward.4} parent=19 // pred_check
            _
          $region22: #{self_attention_forward.4} parent=19 // pred_check_branch
            %193 = sbr.rel (0) target = $region24
          $region23: #{self_attention_forward.4} parent=19 // pred_region
            // Predicated region
            $region25: #{self_attention_forward.4} parent=23 // pred_check
              _
            $region26: #{self_attention_forward.4} parent=23 // pred_check_branch
              %195 = sbr.rel target = $region28
            $region27: #{self_attention_forward.4} parent=23 // pred_region
              // Predicated region
              $region40: #{self_attention_forward.4} parent=27 // pred_check
                _
              $region41: #{self_attention_forward.4} parent=27 // pred_check_branch
                %240 = sbr.rel (0) target = $region43
              $region42: #{self_attention_forward.4} parent=27 // pred_region
                loop: start=0, step=1, limit=1
                $region44: #{self_attention_forward.4} parent=42 // loop_pre_header
                  _
                $region45: #{self_attention_forward.4} parent=42 // loop_header
                  %s242 = sphi 0, %s246
                  %p243 = scmp.ge.s32.totalorder %s242, 1
                  %s247 = sphi %s191, %s191
                  %s248 = sphi %s184, %s184
                $region46: #{self_attention_forward.4} parent=42 // loop_header_branch
                  %245 = sbr.rel (%p243) target = $region50
                $region47: #{self_attention_forward.4} parent=42 // loop_body
                  _
                $region48: #{self_attention_forward.4} parent=42 // loop_footer
                  %s246 = sadd.s32 1, %s242
                $region49: #{self_attention_forward.4} parent=42 // loop_footer_branch
                  %241 = sbr.rel target = $region45
                $region50: #{self_attention_forward.4} parent=42 // loop_exit
                  _
                loop: start=0, step=1, limit=1
                $region51: #{self_attention_forward.4} parent=42 // loop_pre_header
                  _
                $region52: #{self_attention_forward.4} parent=42 // loop_header
                  %s251 = sphi 0, %s255
                  %p252 = scmp.ge.s32.totalorder %s251, 1
                  %s256 = sphi %s191, %s191
                  %s257 = sphi %s184, %s184
                $region53: #{self_attention_forward.4} parent=42 // loop_header_branch
                  %254 = sbr.rel (%p252) target = $region57
                $region54: #{self_attention_forward.4} parent=42 // loop_body
                  %v258 = vld [vmem:[%s256] sm:$0xf]
                  %259 = vst [vmem:[%s257] sm:$0xf] %v258
                  %v260 = vld [vmem:[%s256 + $0x18] sm:$0xf]
                  %261 = vst [vmem:[%s257 + $0x4] sm:$0xf] %v260
                  %v262 = vld [vmem:[%s256 + $0x30] sm:$0xf]
                  %263 = vst [vmem:[%s257 + $0x8] sm:$0xf] %v262
                  %v264 = vld [vmem:[%s256 + $0x48] sm:$0xf]
                  %265 = vst [vmem:[%s257 + $0xc] sm:$0xf] %v264
                  %v266 = vld [vmem:[%s256 + $0x60] sm:$0xf]
                  %267 = vst [vmem:[%s257 + $0x10] sm:$0xf] %v266
                  %v268 = vld [vmem:[%s256 + $0x78] sm:$0xf]
                  %269 = vst [vmem:[%s257 + $0x14] sm:$0xf] %v268
                  %v270 = vld [vmem:[%s256 + $0x90] sm:$0xf]
                  %271 = vst [vmem:[%s257 + $0x18] sm:$0xf] %v270
                  %v272 = vld [vmem:[%s256 + $0xa8] sm:$0xf]
                  %273 = vst [vmem:[%s257 + $0x1c] sm:$0xf] %v272
                  %v274 = vld [vmem:[%s256 + $0xc0] sm:$0xf]
                  %275 = vst [vmem:[%s257 + $0x20] sm:$0xf] %v274
                  %v276 = vld [vmem:[%s256 + $0xd8] sm:$0xf]
                  %277 = vst [vmem:[%s257 + $0x24] sm:$0xf] %v276
                  %v278 = vld [vmem:[%s256 + $0xf0] sm:$0xf]
                  %279 = vst [vmem:[%s257 + $0x28] sm:$0xf] %v278
                  %v280 = vld [vmem:[%s256 + $0x108] sm:$0xf]
                  %281 = vst [vmem:[%s257 + $0x2c] sm:$0xf] %v280
                  %v282 = vld [vmem:[%s256 + $0x120] sm:$0xf]
                  %283 = vst [vmem:[%s257 + $0x30] sm:$0xf] %v282
                  %v284 = vld [vmem:[%s256 + $0x138] sm:$0xf]
                  %285 = vst [vmem:[%s257 + $0x34] sm:$0xf] %v284
                  %v286 = vld [vmem:[%s256 + $0x150] sm:$0xf]
                  %287 = vst [vmem:[%s257 + $0x38] sm:$0xf] %v286
                  %v288 = vld [vmem:[%s256 + $0x168] sm:$0xf]
                  %289 = vst [vmem:[%s257 + $0x3c] sm:$0xf] %v288
                $region55: #{self_attention_forward.4} parent=42 // loop_footer
                  %s255 = sadd.s32 1, %s251
                $region56: #{self_attention_forward.4} parent=42 // loop_footer_branch
                  %250 = sbr.rel target = $region52
                $region57: #{self_attention_forward.4} parent=42 // loop_exit
                  _
              $region43: #{self_attention_forward.4} parent=27 // pred_fallthru
                _
            $region28: #{self_attention_forward.4} parent=23 // pred_fallthru
              _
            // Predicated region
            $region29: #{self_attention_forward.4} parent=23 // pred_check
              _
            $region30: #{self_attention_forward.4} parent=23 // pred_check_branch
              %197 = sbr.rel (0) target = $region32
            $region31: #{self_attention_forward.4} parent=23 // pred_region
              loop: start=0, step=1, limit=1
              $region33: #{self_attention_forward.4} parent=31 // loop_pre_header
                _
              $region34: #{self_attention_forward.4} parent=31 // loop_header
                %s200 = sphi 0, %s204
                %p201 = scmp.ge.s32.totalorder %s200, 1
                %s205 = sphi %s191, %s191
                %s206 = sphi %s184, %s184
              $region35: #{self_attention_forward.4} parent=31 // loop_header_branch
                %203 = sbr.rel (%p201) target = $region39
              $region36: #{self_attention_forward.4} parent=31 // loop_body
                %v207 = vld [vmem:[%s205] sm:$0xf]
                %208 = vst [vmem:[%s206] sm:$0xf] %v207
                %v209 = vld [vmem:[%s205 + $0x18] sm:$0xf]
                %210 = vst [vmem:[%s206 + $0x4] sm:$0xf] %v209
                %v211 = vld [vmem:[%s205 + $0x30] sm:$0xf]
                %212 = vst [vmem:[%s206 + $0x8] sm:$0xf] %v211
                %v213 = vld [vmem:[%s205 + $0x48] sm:$0xf]
                %214 = vst [vmem:[%s206 + $0xc] sm:$0xf] %v213
                %v215 = vld [vmem:[%s205 + $0x60] sm:$0xf]
                %216 = vst [vmem:[%s206 + $0x10] sm:$0xf] %v215
                %v217 = vld [vmem:[%s205 + $0x78] sm:$0xf]
                %218 = vst [vmem:[%s206 + $0x14] sm:$0xf] %v217
                %v219 = vld [vmem:[%s205 + $0x90] sm:$0xf]
                %220 = vst [vmem:[%s206 + $0x18] sm:$0xf] %v219
                %v221 = vld [vmem:[%s205 + $0xa8] sm:$0xf]
                %222 = vst [vmem:[%s206 + $0x1c] sm:$0xf] %v221
                %v223 = vld [vmem:[%s205 + $0xc0] sm:$0xf]
                %224 = vst [vmem:[%s206 + $0x20] sm:$0xf] %v223
                %v225 = vld [vmem:[%s205 + $0xd8] sm:$0xf]
                %226 = vst [vmem:[%s206 + $0x24] sm:$0xf] %v225
                %v227 = vld [vmem:[%s205 + $0xf0] sm:$0xf]
                %228 = vst [vmem:[%s206 + $0x28] sm:$0xf] %v227
                %v229 = vld [vmem:[%s205 + $0x108] sm:$0xf]
                %230 = vst [vmem:[%s206 + $0x2c] sm:$0xf] %v229
                %v231 = vld [vmem:[%s205 + $0x120] sm:$0xf]
                %232 = vst [vmem:[%s206 + $0x30] sm:$0xf] %v231
                %v233 = vld [vmem:[%s205 + $0x138] sm:$0xf]
                %234 = vst [vmem:[%s206 + $0x34] sm:$0xf] %v233
                %v235 = vld [vmem:[%s205 + $0x150] sm:$0xf]
                %236 = vst [vmem:[%s206 + $0x38] sm:$0xf] %v235
                %v237 = vld [vmem:[%s205 + $0x168] sm:$0xf]
                %238 = vst [vmem:[%s206 + $0x3c] sm:$0xf] %v237
              $region37: #{self_attention_forward.4} parent=31 // loop_footer
                %s204 = sadd.s32 1, %s200
              $region38: #{self_attention_forward.4} parent=31 // loop_footer_branch
                %199 = sbr.rel target = $region34
              $region39: #{self_attention_forward.4} parent=31 // loop_exit
                _
            $region32: #{self_attention_forward.4} parent=23 // pred_fallthru
              _
          $region24: #{self_attention_forward.4} parent=19 // pred_fallthru
            _
          %290 = vnop
        $region20: #{self_attention_forward.4} parent=15 // pred_fallthru
          _
        // Predicated region
        $region58: #{self_attention_forward.4} parent=15 // pred_check
          %p291 = pneg %p91
        $region59: #{self_attention_forward.4} parent=15 // pred_check_branch
          %293 = sbr.rel (%p291) target = $region61
        $region60: #{self_attention_forward.4} parent=15 // pred_region
          %s294 = sand.u32 %s81, 1
          %s295 = sand.u32 %s81, 1
          %s296 = smul.addr %s295, 64
          %s297 = scalar_lea.vmem [#allocation7], %s296
          %s298 = sadd.s32 %s17, 2
          %s299 = smul.u32 16, %s19
          %s300 = smul.addr %s299, 6
          %s301 = sadd.s32 %s298, %s300
          %s302 = smul.addr %s16, 96
          %s303 = sadd.s32 %s301, %s302
          %s304 = smul.addr %s303, 4
          %s305 = scalar_lea.vmem %s1, %s304
          // Predicated region
          $region62: #{self_attention_forward.4} parent=60 // pred_check
            _
          $region63: #{self_attention_forward.4} parent=60 // pred_check_branch
            %307 = sbr.rel (0) target = $region65
          $region64: #{self_attention_forward.4} parent=60 // pred_region
            // Predicated region
            $region66: #{self_attention_forward.4} parent=64 // pred_check
              _
            $region67: #{self_attention_forward.4} parent=64 // pred_check_branch
              %309 = sbr.rel target = $region69
            $region68: #{self_attention_forward.4} parent=64 // pred_region
              // Predicated region
              $region81: #{self_attention_forward.4} parent=68 // pred_check
                _
              $region82: #{self_attention_forward.4} parent=68 // pred_check_branch
                %354 = sbr.rel (0) target = $region84
              $region83: #{self_attention_forward.4} parent=68 // pred_region
                loop: start=0, step=1, limit=1
                $region85: #{self_attention_forward.4} parent=83 // loop_pre_header
                  _
                $region86: #{self_attention_forward.4} parent=83 // loop_header
                  %s356 = sphi 0, %s360
                  %p357 = scmp.ge.s32.totalorder %s356, 1
                  %s361 = sphi %s305, %s305
                  %s362 = sphi %s297, %s297
                $region87: #{self_attention_forward.4} parent=83 // loop_header_branch
                  %359 = sbr.rel (%p357) target = $region91
                $region88: #{self_attention_forward.4} parent=83 // loop_body
                  _
                $region89: #{self_attention_forward.4} parent=83 // loop_footer
                  %s360 = sadd.s32 1, %s356
                $region90: #{self_attention_forward.4} parent=83 // loop_footer_branch
                  %355 = sbr.rel target = $region86
                $region91: #{self_attention_forward.4} parent=83 // loop_exit
                  _
                loop: start=0, step=1, limit=1
                $region92: #{self_attention_forward.4} parent=83 // loop_pre_header
                  _
                $region93: #{self_attention_forward.4} parent=83 // loop_header
                  %s365 = sphi 0, %s369
                  %p366 = scmp.ge.s32.totalorder %s365, 1
                  %s370 = sphi %s305, %s305
                  %s371 = sphi %s297, %s297
                $region94: #{self_attention_forward.4} parent=83 // loop_header_branch
                  %368 = sbr.rel (%p366) target = $region98
                $region95: #{self_attention_forward.4} parent=83 // loop_body
                  %v372 = vld [vmem:[%s370] sm:$0xf]
                  %373 = vst [vmem:[%s371] sm:$0xf] %v372
                  %v374 = vld [vmem:[%s370 + $0x18] sm:$0xf]
                  %375 = vst [vmem:[%s371 + $0x4] sm:$0xf] %v374
                  %v376 = vld [vmem:[%s370 + $0x30] sm:$0xf]
                  %377 = vst [vmem:[%s371 + $0x8] sm:$0xf] %v376
                  %v378 = vld [vmem:[%s370 + $0x48] sm:$0xf]
                  %379 = vst [vmem:[%s371 + $0xc] sm:$0xf] %v378
                  %v380 = vld [vmem:[%s370 + $0x60] sm:$0xf]
                  %381 = vst [vmem:[%s371 + $0x10] sm:$0xf] %v380
                  %v382 = vld [vmem:[%s370 + $0x78] sm:$0xf]
                  %383 = vst [vmem:[%s371 + $0x14] sm:$0xf] %v382
                  %v384 = vld [vmem:[%s370 + $0x90] sm:$0xf]
                  %385 = vst [vmem:[%s371 + $0x18] sm:$0xf] %v384
                  %v386 = vld [vmem:[%s370 + $0xa8] sm:$0xf]
                  %387 = vst [vmem:[%s371 + $0x1c] sm:$0xf] %v386
                  %v388 = vld [vmem:[%s370 + $0xc0] sm:$0xf]
                  %389 = vst [vmem:[%s371 + $0x20] sm:$0xf] %v388
                  %v390 = vld [vmem:[%s370 + $0xd8] sm:$0xf]
                  %391 = vst [vmem:[%s371 + $0x24] sm:$0xf] %v390
                  %v392 = vld [vmem:[%s370 + $0xf0] sm:$0xf]
                  %393 = vst [vmem:[%s371 + $0x28] sm:$0xf] %v392
                  %v394 = vld [vmem:[%s370 + $0x108] sm:$0xf]
                  %395 = vst [vmem:[%s371 + $0x2c] sm:$0xf] %v394
                  %v396 = vld [vmem:[%s370 + $0x120] sm:$0xf]
                  %397 = vst [vmem:[%s371 + $0x30] sm:$0xf] %v396
                  %v398 = vld [vmem:[%s370 + $0x138] sm:$0xf]
                  %399 = vst [vmem:[%s371 + $0x34] sm:$0xf] %v398
                  %v400 = vld [vmem:[%s370 + $0x150] sm:$0xf]
                  %401 = vst [vmem:[%s371 + $0x38] sm:$0xf] %v400
                  %v402 = vld [vmem:[%s370 + $0x168] sm:$0xf]
                  %403 = vst [vmem:[%s371 + $0x3c] sm:$0xf] %v402
                $region96: #{self_attention_forward.4} parent=83 // loop_footer
                  %s369 = sadd.s32 1, %s365
                $region97: #{self_attention_forward.4} parent=83 // loop_footer_branch
                  %364 = sbr.rel target = $region93
                $region98: #{self_attention_forward.4} parent=83 // loop_exit
                  _
              $region84: #{self_attention_forward.4} parent=68 // pred_fallthru
                _
            $region69: #{self_attention_forward.4} parent=64 // pred_fallthru
              _
            // Predicated region
            $region70: #{self_attention_forward.4} parent=64 // pred_check
              _
            $region71: #{self_attention_forward.4} parent=64 // pred_check_branch
              %311 = sbr.rel (0) target = $region73
            $region72: #{self_attention_forward.4} parent=64 // pred_region
              loop: start=0, step=1, limit=1
              $region74: #{self_attention_forward.4} parent=72 // loop_pre_header
                _
              $region75: #{self_attention_forward.4} parent=72 // loop_header
                %s314 = sphi 0, %s318
                %p315 = scmp.ge.s32.totalorder %s314, 1
                %s319 = sphi %s305, %s305
                %s320 = sphi %s297, %s297
              $region76: #{self_attention_forward.4} parent=72 // loop_header_branch
                %317 = sbr.rel (%p315) target = $region80
              $region77: #{self_attention_forward.4} parent=72 // loop_body
                %v321 = vld [vmem:[%s319] sm:$0xf]
                %322 = vst [vmem:[%s320] sm:$0xf] %v321
                %v323 = vld [vmem:[%s319 + $0x18] sm:$0xf]
                %324 = vst [vmem:[%s320 + $0x4] sm:$0xf] %v323
                %v325 = vld [vmem:[%s319 + $0x30] sm:$0xf]
                %326 = vst [vmem:[%s320 + $0x8] sm:$0xf] %v325
                %v327 = vld [vmem:[%s319 + $0x48] sm:$0xf]
                %328 = vst [vmem:[%s320 + $0xc] sm:$0xf] %v327
                %v329 = vld [vmem:[%s319 + $0x60] sm:$0xf]
                %330 = vst [vmem:[%s320 + $0x10] sm:$0xf] %v329
                %v331 = vld [vmem:[%s319 + $0x78] sm:$0xf]
                %332 = vst [vmem:[%s320 + $0x14] sm:$0xf] %v331
                %v333 = vld [vmem:[%s319 + $0x90] sm:$0xf]
                %334 = vst [vmem:[%s320 + $0x18] sm:$0xf] %v333
                %v335 = vld [vmem:[%s319 + $0xa8] sm:$0xf]
                %336 = vst [vmem:[%s320 + $0x1c] sm:$0xf] %v335
                %v337 = vld [vmem:[%s319 + $0xc0] sm:$0xf]
                %338 = vst [vmem:[%s320 + $0x20] sm:$0xf] %v337
                %v339 = vld [vmem:[%s319 + $0xd8] sm:$0xf]
                %340 = vst [vmem:[%s320 + $0x24] sm:$0xf] %v339
                %v341 = vld [vmem:[%s319 + $0xf0] sm:$0xf]
                %342 = vst [vmem:[%s320 + $0x28] sm:$0xf] %v341
                %v343 = vld [vmem:[%s319 + $0x108] sm:$0xf]
                %344 = vst [vmem:[%s320 + $0x2c] sm:$0xf] %v343
                %v345 = vld [vmem:[%s319 + $0x120] sm:$0xf]
                %346 = vst [vmem:[%s320 + $0x30] sm:$0xf] %v345
                %v347 = vld [vmem:[%s319 + $0x138] sm:$0xf]
                %348 = vst [vmem:[%s320 + $0x34] sm:$0xf] %v347
                %v349 = vld [vmem:[%s319 + $0x150] sm:$0xf]
                %350 = vst [vmem:[%s320 + $0x38] sm:$0xf] %v349
                %v351 = vld [vmem:[%s319 + $0x168] sm:$0xf]
                %352 = vst [vmem:[%s320 + $0x3c] sm:$0xf] %v351
              $region78: #{self_attention_forward.4} parent=72 // loop_footer
                %s318 = sadd.s32 1, %s314
              $region79: #{self_attention_forward.4} parent=72 // loop_footer_branch
                %313 = sbr.rel target = $region75
              $region80: #{self_attention_forward.4} parent=72 // loop_exit
                _
            $region73: #{self_attention_forward.4} parent=64 // pred_fallthru
              _
          $region65: #{self_attention_forward.4} parent=60 // pred_fallthru
            _
          %404 = vnop
        $region61: #{self_attention_forward.4} parent=15 // pred_fallthru
          _
        // Predicated region
        $region99: #{self_attention_forward.4} parent=15 // pred_check
          %p405 = pneg %p123
        $region100: #{self_attention_forward.4} parent=15 // pred_check_branch
          %407 = sbr.rel (%p405) target = $region102
        $region101: #{self_attention_forward.4} parent=15 // pred_region
          %s408 = sand.u32 %s113, 1
          %s409 = sand.u32 %s113, 1
          %s410 = smul.addr %s409, 64
          %s411 = scalar_lea.vmem [#allocation8], %s410
          %s412 = sadd.s32 %s17, 4
          %s413 = smul.u32 16, %s19
          %s414 = smul.addr %s413, 6
          %s415 = sadd.s32 %s412, %s414
          %s416 = smul.addr %s16, 96
          %s417 = sadd.s32 %s415, %s416
          %s418 = smul.addr %s417, 4
          %s419 = scalar_lea.vmem %s2, %s418
          // Predicated region
          $region103: #{self_attention_forward.4} parent=101 // pred_check
            _
          $region104: #{self_attention_forward.4} parent=101 // pred_check_branch
            %421 = sbr.rel (0) target = $region106
          $region105: #{self_attention_forward.4} parent=101 // pred_region
            // Predicated region
            $region107: #{self_attention_forward.4} parent=105 // pred_check
              _
            $region108: #{self_attention_forward.4} parent=105 // pred_check_branch
              %423 = sbr.rel target = $region110
            $region109: #{self_attention_forward.4} parent=105 // pred_region
              // Predicated region
              $region122: #{self_attention_forward.4} parent=109 // pred_check
                _
              $region123: #{self_attention_forward.4} parent=109 // pred_check_branch
                %468 = sbr.rel (0) target = $region125
              $region124: #{self_attention_forward.4} parent=109 // pred_region
                loop: start=0, step=1, limit=1
                $region126: #{self_attention_forward.4} parent=124 // loop_pre_header
                  _
                $region127: #{self_attention_forward.4} parent=124 // loop_header
                  %s470 = sphi 0, %s474
                  %p471 = scmp.ge.s32.totalorder %s470, 1
                  %s475 = sphi %s419, %s419
                  %s476 = sphi %s411, %s411
                $region128: #{self_attention_forward.4} parent=124 // loop_header_branch
                  %473 = sbr.rel (%p471) target = $region132
                $region129: #{self_attention_forward.4} parent=124 // loop_body
                  _
                $region130: #{self_attention_forward.4} parent=124 // loop_footer
                  %s474 = sadd.s32 1, %s470
                $region131: #{self_attention_forward.4} parent=124 // loop_footer_branch
                  %469 = sbr.rel target = $region127
                $region132: #{self_attention_forward.4} parent=124 // loop_exit
                  _
                loop: start=0, step=1, limit=1
                $region133: #{self_attention_forward.4} parent=124 // loop_pre_header
                  _
                $region134: #{self_attention_forward.4} parent=124 // loop_header
                  %s479 = sphi 0, %s483
                  %p480 = scmp.ge.s32.totalorder %s479, 1
                  %s484 = sphi %s419, %s419
                  %s485 = sphi %s411, %s411
                $region135: #{self_attention_forward.4} parent=124 // loop_header_branch
                  %482 = sbr.rel (%p480) target = $region139
                $region136: #{self_attention_forward.4} parent=124 // loop_body
                  %v486 = vld [vmem:[%s484] sm:$0xf]
                  %487 = vst [vmem:[%s485] sm:$0xf] %v486
                  %v488 = vld [vmem:[%s484 + $0x18] sm:$0xf]
                  %489 = vst [vmem:[%s485 + $0x4] sm:$0xf] %v488
                  %v490 = vld [vmem:[%s484 + $0x30] sm:$0xf]
                  %491 = vst [vmem:[%s485 + $0x8] sm:$0xf] %v490
                  %v492 = vld [vmem:[%s484 + $0x48] sm:$0xf]
                  %493 = vst [vmem:[%s485 + $0xc] sm:$0xf] %v492
                  %v494 = vld [vmem:[%s484 + $0x60] sm:$0xf]
                  %495 = vst [vmem:[%s485 + $0x10] sm:$0xf] %v494
                  %v496 = vld [vmem:[%s484 + $0x78] sm:$0xf]
                  %497 = vst [vmem:[%s485 + $0x14] sm:$0xf] %v496
                  %v498 = vld [vmem:[%s484 + $0x90] sm:$0xf]
                  %499 = vst [vmem:[%s485 + $0x18] sm:$0xf] %v498
                  %v500 = vld [vmem:[%s484 + $0xa8] sm:$0xf]
                  %501 = vst [vmem:[%s485 + $0x1c] sm:$0xf] %v500
                  %v502 = vld [vmem:[%s484 + $0xc0] sm:$0xf]
                  %503 = vst [vmem:[%s485 + $0x20] sm:$0xf] %v502
                  %v504 = vld [vmem:[%s484 + $0xd8] sm:$0xf]
                  %505 = vst [vmem:[%s485 + $0x24] sm:$0xf] %v504
                  %v506 = vld [vmem:[%s484 + $0xf0] sm:$0xf]
                  %507 = vst [vmem:[%s485 + $0x28] sm:$0xf] %v506
                  %v508 = vld [vmem:[%s484 + $0x108] sm:$0xf]
                  %509 = vst [vmem:[%s485 + $0x2c] sm:$0xf] %v508
                  %v510 = vld [vmem:[%s484 + $0x120] sm:$0xf]
                  %511 = vst [vmem:[%s485 + $0x30] sm:$0xf] %v510
                  %v512 = vld [vmem:[%s484 + $0x138] sm:$0xf]
                  %513 = vst [vmem:[%s485 + $0x34] sm:$0xf] %v512
                  %v514 = vld [vmem:[%s484 + $0x150] sm:$0xf]
                  %515 = vst [vmem:[%s485 + $0x38] sm:$0xf] %v514
                  %v516 = vld [vmem:[%s484 + $0x168] sm:$0xf]
                  %517 = vst [vmem:[%s485 + $0x3c] sm:$0xf] %v516
                $region137: #{self_attention_forward.4} parent=124 // loop_footer
                  %s483 = sadd.s32 1, %s479
                $region138: #{self_attention_forward.4} parent=124 // loop_footer_branch
                  %478 = sbr.rel target = $region134
                $region139: #{self_attention_forward.4} parent=124 // loop_exit
                  _
              $region125: #{self_attention_forward.4} parent=109 // pred_fallthru
                _
            $region110: #{self_attention_forward.4} parent=105 // pred_fallthru
              _
            // Predicated region
            $region111: #{self_attention_forward.4} parent=105 // pred_check
              _
            $region112: #{self_attention_forward.4} parent=105 // pred_check_branch
              %425 = sbr.rel (0) target = $region114
            $region113: #{self_attention_forward.4} parent=105 // pred_region
              loop: start=0, step=1, limit=1
              $region115: #{self_attention_forward.4} parent=113 // loop_pre_header
                _
              $region116: #{self_attention_forward.4} parent=113 // loop_header
                %s428 = sphi 0, %s432
                %p429 = scmp.ge.s32.totalorder %s428, 1
                %s433 = sphi %s419, %s419
                %s434 = sphi %s411, %s411
              $region117: #{self_attention_forward.4} parent=113 // loop_header_branch
                %431 = sbr.rel (%p429) target = $region121
              $region118: #{self_attention_forward.4} parent=113 // loop_body
                %v435 = vld [vmem:[%s433] sm:$0xf]
                %436 = vst [vmem:[%s434] sm:$0xf] %v435
                %v437 = vld [vmem:[%s433 + $0x18] sm:$0xf]
                %438 = vst [vmem:[%s434 + $0x4] sm:$0xf] %v437
                %v439 = vld [vmem:[%s433 + $0x30] sm:$0xf]
                %440 = vst [vmem:[%s434 + $0x8] sm:$0xf] %v439
                %v441 = vld [vmem:[%s433 + $0x48] sm:$0xf]
                %442 = vst [vmem:[%s434 + $0xc] sm:$0xf] %v441
                %v443 = vld [vmem:[%s433 + $0x60] sm:$0xf]
                %444 = vst [vmem:[%s434 + $0x10] sm:$0xf] %v443
                %v445 = vld [vmem:[%s433 + $0x78] sm:$0xf]
                %446 = vst [vmem:[%s434 + $0x14] sm:$0xf] %v445
                %v447 = vld [vmem:[%s433 + $0x90] sm:$0xf]
                %448 = vst [vmem:[%s434 + $0x18] sm:$0xf] %v447
                %v449 = vld [vmem:[%s433 + $0xa8] sm:$0xf]
                %450 = vst [vmem:[%s434 + $0x1c] sm:$0xf] %v449
                %v451 = vld [vmem:[%s433 + $0xc0] sm:$0xf]
                %452 = vst [vmem:[%s434 + $0x20] sm:$0xf] %v451
                %v453 = vld [vmem:[%s433 + $0xd8] sm:$0xf]
                %454 = vst [vmem:[%s434 + $0x24] sm:$0xf] %v453
                %v455 = vld [vmem:[%s433 + $0xf0] sm:$0xf]
                %456 = vst [vmem:[%s434 + $0x28] sm:$0xf] %v455
                %v457 = vld [vmem:[%s433 + $0x108] sm:$0xf]
                %458 = vst [vmem:[%s434 + $0x2c] sm:$0xf] %v457
                %v459 = vld [vmem:[%s433 + $0x120] sm:$0xf]
                %460 = vst [vmem:[%s434 + $0x30] sm:$0xf] %v459
                %v461 = vld [vmem:[%s433 + $0x138] sm:$0xf]
                %462 = vst [vmem:[%s434 + $0x34] sm:$0xf] %v461
                %v463 = vld [vmem:[%s433 + $0x150] sm:$0xf]
                %464 = vst [vmem:[%s434 + $0x38] sm:$0xf] %v463
                %v465 = vld [vmem:[%s433 + $0x168] sm:$0xf]
                %466 = vst [vmem:[%s434 + $0x3c] sm:$0xf] %v465
              $region119: #{self_attention_forward.4} parent=113 // loop_footer
                %s432 = sadd.s32 1, %s428
              $region120: #{self_attention_forward.4} parent=113 // loop_footer_branch
                %427 = sbr.rel target = $region116
              $region121: #{self_attention_forward.4} parent=113 // loop_exit
                _
            $region114: #{self_attention_forward.4} parent=105 // pred_fallthru
              _
          $region106: #{self_attention_forward.4} parent=101 // pred_fallthru
            _
          %518 = vnop
        $region102: #{self_attention_forward.4} parent=15 // pred_fallthru
          _
      $region16: #{self_attention_forward.4} parent=5 // pred_fallthru
        _
      %p519 = scmp.le.s32.totalorder 1, %s9
      %p520 = scmp.lt.s32.totalorder %s9, 5
      %p521 = pnand %p519, %p520
      %p522 = pneg %p521
      // Predicated region
      $region140: #{self_attention_forward.4} parent=5 // pred_check
        _
      $region141: #{self_attention_forward.4} parent=5 // pred_check_branch
        %524 = sbr.rel (%p521) target = $region143
      $region142: #{self_attention_forward.4} parent=5 // pred_region
        %s525 = ssub.s32 %s9, 1
        %s526 = sand.u32 %s52, 1
        %s527 = sand.u32 %s52, 1
        %s528 = smul.addr %s527, 64
        %s529 = scalar_lea.vmem [#allocation6], %s528
        // Predicated region
        $region144: #{self_attention_forward.4} parent=142 // pred_check
          %p530 = pneg %p65
        $region145: #{self_attention_forward.4} parent=142 // pred_check_branch
          %532 = sbr.rel (%p530) target = $region147
        $region146: #{self_attention_forward.4} parent=142 // pred_region
          _
        $region147: #{self_attention_forward.4} parent=142 // pred_fallthru
          _
        %s533 = sand.u32 %s84, 1
        %s534 = sand.u32 %s84, 1
        %s535 = smul.addr %s534, 64
        %s536 = scalar_lea.vmem [#allocation7], %s535
        // Predicated region
        $region148: #{self_attention_forward.4} parent=142 // pred_check
          %p537 = pneg %p97
        $region149: #{self_attention_forward.4} parent=142 // pred_check_branch
          %539 = sbr.rel (%p537) target = $region151
        $region150: #{self_attention_forward.4} parent=142 // pred_region
          _
        $region151: #{self_attention_forward.4} parent=142 // pred_fallthru
          _
        %s540 = sand.u32 %s116, 1
        %s541 = sand.u32 %s116, 1
        %s542 = smul.addr %s541, 64
        %s543 = scalar_lea.vmem [#allocation8], %s542
        // Predicated region
        $region152: #{self_attention_forward.4} parent=142 // pred_check
          %p544 = pneg %p129
        $region153: #{self_attention_forward.4} parent=142 // pred_check_branch
          %546 = sbr.rel (%p544) target = $region155
        $region154: #{self_attention_forward.4} parent=142 // pred_region
          _
        $region155: #{self_attention_forward.4} parent=142 // pred_fallthru
          _
        %s547 = sand.u32 %s52, 1
        %s548 = sand.u32 %s52, 1
        %s549 = smul.addr %s548, 64
        %s550 = scalar_lea.vmem [#allocation6], %s549
        %p551 = pneg %p65
        %p552 = pneg %p62
        %s553 = sand.u32 %s84, 1
        %s554 = sand.u32 %s84, 1
        %s555 = smul.addr %s554, 64
        %s556 = scalar_lea.vmem [#allocation7], %s555
        %p557 = pneg %p97
        %p558 = pneg %p94
        %s559 = sand.u32 %s116, 1
        %s560 = sand.u32 %s116, 1
        %s561 = smul.addr %s560, 64
        %s562 = scalar_lea.vmem [#allocation8], %s561
        %p563 = pneg %p129
        %p564 = pneg %p126
        %p565 = pneg %p159
        %p566 = pneg %p156
        %s567 = sand.u32 %s146, 1
        %s568 = sand.u32 %s146, 1
        %s569 = smul.addr %s568, 64
        %s570 = scalar_lea.vmem [#allocation9], %s569
        %s571 = smul.u32 16, %s22
        %s572 = sadd.s32 %s21, 2
        %s573 = smul.u32 16, %s23
        %s574 = sadd.s32 %s21, 4
        %s575 = smul.u32 16, %s23
        %s576 = smul.u32 16, %s22
        %p578 = scmp.eq.s32.totalorder %s23, 0
        // Predicated region
        $region156: #{self_attention_forward.4} parent=142 // pred_check
          %p579 = pneg %p578
        $region157: #{self_attention_forward.4} parent=142 // pred_check_branch
          %581 = sbr.rel (%p579) target = $region159
        $region158: #{self_attention_forward.4} parent=142 // pred_region
          %v582 = vld [vmem:[%s529] sm:$0xf]
          %v583 = vld [vmem:[%s529 + $0x4] sm:$0xf]
          %v584 = vld [vmem:[%s529 + $0x8] sm:$0xf]
          %v585 = vld [vmem:[%s529 + $0xc] sm:$0xf]
          %v586 = vld [vmem:[%s529 + $0x10] sm:$0xf]
          %v587 = vld [vmem:[%s529 + $0x14] sm:$0xf]
          %v588 = vld [vmem:[%s529 + $0x18] sm:$0xf]
          %v589 = vld [vmem:[%s529 + $0x1c] sm:$0xf]
          %v590 = vld [vmem:[%s529 + $0x20] sm:$0xf]
          %v591 = vld [vmem:[%s529 + $0x24] sm:$0xf]
          %v592 = vld [vmem:[%s529 + $0x28] sm:$0xf]
          %v593 = vld [vmem:[%s529 + $0x2c] sm:$0xf]
          %v594 = vld [vmem:[%s529 + $0x30] sm:$0xf]
          %v595 = vld [vmem:[%s529 + $0x34] sm:$0xf]
          %v596 = vld [vmem:[%s529 + $0x38] sm:$0xf]
          %v597 = vld [vmem:[%s529 + $0x3c] sm:$0xf]
          %v598 = vunpack.c.l.bf16 %v582
          %v599 = vunpack.c.l.bf16 %v583
          %v600 = vunpack.c.l.bf16 %v584
          %v601 = vunpack.c.l.bf16 %v585
          %v602 = vunpack.c.l.bf16 %v586
          %v603 = vunpack.c.l.bf16 %v587
          %v604 = vunpack.c.l.bf16 %v588
          %v605 = vunpack.c.l.bf16 %v589
          %v606 = vunpack.c.l.bf16 %v590
          %v607 = vunpack.c.l.bf16 %v591
          %v608 = vunpack.c.l.bf16 %v592
          %v609 = vunpack.c.l.bf16 %v593
          %v610 = vunpack.c.l.bf16 %v594
          %v611 = vunpack.c.l.bf16 %v595
          %v612 = vunpack.c.l.bf16 %v596
          %v613 = vunpack.c.l.bf16 %v597
          %v614 = vmul.f32 %v598, 0.088388346
          %v615 = vmul.f32 %v599, 0.088388346
          %v616 = vmul.f32 %v600, 0.088388346
          %v617 = vmul.f32 %v601, 0.088388346
          %v618 = vmul.f32 %v602, 0.088388346
          %v619 = vmul.f32 %v603, 0.088388346
          %v620 = vmul.f32 %v604, 0.088388346
          %v621 = vmul.f32 %v605, 0.088388346
          %v622 = vmul.f32 %v606, 0.088388346
          %v623 = vmul.f32 %v607, 0.088388346
          %v624 = vmul.f32 %v608, 0.088388346
          %v625 = vmul.f32 %v609, 0.088388346
          %v626 = vmul.f32 %v610, 0.088388346
          %v627 = vmul.f32 %v611, 0.088388346
          %v628 = vmul.f32 %v612, 0.088388346
          %v629 = vmul.f32 %v613, 0.088388346
          %v630 = vpack.c.bf16 %v615, %v614
          %v631 = vpack.c.bf16 %v617, %v616
          %v632 = vpack.c.bf16 %v619, %v618
          %v633 = vpack.c.bf16 %v621, %v620
          %v634 = vpack.c.bf16 %v623, %v622
          %v635 = vpack.c.bf16 %v625, %v624
          %v636 = vpack.c.bf16 %v627, %v626
          %v637 = vpack.c.bf16 %v629, %v628
          %638 = vst [vmem:[#allocation2] sm:$0xff] %v630
          %639 = vst [vmem:[#allocation2 + $0x8] sm:$0xff] %v631
          %640 = vst [vmem:[#allocation2 + $0x10] sm:$0xff] %v632
          %641 = vst [vmem:[#allocation2 + $0x18] sm:$0xff] %v633
          %642 = vst [vmem:[#allocation2 + $0x20] sm:$0xff] %v634
          %643 = vst [vmem:[#allocation2 + $0x28] sm:$0xff] %v635
          %644 = vst [vmem:[#allocation2 + $0x30] sm:$0xff] %v636
          %645 = vst [vmem:[#allocation2 + $0x38] sm:$0xff] %v637
          %vm646 = vcmask 7168
          %647 = vst.msk [vmem:[#allocation3] sm:$0xff] %vm646, -inf
          %648 = vst.msk [vmem:[#allocation3 + $0x8] sm:$0xff] %vm646, -inf
          %649 = vst.msk [vmem:[#allocation3 + $0x10] sm:$0xff] %vm646, -inf
          %650 = vst.msk [vmem:[#allocation3 + $0x18] sm:$0xff] %vm646, -inf
          %651 = vst.msk [vmem:[#allocation3 + $0x20] sm:$0xff] %vm646, -inf
          %652 = vst.msk [vmem:[#allocation3 + $0x28] sm:$0xff] %vm646, -inf
          %653 = vst.msk [vmem:[#allocation3 + $0x30] sm:$0xff] %vm646, -inf
          %654 = vst.msk [vmem:[#allocation3 + $0x38] sm:$0xff] %vm646, -inf
          %655 = vst.msk [vmem:[#allocation3 + $0x40] sm:$0xff] %vm646, -inf
          %656 = vst.msk [vmem:[#allocation3 + $0x48] sm:$0xff] %vm646, -inf
          %657 = vst.msk [vmem:[#allocation3 + $0x50] sm:$0xff] %vm646, -inf
          %658 = vst.msk [vmem:[#allocation3 + $0x58] sm:$0xff] %vm646, -inf
          %659 = vst.msk [vmem:[#allocation3 + $0x60] sm:$0xff] %vm646, -inf
          %660 = vst.msk [vmem:[#allocation3 + $0x68] sm:$0xff] %vm646, -inf
          %661 = vst.msk [vmem:[#allocation3 + $0x70] sm:$0xff] %vm646, -inf
          %662 = vst.msk [vmem:[#allocation3 + $0x78] sm:$0xff] %vm646, -inf
          %663 = vst.msk [vmem:[#allocation4] sm:$0xff] %vm646, 0.0
          %664 = vst.msk [vmem:[#allocation4 + $0x8] sm:$0xff] %vm646, 0.0
          %665 = vst.msk [vmem:[#allocation4 + $0x10] sm:$0xff] %vm646, 0.0
          %666 = vst.msk [vmem:[#allocation4 + $0x18] sm:$0xff] %vm646, 0.0
          %667 = vst.msk [vmem:[#allocation4 + $0x20] sm:$0xff] %vm646, 0.0
          %668 = vst.msk [vmem:[#allocation4 + $0x28] sm:$0xff] %vm646, 0.0
          %669 = vst.msk [vmem:[#allocation4 + $0x30] sm:$0xff] %vm646, 0.0
          %670 = vst.msk [vmem:[#allocation4 + $0x38] sm:$0xff] %vm646, 0.0
          %671 = vst.msk [vmem:[#allocation4 + $0x40] sm:$0xff] %vm646, 0.0
          %672 = vst.msk [vmem:[#allocation4 + $0x48] sm:$0xff] %vm646, 0.0
          %673 = vst.msk [vmem:[#allocation4 + $0x50] sm:$0xff] %vm646, 0.0
          %674 = vst.msk [vmem:[#allocation4 + $0x58] sm:$0xff] %vm646, 0.0
          %675 = vst.msk [vmem:[#allocation4 + $0x60] sm:$0xff] %vm646, 0.0
          %676 = vst.msk [vmem:[#allocation4 + $0x68] sm:$0xff] %vm646, 0.0
          %677 = vst.msk [vmem:[#allocation4 + $0x70] sm:$0xff] %vm646, 0.0
          %678 = vst.msk [vmem:[#allocation4 + $0x78] sm:$0xff] %vm646, 0.0
          %679 = vst [vmem:[#allocation5] sm:$0xff] 0.0
          %680 = vst [vmem:[#allocation5 + $0x8] sm:$0xff] 0.0
          %681 = vst [vmem:[#allocation5 + $0x10] sm:$0xff] 0.0
          %682 = vst [vmem:[#allocation5 + $0x18] sm:$0xff] 0.0
          %683 = vst [vmem:[#allocation5 + $0x20] sm:$0xff] 0.0
          %684 = vst [vmem:[#allocation5 + $0x28] sm:$0xff] 0.0
          %685 = vst [vmem:[#allocation5 + $0x30] sm:$0xff] 0.0
          %686 = vst [vmem:[#allocation5 + $0x38] sm:$0xff] 0.0
          %687 = vst [vmem:[#allocation5 + $0x40] sm:$0xff] 0.0
          %688 = vst [vmem:[#allocation5 + $0x48] sm:$0xff] 0.0
          %689 = vst [vmem:[#allocation5 + $0x50] sm:$0xff] 0.0
          %690 = vst [vmem:[#allocation5 + $0x58] sm:$0xff] 0.0
          %691 = vst [vmem:[#allocation5 + $0x60] sm:$0xff] 0.0
          %692 = vst [vmem:[#allocation5 + $0x68] sm:$0xff] 0.0
          %693 = vst [vmem:[#allocation5 + $0x70] sm:$0xff] 0.0
          %694 = vst [vmem:[#allocation5 + $0x78] sm:$0xff] 0.0
        $region159: #{self_attention_forward.4} parent=142 // pred_fallthru
          _
        %v695 = vld [vmem:[%s536] sm:$0xf]
        %v696 = vld [vmem:[%s536 + $0x4] sm:$0xf]
        %v697 = vld [vmem:[%s536 + $0x8] sm:$0xf]
        %v698 = vld [vmem:[%s536 + $0xc] sm:$0xf]
        %v699 = vld [vmem:[%s536 + $0x10] sm:$0xf]
        %v700 = vld [vmem:[%s536 + $0x14] sm:$0xf]
        %v701 = vld [vmem:[%s536 + $0x18] sm:$0xf]
        %v702 = vld [vmem:[%s536 + $0x1c] sm:$0xf]
        %v703 = vld [vmem:[%s536 + $0x20] sm:$0xf]
        %v704 = vld [vmem:[%s536 + $0x24] sm:$0xf]
        %v705 = vld [vmem:[%s536 + $0x28] sm:$0xf]
        %v706 = vld [vmem:[%s536 + $0x2c] sm:$0xf]
        %v707 = vld [vmem:[%s536 + $0x30] sm:$0xf]
        %v708 = vld [vmem:[%s536 + $0x34] sm:$0xf]
        %v709 = vld [vmem:[%s536 + $0x38] sm:$0xf]
        %v710 = vld [vmem:[%s536 + $0x3c] sm:$0xf]
        %v711 = vld [vmem:[#allocation2] sm:$0xff]
        %v712 = vld [vmem:[#allocation2 + $0x8] sm:$0xff]
        %v713 = vld [vmem:[#allocation2 + $0x10] sm:$0xff]
        %v714 = vld [vmem:[#allocation2 + $0x18] sm:$0xff]
        %v715 = vld [vmem:[#allocation2 + $0x20] sm:$0xff]
        %v716 = vld [vmem:[#allocation2 + $0x28] sm:$0xff]
        %v717 = vld [vmem:[#allocation2 + $0x30] sm:$0xff]
        %v718 = vld [vmem:[#allocation2 + $0x38] sm:$0xff]
        %v735 = vunpack.c.l.b16 %v695
        %v736 = vunpack.c.l.b16 %v696
        %v737 = vunpack.c.l.b16 %v697
        %v738 = vunpack.c.l.b16 %v698
        %v739 = vunpack.c.l.b16 %v699
        %v740 = vunpack.c.l.b16 %v700
        %v741 = vunpack.c.l.b16 %v701
        %v742 = vunpack.c.l.b16 %v702
        %v743 = vunpack.c.l.b16 %v703
        %v744 = vunpack.c.l.b16 %v704
        %v745 = vunpack.c.l.b16 %v705
        %v746 = vunpack.c.l.b16 %v706
        %v747 = vunpack.c.l.b16 %v707
        %v748 = vunpack.c.l.b16 %v708
        %v749 = vunpack.c.l.b16 %v709
        %v750 = vunpack.c.l.b16 %v710
        %v751 = vpack.c.b16 %v736, %v735
        %v752 = vpack.c.b16 %v738, %v737
        %v753 = vpack.c.b16 %v740, %v739
        %v754 = vpack.c.b16 %v742, %v741
        %v755 = vpack.c.b16 %v744, %v743
        %v756 = vpack.c.b16 %v746, %v745
        %v757 = vpack.c.b16 %v748, %v747
        %v758 = vpack.c.b16 %v750, %v749
        %767 = vmatprep.subr.bf16.mxu0 0
        %768 = vmatpush1.bf16.xpose.msra.mxu0 %v751
        %769 = vmatprep.subr.bf16.mxu0 0
        %770 = vmatpush1.bf16.xpose.msra.mxu0 %v752
        %771 = vmatprep.subr.bf16.mxu0 0
        %772 = vmatpush1.bf16.xpose.msra.mxu0 %v753
        %773 = vmatprep.subr.bf16.mxu0 0
        %774 = vmatpush1.bf16.xpose.msra.mxu0 %v754
        %775 = vmatprep.subr.bf16.mxu0 0
        %776 = vmatpush1.bf16.xpose.msra.mxu0 %v755
        %777 = vmatprep.subr.bf16.mxu0 0
        %778 = vmatpush1.bf16.xpose.msra.mxu0 %v756
        %779 = vmatprep.subr.bf16.mxu0 0
        %780 = vmatpush1.bf16.xpose.msra.mxu0 %v757
        %781 = vmatprep.subr.bf16.mxu0 0
        %782 = vmatpush1.bf16.xpose.msra.mxu0 %v758
        %783 = vmatprep.subr.bf16.mxu0 0
        %784 = vmatpush1.bf16.xpose.msra.mxu0 0
        %785 = vmatprep.subr.bf16.mxu0 0
        %786 = vmatpush1.bf16.xpose.msra.mxu0 0
        %787 = vmatprep.subr.bf16.mxu0 0
        %788 = vmatpush1.bf16.xpose.msra.mxu0 0
        %789 = vmatprep.subr.bf16.mxu0 0
        %790 = vmatpush1.bf16.xpose.msra.mxu0 0
        %791 = vmatprep.subr.bf16.mxu0 0
        %792 = vmatpush1.bf16.xpose.msra.mxu0 0
        %793 = vmatprep.subr.bf16.mxu0 0
        %794 = vmatpush1.bf16.xpose.msra.mxu0 0
        %795 = vmatprep.subr.bf16.mxu0 0
        %796 = vmatpush1.bf16.xpose.msra.mxu0 0
        %797 = vmatprep.subr.bf16.mxu0 0
        %798 = vmatpush1.bf16.xpose.msra.mxu0 0
        %799 = vmatprep.mubr.bf16.mxu0 0
        %800 = vmatmul.mubr.bf16.gmra.mrb[0].mxu0 %v711
        %v801 = vpop.f32.mrb[0].mxu0
        %v802 = vadd.f32 0.0, %v801
        %v803 = vpop.f32.mrb[0].mxu0
        %v804 = vpop.f32.mrb[0].mxu0
        %v805 = vadd.f32 0.0, %v804
        %v806 = vpop.f32.mrb[0].mxu0
        %807 = vmatprep.mubr.bf16.mxu0 0
        %808 = vmatmul.mubr.bf16.gmra.mrb[0].mxu0 %v712
        %v809 = vpop.f32.mrb[0].mxu0
        %v810 = vadd.f32 0.0, %v809
        %v811 = vpop.f32.mrb[0].mxu0
        %v812 = vpop.f32.mrb[0].mxu0
        %v813 = vadd.f32 0.0, %v812
        %v814 = vpop.f32.mrb[0].mxu0
        %815 = vmatprep.mubr.bf16.mxu0 0
        %816 = vmatmul.mubr.bf16.gmra.mrb[0].mxu0 %v713
        %v817 = vpop.f32.mrb[0].mxu0
        %v818 = vadd.f32 0.0, %v817
        %v819 = vpop.f32.mrb[0].mxu0
        %v820 = vpop.f32.mrb[0].mxu0
        %v821 = vadd.f32 0.0, %v820
        %v822 = vpop.f32.mrb[0].mxu0
        %823 = vmatprep.mubr.bf16.mxu0 0
        %824 = vmatmul.mubr.bf16.gmra.mrb[0].mxu0 %v714
        %v825 = vpop.f32.mrb[0].mxu0
        %v826 = vadd.f32 0.0, %v825
        %v827 = vpop.f32.mrb[0].mxu0
        %v828 = vpop.f32.mrb[0].mxu0
        %v829 = vadd.f32 0.0, %v828
        %v830 = vpop.f32.mrb[0].mxu0
        %831 = vmatprep.mubr.bf16.mxu0 0
        %832 = vmatmul.mubr.bf16.gmra.mrb[0].mxu0 %v715
        %v833 = vpop.f32.mrb[0].mxu0
        %v834 = vadd.f32 0.0, %v833
        %v835 = vpop.f32.mrb[0].mxu0
        %v836 = vpop.f32.mrb[0].mxu0
        %v837 = vadd.f32 0.0, %v836
        %v838 = vpop.f32.mrb[0].mxu0
        %839 = vmatprep.mubr.bf16.mxu0 0
        %840 = vmatmul.mubr.bf16.gmra.mrb[0].mxu0 %v716
        %v841 = vpop.f32.mrb[0].mxu0
        %v842 = vadd.f32 0.0, %v841
        %v843 = vpop.f32.mrb[0].mxu0
        %v844 = vpop.f32.mrb[0].mxu0
        %v845 = vadd.f32 0.0, %v844
        %v846 = vpop.f32.mrb[0].mxu0
        %847 = vmatprep.mubr.bf16.mxu0 0
        %848 = vmatmul.mubr.bf16.gmra.mrb[0].mxu0 %v717
        %v849 = vpop.f32.mrb[0].mxu0
        %v850 = vadd.f32 0.0, %v849
        %v851 = vpop.f32.mrb[0].mxu0
        %v852 = vpop.f32.mrb[0].mxu0
        %v853 = vadd.f32 0.0, %v852
        %v854 = vpop.f32.mrb[0].mxu0
        %855 = vmatprep.mubr.bf16.mxu0 0
        %856 = vmatmul.mubr.bf16.gmra.mrb[0].mxu0 %v718
        %v857 = vpop.f32.mrb[0].mxu0
        %v858 = vadd.f32 0.0, %v857
        %v859 = vpop.f32.mrb[0].mxu0
        %v860 = vpop.f32.mrb[0].mxu0
        %v861 = vadd.f32 0.0, %v860
        %v862 = vpop.f32.mrb[0].mxu0
        %863 = vdwg.mxu0
        %v864 = vld [vmem:[#allocation3] sm:$0xff]
        %v865 = vld [vmem:[#allocation3 + $0x8] sm:$0xff]
        %v866 = vld [vmem:[#allocation3 + $0x10] sm:$0xff]
        %v867 = vld [vmem:[#allocation3 + $0x18] sm:$0xff]
        %v868 = vld [vmem:[#allocation3 + $0x20] sm:$0xff]
        %v869 = vld [vmem:[#allocation3 + $0x28] sm:$0xff]
        %v870 = vld [vmem:[#allocation3 + $0x30] sm:$0xff]
        %v871 = vld [vmem:[#allocation3 + $0x38] sm:$0xff]
        %v872 = vld [vmem:[#allocation3 + $0x40] sm:$0xff]
        %v873 = vld [vmem:[#allocation3 + $0x48] sm:$0xff]
        %v874 = vld [vmem:[#allocation3 + $0x50] sm:$0xff]
        %v875 = vld [vmem:[#allocation3 + $0x58] sm:$0xff]
        %v876 = vld [vmem:[#allocation3 + $0x60] sm:$0xff]
        %v877 = vld [vmem:[#allocation3 + $0x68] sm:$0xff]
        %v878 = vld [vmem:[#allocation3 + $0x70] sm:$0xff]
        %v879 = vld [vmem:[#allocation3 + $0x78] sm:$0xff]
        %880 = vmax.xlane.f32.xlu0 %v802
        %v881 = vpop.xlane.xlu0 %880
        %882 = vmax.xlane.f32.xlu0 %v805
        %v883 = vpop.xlane.xlu0 %882
        %884 = vmax.xlane.f32.xlu0 %v810
        %v885 = vpop.xlane.xlu0 %884
        %886 = vmax.xlane.f32.xlu0 %v813
        %v887 = vpop.xlane.xlu0 %886
        %888 = vmax.xlane.f32.xlu0 %v818
        %v889 = vpop.xlane.xlu0 %888
        %890 = vmax.xlane.f32.xlu0 %v821
        %v891 = vpop.xlane.xlu0 %890
        %892 = vmax.xlane.f32.xlu0 %v826
        %v893 = vpop.xlane.xlu0 %892
        %894 = vmax.xlane.f32.xlu0 %v829
        %v895 = vpop.xlane.xlu0 %894
        %896 = vmax.xlane.f32.xlu0 %v834
        %v897 = vpop.xlane.xlu0 %896
        %898 = vmax.xlane.f32.xlu0 %v837
        %v899 = vpop.xlane.xlu0 %898
        %900 = vmax.xlane.f32.xlu0 %v842
        %v901 = vpop.xlane.xlu0 %900
        %902 = vmax.xlane.f32.xlu0 %v845
        %v903 = vpop.xlane.xlu0 %902
        %904 = vmax.xlane.f32.xlu0 %v850
        %v905 = vpop.xlane.xlu0 %904
        %906 = vmax.xlane.f32.xlu0 %v853
        %v907 = vpop.xlane.xlu0 %906
        %908 = vmax.xlane.f32.xlu0 %v858
        %v909 = vpop.xlane.xlu0 %908
        %910 = vmax.xlane.f32.xlu0 %v861
        %v911 = vpop.xlane.xlu0 %910
        %v912 = vmax.f32 %v864, %v881
        %v913 = vmax.f32 %v865, %v883
        %v914 = vmax.f32 %v866, %v885
        %v915 = vmax.f32 %v867, %v887
        %v916 = vmax.f32 %v868, %v889
        %v917 = vmax.f32 %v869, %v891
        %v918 = vmax.f32 %v870, %v893
        %v919 = vmax.f32 %v871, %v895
        %v920 = vmax.f32 %v872, %v897
        %v921 = vmax.f32 %v873, %v899
        %v922 = vmax.f32 %v874, %v901
        %v923 = vmax.f32 %v875, %v903
        %v924 = vmax.f32 %v876, %v905
        %v925 = vmax.f32 %v877, %v907
        %v926 = vmax.f32 %v878, %v909
        %v927 = vmax.f32 %v879, %v911
        %v928 = vsub.f32 %v864, %v912
        %v929 = vsub.f32 %v865, %v913
        %v930 = vsub.f32 %v866, %v914
        %v931 = vsub.f32 %v867, %v915
        %v932 = vsub.f32 %v868, %v916
        %v933 = vsub.f32 %v869, %v917
        %v934 = vsub.f32 %v870, %v918
        %v935 = vsub.f32 %v871, %v919
        %v936 = vsub.f32 %v872, %v920
        %v937 = vsub.f32 %v873, %v921
        %v938 = vsub.f32 %v874, %v922
        %v939 = vsub.f32 %v875, %v923
        %v940 = vsub.f32 %v876, %v924
        %v941 = vsub.f32 %v877, %v925
        %v942 = vsub.f32 %v878, %v926
        %v943 = vsub.f32 %v879, %v927
        %v944 = vmul.f32 %v928, 1.442695
        %v945 = vpow.pop %v944
        %v946 = vmul.f32 %v929, 1.442695
        %v947 = vpow.pop %v946
        %v948 = vmul.f32 %v930, 1.442695
        %v949 = vpow.pop %v948
        %v950 = vmul.f32 %v931, 1.442695
        %v951 = vpow.pop %v950
        %v952 = vmul.f32 %v932, 1.442695
        %v953 = vpow.pop %v952
        %v954 = vmul.f32 %v933, 1.442695
        %v955 = vpow.pop %v954
        %v956 = vmul.f32 %v934, 1.442695
        %v957 = vpow.pop %v956
        %v958 = vmul.f32 %v935, 1.442695
        %v959 = vpow.pop %v958
        %v960 = vmul.f32 %v936, 1.442695
        %v961 = vpow.pop %v960
        %v962 = vmul.f32 %v937, 1.442695
        %v963 = vpow.pop %v962
        %v964 = vmul.f32 %v938, 1.442695
        %v965 = vpow.pop %v964
        %v966 = vmul.f32 %v939, 1.442695
        %v967 = vpow.pop %v966
        %v968 = vmul.f32 %v940, 1.442695
        %v969 = vpow.pop %v968
        %v970 = vmul.f32 %v941, 1.442695
        %v971 = vpow.pop %v970
        %v972 = vmul.f32 %v942, 1.442695
        %v973 = vpow.pop %v972
        %v974 = vmul.f32 %v943, 1.442695
        %v975 = vpow.pop %v974
        %977 = vset.pattern.permute.xlu0 0
        %978 = vperm.xlu0 %977, %v912
        %v979 = vpop.permute.xlu0 %978
        %982 = vset.pattern.permute.xlu0 0
        %983 = vperm.xlu0 %982, %v913
        %v984 = vpop.permute.xlu0 %983
        %987 = vset.pattern.permute.xlu0 0
        %988 = vperm.xlu0 %987, %v914
        %v989 = vpop.permute.xlu0 %988
        %992 = vset.pattern.permute.xlu0 0
        %993 = vperm.xlu0 %992, %v915
        %v994 = vpop.permute.xlu0 %993
        %997 = vset.pattern.permute.xlu0 0
        %998 = vperm.xlu0 %997, %v916
        %v999 = vpop.permute.xlu0 %998
        %1002 = vset.pattern.permute.xlu0 0
        %1003 = vperm.xlu0 %1002, %v917
        %v1004 = vpop.permute.xlu0 %1003
        %1007 = vset.pattern.permute.xlu0 0
        %1008 = vperm.xlu0 %1007, %v918
        %v1009 = vpop.permute.xlu0 %1008
        %1012 = vset.pattern.permute.xlu0 0
        %1013 = vperm.xlu0 %1012, %v919
        %v1014 = vpop.permute.xlu0 %1013
        %1017 = vset.pattern.permute.xlu0 0
        %1018 = vperm.xlu0 %1017, %v920
        %v1019 = vpop.permute.xlu0 %1018
        %1022 = vset.pattern.permute.xlu0 0
        %1023 = vperm.xlu0 %1022, %v921
        %v1024 = vpop.permute.xlu0 %1023
        %1027 = vset.pattern.permute.xlu0 0
        %1028 = vperm.xlu0 %1027, %v922
        %v1029 = vpop.permute.xlu0 %1028
        %1032 = vset.pattern.permute.xlu0 0
        %1033 = vperm.xlu0 %1032, %v923
        %v1034 = vpop.permute.xlu0 %1033
        %1037 = vset.pattern.permute.xlu0 0
        %1038 = vperm.xlu0 %1037, %v924
        %v1039 = vpop.permute.xlu0 %1038
        %1042 = vset.pattern.permute.xlu0 0
        %1043 = vperm.xlu0 %1042, %v925
        %v1044 = vpop.permute.xlu0 %1043
        %1047 = vset.pattern.permute.xlu0 0
        %1048 = vperm.xlu0 %1047, %v926
        %v1049 = vpop.permute.xlu0 %1048
        %1052 = vset.pattern.permute.xlu0 0
        %1053 = vperm.xlu0 %1052, %v927
        %v1054 = vpop.permute.xlu0 %1053
        %v1056 = vsub.f32 %v802, %v979
        %v1057 = vsub.f32 %v805, %v984
        %v1058 = vsub.f32 %v810, %v989
        %v1059 = vsub.f32 %v813, %v994
        %v1060 = vsub.f32 %v818, %v999
        %v1061 = vsub.f32 %v821, %v1004
        %v1062 = vsub.f32 %v826, %v1009
        %v1063 = vsub.f32 %v829, %v1014
        %v1064 = vsub.f32 %v834, %v1019
        %v1065 = vsub.f32 %v837, %v1024
        %v1066 = vsub.f32 %v842, %v1029
        %v1067 = vsub.f32 %v845, %v1034
        %v1068 = vsub.f32 %v850, %v1039
        %v1069 = vsub.f32 %v853, %v1044
        %v1070 = vsub.f32 %v858, %v1049
        %v1071 = vsub.f32 %v861, %v1054
        %v1072 = vmul.f32 %v1056, 1.442695
        %v1073 = vpow.pop %v1072
        %v1074 = vmul.f32 %v1057, 1.442695
        %v1075 = vpow.pop %v1074
        %v1076 = vmul.f32 %v1058, 1.442695
        %v1077 = vpow.pop %v1076
        %v1078 = vmul.f32 %v1059, 1.442695
        %v1079 = vpow.pop %v1078
        %v1080 = vmul.f32 %v1060, 1.442695
        %v1081 = vpow.pop %v1080
        %v1082 = vmul.f32 %v1061, 1.442695
        %v1083 = vpow.pop %v1082
        %v1084 = vmul.f32 %v1062, 1.442695
        %v1085 = vpow.pop %v1084
        %v1086 = vmul.f32 %v1063, 1.442695
        %v1087 = vpow.pop %v1086
        %v1088 = vmul.f32 %v1064, 1.442695
        %v1089 = vpow.pop %v1088
        %v1090 = vmul.f32 %v1065, 1.442695
        %v1091 = vpow.pop %v1090
        %v1092 = vmul.f32 %v1066, 1.442695
        %v1093 = vpow.pop %v1092
        %v1094 = vmul.f32 %v1067, 1.442695
        %v1095 = vpow.pop %v1094
        %v1096 = vmul.f32 %v1068, 1.442695
        %v1097 = vpow.pop %v1096
        %v1098 = vmul.f32 %v1069, 1.442695
        %v1099 = vpow.pop %v1098
        %v1100 = vmul.f32 %v1070, 1.442695
        %v1101 = vpow.pop %v1100
        %v1102 = vmul.f32 %v1071, 1.442695
        %v1103 = vpow.pop %v1102
        %v1104 = vld [vmem:[#allocation4] sm:$0xff]
        %v1105 = vld [vmem:[#allocation4 + $0x8] sm:$0xff]
        %v1106 = vld [vmem:[#allocation4 + $0x10] sm:$0xff]
        %v1107 = vld [vmem:[#allocation4 + $0x18] sm:$0xff]
        %v1108 = vld [vmem:[#allocation4 + $0x20] sm:$0xff]
        %v1109 = vld [vmem:[#allocation4 + $0x28] sm:$0xff]
        %v1110 = vld [vmem:[#allocation4 + $0x30] sm:$0xff]
        %v1111 = vld [vmem:[#allocation4 + $0x38] sm:$0xff]
        %v1112 = vld [vmem:[#allocation4 + $0x40] sm:$0xff]
        %v1113 = vld [vmem:[#allocation4 + $0x48] sm:$0xff]
        %v1114 = vld [vmem:[#allocation4 + $0x50] sm:$0xff]
        %v1115 = vld [vmem:[#allocation4 + $0x58] sm:$0xff]
        %v1116 = vld [vmem:[#allocation4 + $0x60] sm:$0xff]
        %v1117 = vld [vmem:[#allocation4 + $0x68] sm:$0xff]
        %v1118 = vld [vmem:[#allocation4 + $0x70] sm:$0xff]
        %v1119 = vld [vmem:[#allocation4 + $0x78] sm:$0xff]
        %v1120 = vmul.f32 %v945, %v1104
        %v1121 = vmul.f32 %v947, %v1105
        %v1122 = vmul.f32 %v949, %v1106
        %v1123 = vmul.f32 %v951, %v1107
        %v1124 = vmul.f32 %v953, %v1108
        %v1125 = vmul.f32 %v955, %v1109
        %v1126 = vmul.f32 %v957, %v1110
        %v1127 = vmul.f32 %v959, %v1111
        %v1128 = vmul.f32 %v961, %v1112
        %v1129 = vmul.f32 %v963, %v1113
        %v1130 = vmul.f32 %v965, %v1114
        %v1131 = vmul.f32 %v967, %v1115
        %v1132 = vmul.f32 %v969, %v1116
        %v1133 = vmul.f32 %v971, %v1117
        %v1134 = vmul.f32 %v973, %v1118
        %v1135 = vmul.f32 %v975, %v1119
        %1136 = vadd.xlane.f32.xlu0 %v1073
        %v1137 = vpop.xlane.xlu0 %1136
        %1138 = vadd.xlane.f32.xlu0 %v1075
        %v1139 = vpop.xlane.xlu0 %1138
        %1140 = vadd.xlane.f32.xlu0 %v1077
        %v1141 = vpop.xlane.xlu0 %1140
        %1142 = vadd.xlane.f32.xlu0 %v1079
        %v1143 = vpop.xlane.xlu0 %1142
        %1144 = vadd.xlane.f32.xlu0 %v1081
        %v1145 = vpop.xlane.xlu0 %1144
        %1146 = vadd.xlane.f32.xlu0 %v1083
        %v1147 = vpop.xlane.xlu0 %1146
        %1148 = vadd.xlane.f32.xlu0 %v1085
        %v1149 = vpop.xlane.xlu0 %1148
        %1150 = vadd.xlane.f32.xlu0 %v1087
        %v1151 = vpop.xlane.xlu0 %1150
        %1152 = vadd.xlane.f32.xlu0 %v1089
        %v1153 = vpop.xlane.xlu0 %1152
        %1154 = vadd.xlane.f32.xlu0 %v1091
        %v1155 = vpop.xlane.xlu0 %1154
        %1156 = vadd.xlane.f32.xlu0 %v1093
        %v1157 = vpop.xlane.xlu0 %1156
        %1158 = vadd.xlane.f32.xlu0 %v1095
        %v1159 = vpop.xlane.xlu0 %1158
        %1160 = vadd.xlane.f32.xlu0 %v1097
        %v1161 = vpop.xlane.xlu0 %1160
        %1162 = vadd.xlane.f32.xlu0 %v1099
        %v1163 = vpop.xlane.xlu0 %1162
        %1164 = vadd.xlane.f32.xlu0 %v1101
        %v1165 = vpop.xlane.xlu0 %1164
        %1166 = vadd.xlane.f32.xlu0 %v1103
        %v1167 = vpop.xlane.xlu0 %1166
        %v1168 = vadd.f32 %v1120, %v1137
        %v1169 = vadd.f32 %v1121, %v1139
        %v1170 = vadd.f32 %v1122, %v1141
        %v1171 = vadd.f32 %v1123, %v1143
        %v1172 = vadd.f32 %v1124, %v1145
        %v1173 = vadd.f32 %v1125, %v1147
        %v1174 = vadd.f32 %v1126, %v1149
        %v1175 = vadd.f32 %v1127, %v1151
        %v1176 = vadd.f32 %v1128, %v1153
        %v1177 = vadd.f32 %v1129, %v1155
        %v1178 = vadd.f32 %v1130, %v1157
        %v1179 = vadd.f32 %v1131, %v1159
        %v1180 = vadd.f32 %v1132, %v1161
        %v1181 = vadd.f32 %v1133, %v1163
        %v1182 = vadd.f32 %v1134, %v1165
        %v1183 = vadd.f32 %v1135, %v1167
        %vm1184 = vcmask 7168
        %1185 = vst.msk [vmem:[#allocation4] sm:$0xff] %vm1184, %v1168
        %1186 = vst.msk [vmem:[#allocation4 + $0x8] sm:$0xff] %vm1184, %v1169
        %1187 = vst.msk [vmem:[#allocation4 + $0x10] sm:$0xff] %vm1184, %v1170
        %1188 = vst.msk [vmem:[#allocation4 + $0x18] sm:$0xff] %vm1184, %v1171
        %1189 = vst.msk [vmem:[#allocation4 + $0x20] sm:$0xff] %vm1184, %v1172
        %1190 = vst.msk [vmem:[#allocation4 + $0x28] sm:$0xff] %vm1184, %v1173
        %1191 = vst.msk [vmem:[#allocation4 + $0x30] sm:$0xff] %vm1184, %v1174
        %1192 = vst.msk [vmem:[#allocation4 + $0x38] sm:$0xff] %vm1184, %v1175
        %1193 = vst.msk [vmem:[#allocation4 + $0x40] sm:$0xff] %vm1184, %v1176
        %1194 = vst.msk [vmem:[#allocation4 + $0x48] sm:$0xff] %vm1184, %v1177
        %1195 = vst.msk [vmem:[#allocation4 + $0x50] sm:$0xff] %vm1184, %v1178
        %1196 = vst.msk [vmem:[#allocation4 + $0x58] sm:$0xff] %vm1184, %v1179
        %1197 = vst.msk [vmem:[#allocation4 + $0x60] sm:$0xff] %vm1184, %v1180
        %1198 = vst.msk [vmem:[#allocation4 + $0x68] sm:$0xff] %vm1184, %v1181
        %1199 = vst.msk [vmem:[#allocation4 + $0x70] sm:$0xff] %vm1184, %v1182
        %1200 = vst.msk [vmem:[#allocation4 + $0x78] sm:$0xff] %vm1184, %v1183
        %v1201 = vpack.c.bf16 %v1075, %v1073
        %v1202 = vpack.c.bf16 %v1079, %v1077
        %v1203 = vpack.c.bf16 %v1083, %v1081
        %v1204 = vpack.c.bf16 %v1087, %v1085
        %v1205 = vpack.c.bf16 %v1091, %v1089
        %v1206 = vpack.c.bf16 %v1095, %v1093
        %v1207 = vpack.c.bf16 %v1099, %v1097
        %v1208 = vpack.c.bf16 %v1103, %v1101
        %v1209 = vld [vmem:[%s543] sm:$0xf]
        %v1210 = vld [vmem:[%s543 + $0x4] sm:$0xf]
        %v1211 = vld [vmem:[%s543 + $0x8] sm:$0xf]
        %v1212 = vld [vmem:[%s543 + $0xc] sm:$0xf]
        %v1213 = vld [vmem:[%s543 + $0x10] sm:$0xf]
        %v1214 = vld [vmem:[%s543 + $0x14] sm:$0xf]
        %v1215 = vld [vmem:[%s543 + $0x18] sm:$0xf]
        %v1216 = vld [vmem:[%s543 + $0x1c] sm:$0xf]
        %v1217 = vld [vmem:[%s543 + $0x20] sm:$0xf]
        %v1218 = vld [vmem:[%s543 + $0x24] sm:$0xf]
        %v1219 = vld [vmem:[%s543 + $0x28] sm:$0xf]
        %v1220 = vld [vmem:[%s543 + $0x2c] sm:$0xf]
        %v1221 = vld [vmem:[%s543 + $0x30] sm:$0xf]
        %v1222 = vld [vmem:[%s543 + $0x34] sm:$0xf]
        %v1223 = vld [vmem:[%s543 + $0x38] sm:$0xf]
        %v1224 = vld [vmem:[%s543 + $0x3c] sm:$0xf]
        %v1241 = vunpack.c.l.b16 %v1209
        %v1242 = vunpack.c.l.b16 %v1210
        %v1243 = vunpack.c.l.b16 %v1211
        %v1244 = vunpack.c.l.b16 %v1212
        %v1245 = vunpack.c.l.b16 %v1213
        %v1246 = vunpack.c.l.b16 %v1214
        %v1247 = vunpack.c.l.b16 %v1215
        %v1248 = vunpack.c.l.b16 %v1216
        %v1249 = vunpack.c.l.b16 %v1217
        %v1250 = vunpack.c.l.b16 %v1218
        %v1251 = vunpack.c.l.b16 %v1219
        %v1252 = vunpack.c.l.b16 %v1220
        %v1253 = vunpack.c.l.b16 %v1221
        %v1254 = vunpack.c.l.b16 %v1222
        %v1255 = vunpack.c.l.b16 %v1223
        %v1256 = vunpack.c.l.b16 %v1224
        %v1257 = vpack.c.b16 %v1242, %v1241
        %v1258 = vpack.c.b16 %v1244, %v1243
        %v1259 = vpack.c.b16 %v1246, %v1245
        %v1260 = vpack.c.b16 %v1248, %v1247
        %v1261 = vpack.c.b16 %v1250, %v1249
        %v1262 = vpack.c.b16 %v1252, %v1251
        %v1263 = vpack.c.b16 %v1254, %v1253
        %v1264 = vpack.c.b16 %v1256, %v1255
        %1273 = vmatprep.subr.bf16.mxu0 0
        %1274 = vmatpush1.bf16.msra.mxu0 %v1257
        %1275 = vmatprep.subr.bf16.mxu0 0
        %1276 = vmatpush1.bf16.msra.mxu0 %v1258
        %1277 = vmatprep.subr.bf16.mxu0 0
        %1278 = vmatpush1.bf16.msra.mxu0 %v1259
        %1279 = vmatprep.subr.bf16.mxu0 0
        %1280 = vmatpush1.bf16.msra.mxu0 %v1260
        %1281 = vmatprep.subr.bf16.mxu0 0
        %1282 = vmatpush1.bf16.msra.mxu0 %v1261
        %1283 = vmatprep.subr.bf16.mxu0 0
        %1284 = vmatpush1.bf16.msra.mxu0 %v1262
        %1285 = vmatprep.subr.bf16.mxu0 0
        %1286 = vmatpush1.bf16.msra.mxu0 %v1263
        %1287 = vmatprep.subr.bf16.mxu0 0
        %1288 = vmatpush1.bf16.msra.mxu0 %v1264
        %1289 = vmatprep.subr.bf16.mxu0 0
        %1290 = vmatpush1.bf16.msra.mxu0 0
        %1291 = vmatprep.subr.bf16.mxu0 0
        %1292 = vmatpush1.bf16.msra.mxu0 0
        %1293 = vmatprep.subr.bf16.mxu0 0
        %1294 = vmatpush1.bf16.msra.mxu0 0
        %1295 = vmatprep.subr.bf16.mxu0 0
        %1296 = vmatpush1.bf16.msra.mxu0 0
        %1297 = vmatprep.subr.bf16.mxu0 0
        %1298 = vmatpush1.bf16.msra.mxu0 0
        %1299 = vmatprep.subr.bf16.mxu0 0
        %1300 = vmatpush1.bf16.msra.mxu0 0
        %1301 = vmatprep.subr.bf16.mxu0 0
        %1302 = vmatpush1.bf16.msra.mxu0 0
        %1303 = vmatprep.subr.bf16.mxu0 0
        %1304 = vmatpush1.bf16.msra.mxu0 0
        %1305 = vmatprep.mubr.bf16.mxu0 0
        %1306 = vmatmul.mubr.bf16.gmra.mrb[0].mxu0 %v1201
        %v1307 = vpop.f32.mrb[0].mxu0
        %v1308 = vadd.f32 0.0, %v1307
        %v1309 = vpop.f32.mrb[0].mxu0
        %v1310 = vpop.f32.mrb[0].mxu0
        %v1311 = vadd.f32 0.0, %v1310
        %v1312 = vpop.f32.mrb[0].mxu0
        %1313 = vmatprep.mubr.bf16.mxu0 0
        %1314 = vmatmul.mubr.bf16.gmra.mrb[0].mxu0 %v1202
        %v1315 = vpop.f32.mrb[0].mxu0
        %v1316 = vadd.f32 0.0, %v1315
        %v1317 = vpop.f32.mrb[0].mxu0
        %v1318 = vpop.f32.mrb[0].mxu0
        %v1319 = vadd.f32 0.0, %v1318
        %v1320 = vpop.f32.mrb[0].mxu0
        %1321 = vmatprep.mubr.bf16.mxu0 0
        %1322 = vmatmul.mubr.bf16.gmra.mrb[0].mxu0 %v1203
        %v1323 = vpop.f32.mrb[0].mxu0
        %v1324 = vadd.f32 0.0, %v1323
        %v1325 = vpop.f32.mrb[0].mxu0
        %v1326 = vpop.f32.mrb[0].mxu0
        %v1327 = vadd.f32 0.0, %v1326
        %v1328 = vpop.f32.mrb[0].mxu0
        %1329 = vmatprep.mubr.bf16.mxu0 0
        %1330 = vmatmul.mubr.bf16.gmra.mrb[0].mxu0 %v1204
        %v1331 = vpop.f32.mrb[0].mxu0
        %v1332 = vadd.f32 0.0, %v1331
        %v1333 = vpop.f32.mrb[0].mxu0
        %v1334 = vpop.f32.mrb[0].mxu0
        %v1335 = vadd.f32 0.0, %v1334
        %v1336 = vpop.f32.mrb[0].mxu0
        %1337 = vmatprep.mubr.bf16.mxu0 0
        %1338 = vmatmul.mubr.bf16.gmra.mrb[0].mxu0 %v1205
        %v1339 = vpop.f32.mrb[0].mxu0
        %v1340 = vadd.f32 0.0, %v1339
        %v1341 = vpop.f32.mrb[0].mxu0
        %v1342 = vpop.f32.mrb[0].mxu0
        %v1343 = vadd.f32 0.0, %v1342
        %v1344 = vpop.f32.mrb[0].mxu0
        %1345 = vmatprep.mubr.bf16.mxu0 0
        %1346 = vmatmul.mubr.bf16.gmra.mrb[0].mxu0 %v1206
        %v1347 = vpop.f32.mrb[0].mxu0
        %v1348 = vadd.f32 0.0, %v1347
        %v1349 = vpop.f32.mrb[0].mxu0
        %v1350 = vpop.f32.mrb[0].mxu0
        %v1351 = vadd.f32 0.0, %v1350
        %v1352 = vpop.f32.mrb[0].mxu0
        %1353 = vmatprep.mubr.bf16.mxu0 0
        %1354 = vmatmul.mubr.bf16.gmra.mrb[0].mxu0 %v1207
        %v1355 = vpop.f32.mrb[0].mxu0
        %v1356 = vadd.f32 0.0, %v1355
        %v1357 = vpop.f32.mrb[0].mxu0
        %v1358 = vpop.f32.mrb[0].mxu0
        %v1359 = vadd.f32 0.0, %v1358
        %v1360 = vpop.f32.mrb[0].mxu0
        %1361 = vmatprep.mubr.bf16.mxu0 0
        %1362 = vmatmul.mubr.bf16.gmra.mrb[0].mxu0 %v1208
        %v1363 = vpop.f32.mrb[0].mxu0
        %v1364 = vadd.f32 0.0, %v1363
        %v1365 = vpop.f32.mrb[0].mxu0
        %v1366 = vpop.f32.mrb[0].mxu0
        %v1367 = vadd.f32 0.0, %v1366
        %v1368 = vpop.f32.mrb[0].mxu0
        %1369 = vdwg.mxu0
        %v1370 = vld [vmem:[#allocation5] sm:$0xff]
        %v1371 = vld [vmem:[#allocation5 + $0x8] sm:$0xff]
        %v1372 = vld [vmem:[#allocation5 + $0x10] sm:$0xff]
        %v1373 = vld [vmem:[#allocation5 + $0x18] sm:$0xff]
        %v1374 = vld [vmem:[#allocation5 + $0x20] sm:$0xff]
        %v1375 = vld [vmem:[#allocation5 + $0x28] sm:$0xff]
        %v1376 = vld [vmem:[#allocation5 + $0x30] sm:$0xff]
        %v1377 = vld [vmem:[#allocation5 + $0x38] sm:$0xff]
        %v1378 = vld [vmem:[#allocation5 + $0x40] sm:$0xff]
        %v1379 = vld [vmem:[#allocation5 + $0x48] sm:$0xff]
        %v1380 = vld [vmem:[#allocation5 + $0x50] sm:$0xff]
        %v1381 = vld [vmem:[#allocation5 + $0x58] sm:$0xff]
        %v1382 = vld [vmem:[#allocation5 + $0x60] sm:$0xff]
        %v1383 = vld [vmem:[#allocation5 + $0x68] sm:$0xff]
        %v1384 = vld [vmem:[#allocation5 + $0x70] sm:$0xff]
        %v1385 = vld [vmem:[#allocation5 + $0x78] sm:$0xff]
        %1387 = vset.pattern.permute.xlu0 0
        %1388 = vperm.xlu0 %1387, %v945
        %v1389 = vpop.permute.xlu0 %1388
        %1392 = vset.pattern.permute.xlu0 0
        %1393 = vperm.xlu0 %1392, %v947
        %v1394 = vpop.permute.xlu0 %1393
        %1397 = vset.pattern.permute.xlu0 0
        %1398 = vperm.xlu0 %1397, %v949
        %v1399 = vpop.permute.xlu0 %1398
        %1402 = vset.pattern.permute.xlu0 0
        %1403 = vperm.xlu0 %1402, %v951
        %v1404 = vpop.permute.xlu0 %1403
        %1407 = vset.pattern.permute.xlu0 0
        %1408 = vperm.xlu0 %1407, %v953
        %v1409 = vpop.permute.xlu0 %1408
        %1412 = vset.pattern.permute.xlu0 0
        %1413 = vperm.xlu0 %1412, %v955
        %v1414 = vpop.permute.xlu0 %1413
        %1417 = vset.pattern.permute.xlu0 0
        %1418 = vperm.xlu0 %1417, %v957
        %v1419 = vpop.permute.xlu0 %1418
        %1422 = vset.pattern.permute.xlu0 0
        %1423 = vperm.xlu0 %1422, %v959
        %v1424 = vpop.permute.xlu0 %1423
        %1427 = vset.pattern.permute.xlu0 0
        %1428 = vperm.xlu0 %1427, %v961
        %v1429 = vpop.permute.xlu0 %1428
        %1432 = vset.pattern.permute.xlu0 0
        %1433 = vperm.xlu0 %1432, %v963
        %v1434 = vpop.permute.xlu0 %1433
        %1437 = vset.pattern.permute.xlu0 0
        %1438 = vperm.xlu0 %1437, %v965
        %v1439 = vpop.permute.xlu0 %1438
        %1442 = vset.pattern.permute.xlu0 0
        %1443 = vperm.xlu0 %1442, %v967
        %v1444 = vpop.permute.xlu0 %1443
        %1447 = vset.pattern.permute.xlu0 0
        %1448 = vperm.xlu0 %1447, %v969
        %v1449 = vpop.permute.xlu0 %1448
        %1452 = vset.pattern.permute.xlu0 0
        %1453 = vperm.xlu0 %1452, %v971
        %v1454 = vpop.permute.xlu0 %1453
        %1457 = vset.pattern.permute.xlu0 0
        %1458 = vperm.xlu0 %1457, %v973
        %v1459 = vpop.permute.xlu0 %1458
        %1462 = vset.pattern.permute.xlu0 0
        %1463 = vperm.xlu0 %1462, %v975
        %v1464 = vpop.permute.xlu0 %1463
        %v1466 = vmul.f32 %v1389, %v1370
        %v1467 = vmul.f32 %v1394, %v1371
        %v1468 = vmul.f32 %v1399, %v1372
        %v1469 = vmul.f32 %v1404, %v1373
        %v1470 = vmul.f32 %v1409, %v1374
        %v1471 = vmul.f32 %v1414, %v1375
        %v1472 = vmul.f32 %v1419, %v1376
        %v1473 = vmul.f32 %v1424, %v1377
        %v1474 = vmul.f32 %v1429, %v1378
        %v1475 = vmul.f32 %v1434, %v1379
        %v1476 = vmul.f32 %v1439, %v1380
        %v1477 = vmul.f32 %v1444, %v1381
        %v1478 = vmul.f32 %v1449, %v1382
        %v1479 = vmul.f32 %v1454, %v1383
        %v1480 = vmul.f32 %v1459, %v1384
        %v1481 = vmul.f32 %v1464, %v1385
        %v1482 = vadd.f32 %v1466, %v1308
        %v1483 = vadd.f32 %v1467, %v1311
        %v1484 = vadd.f32 %v1468, %v1316
        %v1485 = vadd.f32 %v1469, %v1319
        %v1486 = vadd.f32 %v1470, %v1324
        %v1487 = vadd.f32 %v1471, %v1327
        %v1488 = vadd.f32 %v1472, %v1332
        %v1489 = vadd.f32 %v1473, %v1335
        %v1490 = vadd.f32 %v1474, %v1340
        %v1491 = vadd.f32 %v1475, %v1343
        %v1492 = vadd.f32 %v1476, %v1348
        %v1493 = vadd.f32 %v1477, %v1351
        %v1494 = vadd.f32 %v1478, %v1356
        %v1495 = vadd.f32 %v1479, %v1359
        %v1496 = vadd.f32 %v1480, %v1364
        %v1497 = vadd.f32 %v1481, %v1367
        %1498 = vst [vmem:[#allocation5] sm:$0xff] %v1482
        %1499 = vst [vmem:[#allocation5 + $0x8] sm:$0xff] %v1483
        %1500 = vst [vmem:[#allocation5 + $0x10] sm:$0xff] %v1484
        %1501 = vst [vmem:[#allocation5 + $0x18] sm:$0xff] %v1485
        %1502 = vst [vmem:[#allocation5 + $0x20] sm:$0xff] %v1486
        %1503 = vst [vmem:[#allocation5 + $0x28] sm:$0xff] %v1487
        %1504 = vst [vmem:[#allocation5 + $0x30] sm:$0xff] %v1488
        %1505 = vst [vmem:[#allocation5 + $0x38] sm:$0xff] %v1489
        %1506 = vst [vmem:[#allocation5 + $0x40] sm:$0xff] %v1490
        %1507 = vst [vmem:[#allocation5 + $0x48] sm:$0xff] %v1491
        %1508 = vst [vmem:[#allocation5 + $0x50] sm:$0xff] %v1492
        %1509 = vst [vmem:[#allocation5 + $0x58] sm:$0xff] %v1493
        %1510 = vst [vmem:[#allocation5 + $0x60] sm:$0xff] %v1494
        %1511 = vst [vmem:[#allocation5 + $0x68] sm:$0xff] %v1495
        %1512 = vst [vmem:[#allocation5 + $0x70] sm:$0xff] %v1496
        %1513 = vst [vmem:[#allocation5 + $0x78] sm:$0xff] %v1497
        %1514 = vst.msk [vmem:[#allocation3] sm:$0xff] %vm1184, %v912
        %1515 = vst.msk [vmem:[#allocation3 + $0x8] sm:$0xff] %vm1184, %v913
        %1516 = vst.msk [vmem:[#allocation3 + $0x10] sm:$0xff] %vm1184, %v914
        %1517 = vst.msk [vmem:[#allocation3 + $0x18] sm:$0xff] %vm1184, %v915
        %1518 = vst.msk [vmem:[#allocation3 + $0x20] sm:$0xff] %vm1184, %v916
        %1519 = vst.msk [vmem:[#allocation3 + $0x28] sm:$0xff] %vm1184, %v917
        %1520 = vst.msk [vmem:[#allocation3 + $0x30] sm:$0xff] %vm1184, %v918
        %1521 = vst.msk [vmem:[#allocation3 + $0x38] sm:$0xff] %vm1184, %v919
        %1522 = vst.msk [vmem:[#allocation3 + $0x40] sm:$0xff] %vm1184, %v920
        %1523 = vst.msk [vmem:[#allocation3 + $0x48] sm:$0xff] %vm1184, %v921
        %1524 = vst.msk [vmem:[#allocation3 + $0x50] sm:$0xff] %vm1184, %v922
        %1525 = vst.msk [vmem:[#allocation3 + $0x58] sm:$0xff] %vm1184, %v923
        %1526 = vst.msk [vmem:[#allocation3 + $0x60] sm:$0xff] %vm1184, %v924
        %1527 = vst.msk [vmem:[#allocation3 + $0x68] sm:$0xff] %vm1184, %v925
        %1528 = vst.msk [vmem:[#allocation3 + $0x70] sm:$0xff] %vm1184, %v926
        %1529 = vst.msk [vmem:[#allocation3 + $0x78] sm:$0xff] %vm1184, %v927
        // Predicated region
        $region160: #{self_attention_forward.4} parent=142 // pred_check
          %p1530 = pneg %p578
        $region161: #{self_attention_forward.4} parent=142 // pred_check_branch
          %1532 = sbr.rel (%p1530) target = $region163
        $region162: #{self_attention_forward.4} parent=142 // pred_region
          %v1533 = vld [vmem:[#allocation4] sm:$0xff]
          %v1534 = vld [vmem:[#allocation4 + $0x8] sm:$0xff]
          %v1535 = vld [vmem:[#allocation4 + $0x10] sm:$0xff]
          %v1536 = vld [vmem:[#allocation4 + $0x18] sm:$0xff]
          %v1537 = vld [vmem:[#allocation4 + $0x20] sm:$0xff]
          %v1538 = vld [vmem:[#allocation4 + $0x28] sm:$0xff]
          %v1539 = vld [vmem:[#allocation4 + $0x30] sm:$0xff]
          %v1540 = vld [vmem:[#allocation4 + $0x38] sm:$0xff]
          %v1541 = vld [vmem:[#allocation4 + $0x40] sm:$0xff]
          %v1542 = vld [vmem:[#allocation4 + $0x48] sm:$0xff]
          %v1543 = vld [vmem:[#allocation4 + $0x50] sm:$0xff]
          %v1544 = vld [vmem:[#allocation4 + $0x58] sm:$0xff]
          %v1545 = vld [vmem:[#allocation4 + $0x60] sm:$0xff]
          %v1546 = vld [vmem:[#allocation4 + $0x68] sm:$0xff]
          %v1547 = vld [vmem:[#allocation4 + $0x70] sm:$0xff]
          %v1548 = vld [vmem:[#allocation4 + $0x78] sm:$0xff]
          %v1549 = vrcp.pop %v1533
          %v1550 = vrcp.pop %v1534
          %v1551 = vrcp.pop %v1535
          %v1552 = vrcp.pop %v1536
          %v1553 = vrcp.pop %v1537
          %v1554 = vrcp.pop %v1538
          %v1555 = vrcp.pop %v1539
          %v1556 = vrcp.pop %v1540
          %v1557 = vrcp.pop %v1541
          %v1558 = vrcp.pop %v1542
          %v1559 = vrcp.pop %v1543
          %v1560 = vrcp.pop %v1544
          %v1561 = vrcp.pop %v1545
          %v1562 = vrcp.pop %v1546
          %v1563 = vrcp.pop %v1547
          %v1564 = vrcp.pop %v1548
          %v1565 = vld [vmem:[#allocation5] sm:$0xff]
          %v1566 = vld [vmem:[#allocation5 + $0x8] sm:$0xff]
          %v1567 = vld [vmem:[#allocation5 + $0x10] sm:$0xff]
          %v1568 = vld [vmem:[#allocation5 + $0x18] sm:$0xff]
          %v1569 = vld [vmem:[#allocation5 + $0x20] sm:$0xff]
          %v1570 = vld [vmem:[#allocation5 + $0x28] sm:$0xff]
          %v1571 = vld [vmem:[#allocation5 + $0x30] sm:$0xff]
          %v1572 = vld [vmem:[#allocation5 + $0x38] sm:$0xff]
          %v1573 = vld [vmem:[#allocation5 + $0x40] sm:$0xff]
          %v1574 = vld [vmem:[#allocation5 + $0x48] sm:$0xff]
          %v1575 = vld [vmem:[#allocation5 + $0x50] sm:$0xff]
          %v1576 = vld [vmem:[#allocation5 + $0x58] sm:$0xff]
          %v1577 = vld [vmem:[#allocation5 + $0x60] sm:$0xff]
          %v1578 = vld [vmem:[#allocation5 + $0x68] sm:$0xff]
          %v1579 = vld [vmem:[#allocation5 + $0x70] sm:$0xff]
          %v1580 = vld [vmem:[#allocation5 + $0x78] sm:$0xff]
          %1582 = vset.pattern.permute.xlu0 0
          %1583 = vperm.xlu0 %1582, %v1549
          %v1584 = vpop.permute.xlu0 %1583
          %1587 = vset.pattern.permute.xlu0 0
          %1588 = vperm.xlu0 %1587, %v1550
          %v1589 = vpop.permute.xlu0 %1588
          %1592 = vset.pattern.permute.xlu0 0
          %1593 = vperm.xlu0 %1592, %v1551
          %v1594 = vpop.permute.xlu0 %1593
          %1597 = vset.pattern.permute.xlu0 0
          %1598 = vperm.xlu0 %1597, %v1552
          %v1599 = vpop.permute.xlu0 %1598
          %1602 = vset.pattern.permute.xlu0 0
          %1603 = vperm.xlu0 %1602, %v1553
          %v1604 = vpop.permute.xlu0 %1603
          %1607 = vset.pattern.permute.xlu0 0
          %1608 = vperm.xlu0 %1607, %v1554
          %v1609 = vpop.permute.xlu0 %1608
          %1612 = vset.pattern.permute.xlu0 0
          %1613 = vperm.xlu0 %1612, %v1555
          %v1614 = vpop.permute.xlu0 %1613
          %1617 = vset.pattern.permute.xlu0 0
          %1618 = vperm.xlu0 %1617, %v1556
          %v1619 = vpop.permute.xlu0 %1618
          %1622 = vset.pattern.permute.xlu0 0
          %1623 = vperm.xlu0 %1622, %v1557
          %v1624 = vpop.permute.xlu0 %1623
          %1627 = vset.pattern.permute.xlu0 0
          %1628 = vperm.xlu0 %1627, %v1558
          %v1629 = vpop.permute.xlu0 %1628
          %1632 = vset.pattern.permute.xlu0 0
          %1633 = vperm.xlu0 %1632, %v1559
          %v1634 = vpop.permute.xlu0 %1633
          %1637 = vset.pattern.permute.xlu0 0
          %1638 = vperm.xlu0 %1637, %v1560
          %v1639 = vpop.permute.xlu0 %1638
          %1642 = vset.pattern.permute.xlu0 0
          %1643 = vperm.xlu0 %1642, %v1561
          %v1644 = vpop.permute.xlu0 %1643
          %1647 = vset.pattern.permute.xlu0 0
          %1648 = vperm.xlu0 %1647, %v1562
          %v1649 = vpop.permute.xlu0 %1648
          %1652 = vset.pattern.permute.xlu0 0
          %1653 = vperm.xlu0 %1652, %v1563
          %v1654 = vpop.permute.xlu0 %1653
          %1657 = vset.pattern.permute.xlu0 0
          %1658 = vperm.xlu0 %1657, %v1564
          %v1659 = vpop.permute.xlu0 %1658
          %v1661 = vmul.f32 %v1565, %v1584
          %v1662 = vmul.f32 %v1566, %v1589
          %v1663 = vmul.f32 %v1567, %v1594
          %v1664 = vmul.f32 %v1568, %v1599
          %v1665 = vmul.f32 %v1569, %v1604
          %v1666 = vmul.f32 %v1570, %v1609
          %v1667 = vmul.f32 %v1571, %v1614
          %v1668 = vmul.f32 %v1572, %v1619
          %v1669 = vmul.f32 %v1573, %v1624
          %v1670 = vmul.f32 %v1574, %v1629
          %v1671 = vmul.f32 %v1575, %v1634
          %v1672 = vmul.f32 %v1576, %v1639
          %v1673 = vmul.f32 %v1577, %v1644
          %v1674 = vmul.f32 %v1578, %v1649
          %v1675 = vmul.f32 %v1579, %v1654
          %v1676 = vmul.f32 %v1580, %v1659
          %v1677 = vpack.c.bf16 %v1662, %v1661
          %v1678 = vpack.c.bf16 %v1664, %v1663
          %v1679 = vpack.c.bf16 %v1666, %v1665
          %v1680 = vpack.c.bf16 %v1668, %v1667
          %v1681 = vpack.c.bf16 %v1670, %v1669
          %v1682 = vpack.c.bf16 %v1672, %v1671
          %v1683 = vpack.c.bf16 %v1674, %v1673
          %v1684 = vpack.c.bf16 %v1676, %v1675
          %v1693 = vunpack.c.l.b16 %v1677
          %v1694 = vunpack.c.h.b16 %v1677
          %v1695 = vunpack.c.l.b16 %v1678
          %v1696 = vunpack.c.h.b16 %v1678
          %v1697 = vunpack.c.l.b16 %v1679
          %v1698 = vunpack.c.h.b16 %v1679
          %v1699 = vunpack.c.l.b16 %v1680
          %v1700 = vunpack.c.h.b16 %v1680
          %v1701 = vunpack.c.l.b16 %v1681
          %v1702 = vunpack.c.h.b16 %v1681
          %v1703 = vunpack.c.l.b16 %v1682
          %v1704 = vunpack.c.h.b16 %v1682
          %v1705 = vunpack.c.l.b16 %v1683
          %v1706 = vunpack.c.h.b16 %v1683
          %v1707 = vunpack.c.l.b16 %v1684
          %v1708 = vunpack.c.h.b16 %v1684
          %v1709 = vpack.c.b16 %v1693, %v1693
          %v1710 = vpack.c.b16 %v1694, %v1694
          %v1711 = vpack.c.b16 %v1695, %v1695
          %v1712 = vpack.c.b16 %v1696, %v1696
          %v1713 = vpack.c.b16 %v1697, %v1697
          %v1714 = vpack.c.b16 %v1698, %v1698
          %v1715 = vpack.c.b16 %v1699, %v1699
          %v1716 = vpack.c.b16 %v1700, %v1700
          %v1717 = vpack.c.b16 %v1701, %v1701
          %v1718 = vpack.c.b16 %v1702, %v1702
          %v1719 = vpack.c.b16 %v1703, %v1703
          %v1720 = vpack.c.b16 %v1704, %v1704
          %v1721 = vpack.c.b16 %v1705, %v1705
          %v1722 = vpack.c.b16 %v1706, %v1706
          %v1723 = vpack.c.b16 %v1707, %v1707
          %v1724 = vpack.c.b16 %v1708, %v1708
          %1741 = vst [vmem:[%s570] sm:$0xf] %v1709
          %1742 = vst [vmem:[%s570 + $0x4] sm:$0xf] %v1710
          %1743 = vst [vmem:[%s570 + $0x8] sm:$0xf] %v1711
          %1744 = vst [vmem:[%s570 + $0xc] sm:$0xf] %v1712
          %1745 = vst [vmem:[%s570 + $0x10] sm:$0xf] %v1713
          %1746 = vst [vmem:[%s570 + $0x14] sm:$0xf] %v1714
          %1747 = vst [vmem:[%s570 + $0x18] sm:$0xf] %v1715
          %1748 = vst [vmem:[%s570 + $0x1c] sm:$0xf] %v1716
          %1749 = vst [vmem:[%s570 + $0x20] sm:$0xf] %v1717
          %1750 = vst [vmem:[%s570 + $0x24] sm:$0xf] %v1718
          %1751 = vst [vmem:[%s570 + $0x28] sm:$0xf] %v1719
          %1752 = vst [vmem:[%s570 + $0x2c] sm:$0xf] %v1720
          %1753 = vst [vmem:[%s570 + $0x30] sm:$0xf] %v1721
          %1754 = vst [vmem:[%s570 + $0x34] sm:$0xf] %v1722
          %1755 = vst [vmem:[%s570 + $0x38] sm:$0xf] %v1723
          %1756 = vst [vmem:[%s570 + $0x3c] sm:$0xf] %v1724
        $region163: #{self_attention_forward.4} parent=142 // pred_fallthru
          _
        %s1757 = sand.u32 %s146, 1
        %s1758 = sand.u32 %s146, 1
        %s1759 = smul.addr %s1758, 64
        %s1760 = scalar_lea.vmem [#allocation9], %s1759
        // Predicated region
        $region164: #{self_attention_forward.4} parent=142 // pred_check
          %p1761 = pneg %p156
        $region165: #{self_attention_forward.4} parent=142 // pred_check_branch
          %1763 = sbr.rel (%p1761) target = $region167
        $region166: #{self_attention_forward.4} parent=142 // pred_region
          %s1764 = smul.u32 16, %s22
          %s1765 = smul.addr %s1764, 2
          %s1766 = sadd.s32 %s21, %s1765
          %s1767 = smul.addr %s20, 32
          %s1768 = sadd.s32 %s1766, %s1767
          %s1769 = smul.addr %s1768, 4
          %s1770 = scalar_lea.vmem %s3, %s1769
          // Predicated region
          $region168: #{self_attention_forward.4} parent=166 // pred_check
            _
          $region169: #{self_attention_forward.4} parent=166 // pred_check_branch
            %1772 = sbr.rel (0) target = $region171
          $region170: #{self_attention_forward.4} parent=166 // pred_region
            // Predicated region
            $region172: #{self_attention_forward.4} parent=170 // pred_check
              _
            $region173: #{self_attention_forward.4} parent=170 // pred_check_branch
              %1774 = sbr.rel target = $region175
            $region174: #{self_attention_forward.4} parent=170 // pred_region
              // Predicated region
              $region187: #{self_attention_forward.4} parent=174 // pred_check
                _
              $region188: #{self_attention_forward.4} parent=174 // pred_check_branch
                %1819 = sbr.rel (0) target = $region190
              $region189: #{self_attention_forward.4} parent=174 // pred_region
                loop: start=0, step=1, limit=1
                $region191: #{self_attention_forward.4} parent=189 // loop_pre_header
                  _
                $region192: #{self_attention_forward.4} parent=189 // loop_header
                  %s1821 = sphi 0, %s1825
                  %p1822 = scmp.ge.s32.totalorder %s1821, 1
                  %s1826 = sphi %s1760, %s1760
                  %s1827 = sphi %s1770, %s1770
                $region193: #{self_attention_forward.4} parent=189 // loop_header_branch
                  %1824 = sbr.rel (%p1822) target = $region197
                $region194: #{self_attention_forward.4} parent=189 // loop_body
                  _
                $region195: #{self_attention_forward.4} parent=189 // loop_footer
                  %s1825 = sadd.s32 1, %s1821
                $region196: #{self_attention_forward.4} parent=189 // loop_footer_branch
                  %1820 = sbr.rel target = $region192
                $region197: #{self_attention_forward.4} parent=189 // loop_exit
                  _
                loop: start=0, step=1, limit=1
                $region198: #{self_attention_forward.4} parent=189 // loop_pre_header
                  _
                $region199: #{self_attention_forward.4} parent=189 // loop_header
                  %s1830 = sphi 0, %s1834
                  %p1831 = scmp.ge.s32.totalorder %s1830, 1
                  %s1835 = sphi %s1760, %s1760
                  %s1836 = sphi %s1770, %s1770
                $region200: #{self_attention_forward.4} parent=189 // loop_header_branch
                  %1833 = sbr.rel (%p1831) target = $region204
                $region201: #{self_attention_forward.4} parent=189 // loop_body
                  %v1837 = vld [vmem:[%s1835] sm:$0xf]
                  %1838 = vst [vmem:[%s1836] sm:$0xf] %v1837
                  %v1839 = vld [vmem:[%s1835 + $0x4] sm:$0xf]
                  %1840 = vst [vmem:[%s1836 + $0x8] sm:$0xf] %v1839
                  %v1841 = vld [vmem:[%s1835 + $0x8] sm:$0xf]
                  %1842 = vst [vmem:[%s1836 + $0x10] sm:$0xf] %v1841
                  %v1843 = vld [vmem:[%s1835 + $0xc] sm:$0xf]
                  %1844 = vst [vmem:[%s1836 + $0x18] sm:$0xf] %v1843
                  %v1845 = vld [vmem:[%s1835 + $0x10] sm:$0xf]
                  %1846 = vst [vmem:[%s1836 + $0x20] sm:$0xf] %v1845
                  %v1847 = vld [vmem:[%s1835 + $0x14] sm:$0xf]
                  %1848 = vst [vmem:[%s1836 + $0x28] sm:$0xf] %v1847
                  %v1849 = vld [vmem:[%s1835 + $0x18] sm:$0xf]
                  %1850 = vst [vmem:[%s1836 + $0x30] sm:$0xf] %v1849
                  %v1851 = vld [vmem:[%s1835 + $0x1c] sm:$0xf]
                  %1852 = vst [vmem:[%s1836 + $0x38] sm:$0xf] %v1851
                  %v1853 = vld [vmem:[%s1835 + $0x20] sm:$0xf]
                  %1854 = vst [vmem:[%s1836 + $0x40] sm:$0xf] %v1853
                  %v1855 = vld [vmem:[%s1835 + $0x24] sm:$0xf]
                  %1856 = vst [vmem:[%s1836 + $0x48] sm:$0xf] %v1855
                  %v1857 = vld [vmem:[%s1835 + $0x28] sm:$0xf]
                  %1858 = vst [vmem:[%s1836 + $0x50] sm:$0xf] %v1857
                  %v1859 = vld [vmem:[%s1835 + $0x2c] sm:$0xf]
                  %1860 = vst [vmem:[%s1836 + $0x58] sm:$0xf] %v1859
                  %v1861 = vld [vmem:[%s1835 + $0x30] sm:$0xf]
                  %1862 = vst [vmem:[%s1836 + $0x60] sm:$0xf] %v1861
                  %v1863 = vld [vmem:[%s1835 + $0x34] sm:$0xf]
                  %1864 = vst [vmem:[%s1836 + $0x68] sm:$0xf] %v1863
                  %v1865 = vld [vmem:[%s1835 + $0x38] sm:$0xf]
                  %1866 = vst [vmem:[%s1836 + $0x70] sm:$0xf] %v1865
                  %v1867 = vld [vmem:[%s1835 + $0x3c] sm:$0xf]
                  %1868 = vst [vmem:[%s1836 + $0x78] sm:$0xf] %v1867
                $region202: #{self_attention_forward.4} parent=189 // loop_footer
                  %s1834 = sadd.s32 1, %s1830
                $region203: #{self_attention_forward.4} parent=189 // loop_footer_branch
                  %1829 = sbr.rel target = $region199
                $region204: #{self_attention_forward.4} parent=189 // loop_exit
                  _
              $region190: #{self_attention_forward.4} parent=174 // pred_fallthru
                _
            $region175: #{self_attention_forward.4} parent=170 // pred_fallthru
              _
            // Predicated region
            $region176: #{self_attention_forward.4} parent=170 // pred_check
              _
            $region177: #{self_attention_forward.4} parent=170 // pred_check_branch
              %1776 = sbr.rel (0) target = $region179
            $region178: #{self_attention_forward.4} parent=170 // pred_region
              loop: start=0, step=1, limit=1
              $region180: #{self_attention_forward.4} parent=178 // loop_pre_header
                _
              $region181: #{self_attention_forward.4} parent=178 // loop_header
                %s1779 = sphi 0, %s1783
                %p1780 = scmp.ge.s32.totalorder %s1779, 1
                %s1784 = sphi %s1760, %s1760
                %s1785 = sphi %s1770, %s1770
              $region182: #{self_attention_forward.4} parent=178 // loop_header_branch
                %1782 = sbr.rel (%p1780) target = $region186
              $region183: #{self_attention_forward.4} parent=178 // loop_body
                %v1786 = vld [vmem:[%s1784] sm:$0xf]
                %1787 = vst [vmem:[%s1785] sm:$0xf] %v1786
                %v1788 = vld [vmem:[%s1784 + $0x4] sm:$0xf]
                %1789 = vst [vmem:[%s1785 + $0x8] sm:$0xf] %v1788
                %v1790 = vld [vmem:[%s1784 + $0x8] sm:$0xf]
                %1791 = vst [vmem:[%s1785 + $0x10] sm:$0xf] %v1790
                %v1792 = vld [vmem:[%s1784 + $0xc] sm:$0xf]
                %1793 = vst [vmem:[%s1785 + $0x18] sm:$0xf] %v1792
                %v1794 = vld [vmem:[%s1784 + $0x10] sm:$0xf]
                %1795 = vst [vmem:[%s1785 + $0x20] sm:$0xf] %v1794
                %v1796 = vld [vmem:[%s1784 + $0x14] sm:$0xf]
                %1797 = vst [vmem:[%s1785 + $0x28] sm:$0xf] %v1796
                %v1798 = vld [vmem:[%s1784 + $0x18] sm:$0xf]
                %1799 = vst [vmem:[%s1785 + $0x30] sm:$0xf] %v1798
                %v1800 = vld [vmem:[%s1784 + $0x1c] sm:$0xf]
                %1801 = vst [vmem:[%s1785 + $0x38] sm:$0xf] %v1800
                %v1802 = vld [vmem:[%s1784 + $0x20] sm:$0xf]
                %1803 = vst [vmem:[%s1785 + $0x40] sm:$0xf] %v1802
                %v1804 = vld [vmem:[%s1784 + $0x24] sm:$0xf]
                %1805 = vst [vmem:[%s1785 + $0x48] sm:$0xf] %v1804
                %v1806 = vld [vmem:[%s1784 + $0x28] sm:$0xf]
                %1807 = vst [vmem:[%s1785 + $0x50] sm:$0xf] %v1806
                %v1808 = vld [vmem:[%s1784 + $0x2c] sm:$0xf]
                %1809 = vst [vmem:[%s1785 + $0x58] sm:$0xf] %v1808
                %v1810 = vld [vmem:[%s1784 + $0x30] sm:$0xf]
                %1811 = vst [vmem:[%s1785 + $0x60] sm:$0xf] %v1810
                %v1812 = vld [vmem:[%s1784 + $0x34] sm:$0xf]
                %1813 = vst [vmem:[%s1785 + $0x68] sm:$0xf] %v1812
                %v1814 = vld [vmem:[%s1784 + $0x38] sm:$0xf]
                %1815 = vst [vmem:[%s1785 + $0x70] sm:$0xf] %v1814
                %v1816 = vld [vmem:[%s1784 + $0x3c] sm:$0xf]
                %1817 = vst [vmem:[%s1785 + $0x78] sm:$0xf] %v1816
              $region184: #{self_attention_forward.4} parent=178 // loop_footer
                %s1783 = sadd.s32 1, %s1779
              $region185: #{self_attention_forward.4} parent=178 // loop_footer_branch
                %1778 = sbr.rel target = $region181
              $region186: #{self_attention_forward.4} parent=178 // loop_exit
                _
            $region179: #{self_attention_forward.4} parent=170 // pred_fallthru
              _
          $region171: #{self_attention_forward.4} parent=166 // pred_fallthru
            _
          %1869 = vnop
        $region167: #{self_attention_forward.4} parent=142 // pred_fallthru
          _
      $region143: #{self_attention_forward.4} parent=5 // pred_fallthru
        _
      %p1870 = scmp.le.s32.totalorder 2, %s9
      // Predicated region
      $region205: #{self_attention_forward.4} parent=5 // pred_check
        %p1871 = pneg %p1870
      $region206: #{self_attention_forward.4} parent=5 // pred_check_branch
        %1873 = sbr.rel (%p1871) target = $region208
      $region207: #{self_attention_forward.4} parent=5 // pred_region
        %s1874 = ssub.s32 %s9, 2
        // Predicated region
        $region209: #{self_attention_forward.4} parent=207 // pred_check
          %p1875 = pneg %p162
        $region210: #{self_attention_forward.4} parent=207 // pred_check_branch
          %1877 = sbr.rel (%p1875) target = $region212
        $region211: #{self_attention_forward.4} parent=207 // pred_region
          %s1878 = sand.u32 %s147, 1
          %s1879 = sand.u32 %s147, 1
          %s1880 = smul.addr %s1879, 64
          %s1881 = scalar_lea.vmem [#allocation9], %s1880
        $region212: #{self_attention_forward.4} parent=207 // pred_fallthru
          _
      $region208: #{self_attention_forward.4} parent=5 // pred_fallthru
        _
    $region6: #{self_attention_forward.4} parent=1 // loop_footer
      %s13 = sadd.s32 1, %s9
    $region7: #{self_attention_forward.4} parent=1 // loop_footer_branch
      %8 = sbr.rel target = $region3
    $region8: #{self_attention_forward.4} parent=1 // loop_exit
      _

// kernel: self_attention_forward.5
$region0: #{self_attention_forward.5}
  #allocation0 [shape = 'u32[]', space=smem, size = 0x4, offset = 0x4, fixed_abs, tag = 'smem constant byte address 0x4 - core index']
  #allocation1 [shape = 'u32[144,128]{1,0:T(1,128)}', space=vmem, size = 0x12000, scoped, tag = 'internal scratch']
  #allocation2 [shape = 'f32[256,256]{1,0:T(8,128)}', space=vmem, size = 0x40000, scoped, tag = 'scratch operand']
  %s0 = inlined_call_operand.vmem [shape: bf16[256,256], index: 0, kind: input, shape index: {}]
  %s1 = inlined_call_operand.vmem [shape: bf16[256,256], index: 1, kind: input, shape index: {}]
  %s2 = inlined_call_operand.vmem [shape: f32[1,256], index: 2, kind: input, shape index: {}]
  %s3 = inlined_call_operand.hbm [shape: f32[256,256], index: 3, kind: output, shape index: {}]
  %s4 = sld [smem:[#allocation0]]
  $region30: #{self_attention_forward.5} parent=0
    _
  %s6 = ssub.s32 1, %s4
  %s7 = scalar_select 0, %s6, %s4
  $region1: #{self_attention_forward.5} parent=0
    #allocation3 [shape = 'u8[262144]{0}', space=vmem, size = 0x40000, scoped, tag = 'output window, operand 0, single buffered']
    #allocation4 [shape = 's32[1]{0}', space=sflag, size = 0x4, scoped, tag = 'scoped memory for self_attention_forward.5']
    %8 = vsyncpa [#allocation4], 0
    // Predicated region
    $region2: #{self_attention_forward.5} parent=1 // pred_check
      _
    $region3: #{self_attention_forward.5} parent=1 // pred_check_branch
      %10 = sbr.rel (0) target = $region5
    $region4: #{self_attention_forward.5} parent=1 // pred_region
      _
    $region5: #{self_attention_forward.5} parent=1 // pred_fallthru
      _
    // Predicated region
    $region6: #{self_attention_forward.5} parent=1 // pred_check
      _
    $region7: #{self_attention_forward.5} parent=1 // pred_check_branch
      %12 = sbr.rel (0) target = $region9
    $region8: #{self_attention_forward.5} parent=1 // pred_region
      _
    $region9: #{self_attention_forward.5} parent=1 // pred_fallthru
      _
    // Predicated region
    $region10: #{self_attention_forward.5} parent=1 // pred_check
      _
    $region11: #{self_attention_forward.5} parent=1 // pred_check_branch
      %14 = sbr.rel (0) target = $region13
    $region12: #{self_attention_forward.5} parent=1 // pred_region
      _
    $region13: #{self_attention_forward.5} parent=1 // pred_fallthru
      _
    %p15 = scmp.eq.s32.totalorder 0, 0
    // Predicated region
    $region14: #{self_attention_forward.5} parent=1 // pred_check
      %p16 = pneg %p15
    $region15: #{self_attention_forward.5} parent=1 // pred_check_branch
      %18 = sbr.rel (%p16) target = $region17
    $region16: #{self_attention_forward.5} parent=1 // pred_region
      %19 = vst [vmem:[#allocation2] sm:$0xff] 0.0
      %20 = vst [vmem:[#allocation2 + $0x8] sm:$0xff] 0.0
      %21 = vst [vmem:[#allocation2 + $0x10] sm:$0xff] 0.0
      %22 = vst [vmem:[#allocation2 + $0x18] sm:$0xff] 0.0
      %23 = vst [vmem:[#allocation2 + $0x20] sm:$0xff] 0.0
      %24 = vst [vmem:[#allocation2 + $0x28] sm:$0xff] 0.0
      %25 = vst [vmem:[#allocation2 + $0x30] sm:$0xff] 0.0
      %26 = vst [vmem:[#allocation2 + $0x38] sm:$0xff] 0.0
      %27 = vst [vmem:[#allocation2 + $0x40] sm:$0xff] 0.0
      %28 = vst [vmem:[#allocation2 + $0x48] sm:$0xff] 0.0
      %29 = vst [vmem:[#allocation2 + $0x50] sm:$0xff] 0.0
      %30 = vst [vmem:[#allocation2 + $0x58] sm:$0xff] 0.0
      %31 = vst [vmem:[#allocation2 + $0x60] sm:$0xff] 0.0
      %32 = vst [vmem:[#allocation2 + $0x68] sm:$0xff] 0.0
      %33 = vst [vmem:[#allocation2 + $0x70] sm:$0xff] 0.0
      %34 = vst [vmem:[#allocation2 + $0x78] sm:$0xff] 0.0
      %35 = vst [vmem:[#allocation2 + $0x80] sm:$0xff] 0.0
      %36 = vst [vmem:[#allocation2 + $0x88] sm:$0xff] 0.0
      %37 = vst [vmem:[#allocation2 + $0x90] sm:$0xff] 0.0
      %38 = vst [vmem:[#allocation2 + $0x98] sm:$0xff] 0.0
      %39 = vst [vmem:[#allocation2 + $0xa0] sm:$0xff] 0.0
      %40 = vst [vmem:[#allocation2 + $0xa8] sm:$0xff] 0.0
      %41 = vst [vmem:[#allocation2 + $0xb0] sm:$0xff] 0.0
      %42 = vst [vmem:[#allocation2 + $0xb8] sm:$0xff] 0.0
      %43 = vst [vmem:[#allocation2 + $0xc0] sm:$0xff] 0.0
      %44 = vst [vmem:[#allocation2 + $0xc8] sm:$0xff] 0.0
      %45 = vst [vmem:[#allocation2 + $0xd0] sm:$0xff] 0.0
      %46 = vst [vmem:[#allocation2 + $0xd8] sm:$0xff] 0.0
      %47 = vst [vmem:[#allocation2 + $0xe0] sm:$0xff] 0.0
      %48 = vst [vmem:[#allocation2 + $0xe8] sm:$0xff] 0.0
      %49 = vst [vmem:[#allocation2 + $0xf0] sm:$0xff] 0.0
      %50 = vst [vmem:[#allocation2 + $0xf8] sm:$0xff] 0.0
      %51 = vst [vmem:[#allocation2 + $0x100] sm:$0xff] 0.0
      %52 = vst [vmem:[#allocation2 + $0x108] sm:$0xff] 0.0
      %53 = vst [vmem:[#allocation2 + $0x110] sm:$0xff] 0.0
      %54 = vst [vmem:[#allocation2 + $0x118] sm:$0xff] 0.0
      %55 = vst [vmem:[#allocation2 + $0x120] sm:$0xff] 0.0
      %56 = vst [vmem:[#allocation2 + $0x128] sm:$0xff] 0.0
      %57 = vst [vmem:[#allocation2 + $0x130] sm:$0xff] 0.0
      %58 = vst [vmem:[#allocation2 + $0x138] sm:$0xff] 0.0
      %59 = vst [vmem:[#allocation2 + $0x140] sm:$0xff] 0.0
      %60 = vst [vmem:[#allocation2 + $0x148] sm:$0xff] 0.0
      %61 = vst [vmem:[#allocation2 + $0x150] sm:$0xff] 0.0
      %62 = vst [vmem:[#allocation2 + $0x158] sm:$0xff] 0.0
      %63 = vst [vmem:[#allocation2 + $0x160] sm:$0xff] 0.0
      %64 = vst [vmem:[#allocation2 + $0x168] sm:$0xff] 0.0
      %65 = vst [vmem:[#allocation2 + $0x170] sm:$0xff] 0.0
      %66 = vst [vmem:[#allocation2 + $0x178] sm:$0xff] 0.0
      %67 = vst [vmem:[#allocation2 + $0x180] sm:$0xff] 0.0
      %68 = vst [vmem:[#allocation2 + $0x188] sm:$0xff] 0.0
      %69 = vst [vmem:[#allocation2 + $0x190] sm:$0xff] 0.0
      %70 = vst [vmem:[#allocation2 + $0x198] sm:$0xff] 0.0
      %71 = vst [vmem:[#allocation2 + $0x1a0] sm:$0xff] 0.0
      %72 = vst [vmem:[#allocation2 + $0x1a8] sm:$0xff] 0.0
      %73 = vst [vmem:[#allocation2 + $0x1b0] sm:$0xff] 0.0
      %74 = vst [vmem:[#allocation2 + $0x1b8] sm:$0xff] 0.0
      %75 = vst [vmem:[#allocation2 + $0x1c0] sm:$0xff] 0.0
      %76 = vst [vmem:[#allocation2 + $0x1c8] sm:$0xff] 0.0
      %77 = vst [vmem:[#allocation2 + $0x1d0] sm:$0xff] 0.0
      %78 = vst [vmem:[#allocation2 + $0x1d8] sm:$0xff] 0.0
      %79 = vst [vmem:[#allocation2 + $0x1e0] sm:$0xff] 0.0
      %80 = vst [vmem:[#allocation2 + $0x1e8] sm:$0xff] 0.0
      %81 = vst [vmem:[#allocation2 + $0x1f0] sm:$0xff] 0.0
      %82 = vst [vmem:[#allocation2 + $0x1f8] sm:$0xff] 0.0
    $region17: #{self_attention_forward.5} parent=1 // pred_fallthru
      _
    %v83 = vld [vmem:[#allocation2] sm:$0xff]
    %v84 = vld [vmem:[#allocation2 + $0x8] sm:$0xff]
    %v85 = vld [vmem:[#allocation2 + $0x10] sm:$0xff]
    %v86 = vld [vmem:[#allocation2 + $0x18] sm:$0xff]
    %v87 = vld [vmem:[#allocation2 + $0x20] sm:$0xff]
    %v88 = vld [vmem:[#allocation2 + $0x28] sm:$0xff]
    %v89 = vld [vmem:[#allocation2 + $0x30] sm:$0xff]
    %v90 = vld [vmem:[#allocation2 + $0x38] sm:$0xff]
    %v91 = vld [vmem:[#allocation2 + $0x40] sm:$0xff]
    %v92 = vld [vmem:[#allocation2 + $0x48] sm:$0xff]
    %v93 = vld [vmem:[#allocation2 + $0x50] sm:$0xff]
    %v94 = vld [vmem:[#allocation2 + $0x58] sm:$0xff]
    %v95 = vld [vmem:[#allocation2 + $0x60] sm:$0xff]
    %v96 = vld [vmem:[#allocation2 + $0x68] sm:$0xff]
    %v97 = vld [vmem:[#allocation2 + $0x70] sm:$0xff]
    %v98 = vld [vmem:[#allocation2 + $0x78] sm:$0xff]
    %v99 = vld [vmem:[#allocation2 + $0x80] sm:$0xff]
    %v100 = vld [vmem:[#allocation2 + $0x88] sm:$0xff]
    %v101 = vld [vmem:[#allocation2 + $0x90] sm:$0xff]
    %v102 = vld [vmem:[#allocation2 + $0x98] sm:$0xff]
    %v103 = vld [vmem:[#allocation2 + $0xa0] sm:$0xff]
    %v104 = vld [vmem:[#allocation2 + $0xa8] sm:$0xff]
    %v105 = vld [vmem:[#allocation2 + $0xb0] sm:$0xff]
    %v106 = vld [vmem:[#allocation2 + $0xb8] sm:$0xff]
    %v107 = vld [vmem:[#allocation2 + $0xc0] sm:$0xff]
    %v108 = vld [vmem:[#allocation2 + $0xc8] sm:$0xff]
    %v109 = vld [vmem:[#allocation2 + $0xd0] sm:$0xff]
    %v110 = vld [vmem:[#allocation2 + $0xd8] sm:$0xff]
    %v111 = vld [vmem:[#allocation2 + $0xe0] sm:$0xff]
    %v112 = vld [vmem:[#allocation2 + $0xe8] sm:$0xff]
    %v113 = vld [vmem:[#allocation2 + $0xf0] sm:$0xff]
    %v114 = vld [vmem:[#allocation2 + $0xf8] sm:$0xff]
    %v115 = vld [vmem:[#allocation2 + $0x100] sm:$0xff]
    %v116 = vld [vmem:[#allocation2 + $0x108] sm:$0xff]
    %v117 = vld [vmem:[#allocation2 + $0x110] sm:$0xff]
    %v118 = vld [vmem:[#allocation2 + $0x118] sm:$0xff]
    %v119 = vld [vmem:[#allocation2 + $0x120] sm:$0xff]
    %v120 = vld [vmem:[#allocation2 + $0x128] sm:$0xff]
    %v121 = vld [vmem:[#allocation2 + $0x130] sm:$0xff]
    %v122 = vld [vmem:[#allocation2 + $0x138] sm:$0xff]
    %v123 = vld [vmem:[#allocation2 + $0x140] sm:$0xff]
    %v124 = vld [vmem:[#allocation2 + $0x148] sm:$0xff]
    %v125 = vld [vmem:[#allocation2 + $0x150] sm:$0xff]
    %v126 = vld [vmem:[#allocation2 + $0x158] sm:$0xff]
    %v127 = vld [vmem:[#allocation2 + $0x160] sm:$0xff]
    %v128 = vld [vmem:[#allocation2 + $0x168] sm:$0xff]
    %v129 = vld [vmem:[#allocation2 + $0x170] sm:$0xff]
    %v130 = vld [vmem:[#allocation2 + $0x178] sm:$0xff]
    %v131 = vld [vmem:[#allocation2 + $0x180] sm:$0xff]
    %v132 = vld [vmem:[#allocation2 + $0x188] sm:$0xff]
    %v133 = vld [vmem:[#allocation2 + $0x190] sm:$0xff]
    %v134 = vld [vmem:[#allocation2 + $0x198] sm:$0xff]
    %v135 = vld [vmem:[#allocation2 + $0x1a0] sm:$0xff]
    %v136 = vld [vmem:[#allocation2 + $0x1a8] sm:$0xff]
    %v137 = vld [vmem:[#allocation2 + $0x1b0] sm:$0xff]
    %v138 = vld [vmem:[#allocation2 + $0x1b8] sm:$0xff]
    %v139 = vld [vmem:[#allocation2 + $0x1c0] sm:$0xff]
    %v140 = vld [vmem:[#allocation2 + $0x1c8] sm:$0xff]
    %v141 = vld [vmem:[#allocation2 + $0x1d0] sm:$0xff]
    %v142 = vld [vmem:[#allocation2 + $0x1d8] sm:$0xff]
    %v143 = vld [vmem:[#allocation2 + $0x1e0] sm:$0xff]
    %v144 = vld [vmem:[#allocation2 + $0x1e8] sm:$0xff]
    %v145 = vld [vmem:[#allocation2 + $0x1f0] sm:$0xff]
    %v146 = vld [vmem:[#allocation2 + $0x1f8] sm:$0xff]
    %v147 = vld [vmem:[%s0] sm:$0xff]
    %v148 = vld [vmem:[%s0 + $0x8] sm:$0xff]
    %v149 = vld [vmem:[%s0 + $0x10] sm:$0xff]
    %v150 = vld [vmem:[%s0 + $0x18] sm:$0xff]
    %v151 = vld [vmem:[%s0 + $0x20] sm:$0xff]
    %v152 = vld [vmem:[%s0 + $0x28] sm:$0xff]
    %v153 = vld [vmem:[%s0 + $0x30] sm:$0xff]
    %v154 = vld [vmem:[%s0 + $0x38] sm:$0xff]
    %v155 = vld [vmem:[%s0 + $0x40] sm:$0xff]
    %v156 = vld [vmem:[%s0 + $0x48] sm:$0xff]
    %v157 = vld [vmem:[%s0 + $0x50] sm:$0xff]
    %v158 = vld [vmem:[%s0 + $0x58] sm:$0xff]
    %v159 = vld [vmem:[%s0 + $0x60] sm:$0xff]
    %v160 = vld [vmem:[%s0 + $0x68] sm:$0xff]
    %v161 = vld [vmem:[%s0 + $0x70] sm:$0xff]
    %v162 = vld [vmem:[%s0 + $0x78] sm:$0xff]
    %v163 = vld [vmem:[%s0 + $0x80] sm:$0xff]
    %v164 = vld [vmem:[%s0 + $0x88] sm:$0xff]
    %v165 = vld [vmem:[%s0 + $0x90] sm:$0xff]
    %v166 = vld [vmem:[%s0 + $0x98] sm:$0xff]
    %v167 = vld [vmem:[%s0 + $0xa0] sm:$0xff]
    %v168 = vld [vmem:[%s0 + $0xa8] sm:$0xff]
    %v169 = vld [vmem:[%s0 + $0xb0] sm:$0xff]
    %v170 = vld [vmem:[%s0 + $0xb8] sm:$0xff]
    %v171 = vld [vmem:[%s0 + $0xc0] sm:$0xff]
    %v172 = vld [vmem:[%s0 + $0xc8] sm:$0xff]
    %v173 = vld [vmem:[%s0 + $0xd0] sm:$0xff]
    %v174 = vld [vmem:[%s0 + $0xd8] sm:$0xff]
    %v175 = vld [vmem:[%s0 + $0xe0] sm:$0xff]
    %v176 = vld [vmem:[%s0 + $0xe8] sm:$0xff]
    %v177 = vld [vmem:[%s0 + $0xf0] sm:$0xff]
    %v178 = vld [vmem:[%s0 + $0xf8] sm:$0xff]
    %v179 = vld [vmem:[%s1] sm:$0xff]
    %v180 = vld [vmem:[%s1 + $0x8] sm:$0xff]
    %v181 = vld [vmem:[%s1 + $0x10] sm:$0xff]
    %v182 = vld [vmem:[%s1 + $0x18] sm:$0xff]
    %v183 = vld [vmem:[%s1 + $0x20] sm:$0xff]
    %v184 = vld [vmem:[%s1 + $0x28] sm:$0xff]
    %v185 = vld [vmem:[%s1 + $0x30] sm:$0xff]
    %v186 = vld [vmem:[%s1 + $0x38] sm:$0xff]
    %v187 = vld [vmem:[%s1 + $0x40] sm:$0xff]
    %v188 = vld [vmem:[%s1 + $0x48] sm:$0xff]
    %v189 = vld [vmem:[%s1 + $0x50] sm:$0xff]
    %v190 = vld [vmem:[%s1 + $0x58] sm:$0xff]
    %v191 = vld [vmem:[%s1 + $0x60] sm:$0xff]
    %v192 = vld [vmem:[%s1 + $0x68] sm:$0xff]
    %v193 = vld [vmem:[%s1 + $0x70] sm:$0xff]
    %v194 = vld [vmem:[%s1 + $0x78] sm:$0xff]
    %v195 = vld [vmem:[%s1 + $0x80] sm:$0xff]
    %v196 = vld [vmem:[%s1 + $0x88] sm:$0xff]
    %v197 = vld [vmem:[%s1 + $0x90] sm:$0xff]
    %v198 = vld [vmem:[%s1 + $0x98] sm:$0xff]
    %v199 = vld [vmem:[%s1 + $0xa0] sm:$0xff]
    %v200 = vld [vmem:[%s1 + $0xa8] sm:$0xff]
    %v201 = vld [vmem:[%s1 + $0xb0] sm:$0xff]
    %v202 = vld [vmem:[%s1 + $0xb8] sm:$0xff]
    %v203 = vld [vmem:[%s1 + $0xc0] sm:$0xff]
    %v204 = vld [vmem:[%s1 + $0xc8] sm:$0xff]
    %v205 = vld [vmem:[%s1 + $0xd0] sm:$0xff]
    %v206 = vld [vmem:[%s1 + $0xd8] sm:$0xff]
    %v207 = vld [vmem:[%s1 + $0xe0] sm:$0xff]
    %v208 = vld [vmem:[%s1 + $0xe8] sm:$0xff]
    %v209 = vld [vmem:[%s1 + $0xf0] sm:$0xff]
    %v210 = vld [vmem:[%s1 + $0xf8] sm:$0xff]
    %v243 = vunpack.c.l.b16 %v147
    %v244 = vunpack.c.h.b16 %v147
    %v245 = vunpack.c.l.b16 %v148
    %v246 = vunpack.c.h.b16 %v148
    %v247 = vunpack.c.l.b16 %v149
    %v248 = vunpack.c.h.b16 %v149
    %v249 = vunpack.c.l.b16 %v150
    %v250 = vunpack.c.h.b16 %v150
    %v251 = vunpack.c.l.b16 %v151
    %v252 = vunpack.c.h.b16 %v151
    %v253 = vunpack.c.l.b16 %v152
    %v254 = vunpack.c.h.b16 %v152
    %v255 = vunpack.c.l.b16 %v153
    %v256 = vunpack.c.h.b16 %v153
    %v257 = vunpack.c.l.b16 %v154
    %v258 = vunpack.c.h.b16 %v154
    %v259 = vunpack.c.l.b16 %v155
    %v260 = vunpack.c.h.b16 %v155
    %v261 = vunpack.c.l.b16 %v156
    %v262 = vunpack.c.h.b16 %v156
    %v263 = vunpack.c.l.b16 %v157
    %v264 = vunpack.c.h.b16 %v157
    %v265 = vunpack.c.l.b16 %v158
    %v266 = vunpack.c.h.b16 %v158
    %v267 = vunpack.c.l.b16 %v159
    %v268 = vunpack.c.h.b16 %v159
    %v269 = vunpack.c.l.b16 %v160
    %v270 = vunpack.c.h.b16 %v160
    %v271 = vunpack.c.l.b16 %v161
    %v272 = vunpack.c.h.b16 %v161
    %v273 = vunpack.c.l.b16 %v162
    %v274 = vunpack.c.h.b16 %v162
    %v275 = vunpack.c.l.b16 %v163
    %v276 = vunpack.c.h.b16 %v163
    %v277 = vunpack.c.l.b16 %v164
    %v278 = vunpack.c.h.b16 %v164
    %v279 = vunpack.c.l.b16 %v165
    %v280 = vunpack.c.h.b16 %v165
    %v281 = vunpack.c.l.b16 %v166
    %v282 = vunpack.c.h.b16 %v166
    %v283 = vunpack.c.l.b16 %v167
    %v284 = vunpack.c.h.b16 %v167
    %v285 = vunpack.c.l.b16 %v168
    %v286 = vunpack.c.h.b16 %v168
    %v287 = vunpack.c.l.b16 %v169
    %v288 = vunpack.c.h.b16 %v169
    %v289 = vunpack.c.l.b16 %v170
    %v290 = vunpack.c.h.b16 %v170
    %v291 = vunpack.c.l.b16 %v171
    %v292 = vunpack.c.h.b16 %v171
    %v293 = vunpack.c.l.b16 %v172
    %v294 = vunpack.c.h.b16 %v172
    %v295 = vunpack.c.l.b16 %v173
    %v296 = vunpack.c.h.b16 %v173
    %v297 = vunpack.c.l.b16 %v174
    %v298 = vunpack.c.h.b16 %v174
    %v299 = vunpack.c.l.b16 %v175
    %v300 = vunpack.c.h.b16 %v175
    %v301 = vunpack.c.l.b16 %v176
    %v302 = vunpack.c.h.b16 %v176
    %v303 = vunpack.c.l.b16 %v177
    %v304 = vunpack.c.h.b16 %v177
    %v305 = vunpack.c.l.b16 %v178
    %v306 = vunpack.c.h.b16 %v178
    %v307 = vpack.c.b16 %v245, %v243
    %v308 = vpack.c.b16 %v246, %v244
    %v309 = vpack.c.b16 %v249, %v247
    %v310 = vpack.c.b16 %v250, %v248
    %v311 = vpack.c.b16 %v253, %v251
    %v312 = vpack.c.b16 %v254, %v252
    %v313 = vpack.c.b16 %v257, %v255
    %v314 = vpack.c.b16 %v258, %v256
    %v315 = vpack.c.b16 %v261, %v259
    %v316 = vpack.c.b16 %v262, %v260
    %v317 = vpack.c.b16 %v265, %v263
    %v318 = vpack.c.b16 %v266, %v264
    %v319 = vpack.c.b16 %v269, %v267
    %v320 = vpack.c.b16 %v270, %v268
    %v321 = vpack.c.b16 %v273, %v271
    %v322 = vpack.c.b16 %v274, %v272
    %v323 = vpack.c.b16 %v277, %v275
    %v324 = vpack.c.b16 %v278, %v276
    %v325 = vpack.c.b16 %v281, %v279
    %v326 = vpack.c.b16 %v282, %v280
    %v327 = vpack.c.b16 %v285, %v283
    %v328 = vpack.c.b16 %v286, %v284
    %v329 = vpack.c.b16 %v289, %v287
    %v330 = vpack.c.b16 %v290, %v288
    %v331 = vpack.c.b16 %v293, %v291
    %v332 = vpack.c.b16 %v294, %v292
    %v333 = vpack.c.b16 %v297, %v295
    %v334 = vpack.c.b16 %v298, %v296
    %v335 = vpack.c.b16 %v301, %v299
    %v336 = vpack.c.b16 %v302, %v300
    %v337 = vpack.c.b16 %v305, %v303
    %v338 = vpack.c.b16 %v306, %v304
    %v403 = vunpack.c.l.b16 %v179
    %v404 = vunpack.c.h.b16 %v179
    %v405 = vunpack.c.l.b16 %v180
    %v406 = vunpack.c.h.b16 %v180
    %v407 = vunpack.c.l.b16 %v181
    %v408 = vunpack.c.h.b16 %v181
    %v409 = vunpack.c.l.b16 %v182
    %v410 = vunpack.c.h.b16 %v182
    %v411 = vunpack.c.l.b16 %v183
    %v412 = vunpack.c.h.b16 %v183
    %v413 = vunpack.c.l.b16 %v184
    %v414 = vunpack.c.h.b16 %v184
    %v415 = vunpack.c.l.b16 %v185
    %v416 = vunpack.c.h.b16 %v185
    %v417 = vunpack.c.l.b16 %v186
    %v418 = vunpack.c.h.b16 %v186
    %v419 = vunpack.c.l.b16 %v187
    %v420 = vunpack.c.h.b16 %v187
    %v421 = vunpack.c.l.b16 %v188
    %v422 = vunpack.c.h.b16 %v188
    %v423 = vunpack.c.l.b16 %v189
    %v424 = vunpack.c.h.b16 %v189
    %v425 = vunpack.c.l.b16 %v190
    %v426 = vunpack.c.h.b16 %v190
    %v427 = vunpack.c.l.b16 %v191
    %v428 = vunpack.c.h.b16 %v191
    %v429 = vunpack.c.l.b16 %v192
    %v430 = vunpack.c.h.b16 %v192
    %v431 = vunpack.c.l.b16 %v193
    %v432 = vunpack.c.h.b16 %v193
    %v433 = vunpack.c.l.b16 %v194
    %v434 = vunpack.c.h.b16 %v194
    %v435 = vunpack.c.l.b16 %v195
    %v436 = vunpack.c.h.b16 %v195
    %v437 = vunpack.c.l.b16 %v196
    %v438 = vunpack.c.h.b16 %v196
    %v439 = vunpack.c.l.b16 %v197
    %v440 = vunpack.c.h.b16 %v197
    %v441 = vunpack.c.l.b16 %v198
    %v442 = vunpack.c.h.b16 %v198
    %v443 = vunpack.c.l.b16 %v199
    %v444 = vunpack.c.h.b16 %v199
    %v445 = vunpack.c.l.b16 %v200
    %v446 = vunpack.c.h.b16 %v200
    %v447 = vunpack.c.l.b16 %v201
    %v448 = vunpack.c.h.b16 %v201
    %v449 = vunpack.c.l.b16 %v202
    %v450 = vunpack.c.h.b16 %v202
    %v451 = vunpack.c.l.b16 %v203
    %v452 = vunpack.c.h.b16 %v203
    %v453 = vunpack.c.l.b16 %v204
    %v454 = vunpack.c.h.b16 %v204
    %v455 = vunpack.c.l.b16 %v205
    %v456 = vunpack.c.h.b16 %v205
    %v457 = vunpack.c.l.b16 %v206
    %v458 = vunpack.c.h.b16 %v206
    %v459 = vunpack.c.l.b16 %v207
    %v460 = vunpack.c.h.b16 %v207
    %v461 = vunpack.c.l.b16 %v208
    %v462 = vunpack.c.h.b16 %v208
    %v463 = vunpack.c.l.b16 %v209
    %v464 = vunpack.c.h.b16 %v209
    %v465 = vunpack.c.l.b16 %v210
    %v466 = vunpack.c.h.b16 %v210
    %v467 = vpack.c.b16 %v405, %v403
    %v468 = vpack.c.b16 %v406, %v404
    %v469 = vpack.c.b16 %v409, %v407
    %v470 = vpack.c.b16 %v410, %v408
    %v471 = vpack.c.b16 %v413, %v411
    %v472 = vpack.c.b16 %v414, %v412
    %v473 = vpack.c.b16 %v417, %v415
    %v474 = vpack.c.b16 %v418, %v416
    %v475 = vpack.c.b16 %v421, %v419
    %v476 = vpack.c.b16 %v422, %v420
    %v477 = vpack.c.b16 %v425, %v423
    %v478 = vpack.c.b16 %v426, %v424
    %v479 = vpack.c.b16 %v429, %v427
    %v480 = vpack.c.b16 %v430, %v428
    %v481 = vpack.c.b16 %v433, %v431
    %v482 = vpack.c.b16 %v434, %v432
    %v483 = vpack.c.b16 %v437, %v435
    %v484 = vpack.c.b16 %v438, %v436
    %v485 = vpack.c.b16 %v441, %v439
    %v486 = vpack.c.b16 %v442, %v440
    %v487 = vpack.c.b16 %v445, %v443
    %v488 = vpack.c.b16 %v446, %v444
    %v489 = vpack.c.b16 %v449, %v447
    %v490 = vpack.c.b16 %v450, %v448
    %v491 = vpack.c.b16 %v453, %v451
    %v492 = vpack.c.b16 %v454, %v452
    %v493 = vpack.c.b16 %v457, %v455
    %v494 = vpack.c.b16 %v458, %v456
    %v495 = vpack.c.b16 %v461, %v459
    %v496 = vpack.c.b16 %v462, %v460
    %v497 = vpack.c.b16 %v465, %v463
    %v498 = vpack.c.b16 %v466, %v464
    %531 = vmatprep.subr.bf16.mxu0 %v468
    %532 = vmatpush1.bf16.msra.mxu0 %v467
    %533 = vmatprep.subr.bf16.mxu0 %v470
    %534 = vmatpush1.bf16.msra.mxu0 %v469
    %535 = vmatprep.subr.bf16.mxu0 %v472
    %536 = vmatpush1.bf16.msra.mxu0 %v471
    %537 = vmatprep.subr.bf16.mxu0 %v474
    %538 = vmatpush1.bf16.msra.mxu0 %v473
    %539 = vmatprep.subr.bf16.mxu0 %v476
    %540 = vmatpush1.bf16.msra.mxu0 %v475
    %541 = vmatprep.subr.bf16.mxu0 %v478
    %542 = vmatpush1.bf16.msra.mxu0 %v477
    %543 = vmatprep.subr.bf16.mxu0 %v480
    %544 = vmatpush1.bf16.msra.mxu0 %v479
    %545 = vmatprep.subr.bf16.mxu0 %v482
    %546 = vmatpush1.bf16.msra.mxu0 %v481
    %547 = vmatprep.subr.bf16.mxu0 %v484
    %548 = vmatpush1.bf16.msra.mxu0 %v483
    %549 = vmatprep.subr.bf16.mxu0 %v486
    %550 = vmatpush1.bf16.msra.mxu0 %v485
    %551 = vmatprep.subr.bf16.mxu0 %v488
    %552 = vmatpush1.bf16.msra.mxu0 %v487
    %553 = vmatprep.subr.bf16.mxu0 %v490
    %554 = vmatpush1.bf16.msra.mxu0 %v489
    %555 = vmatprep.subr.bf16.mxu0 %v492
    %556 = vmatpush1.bf16.msra.mxu0 %v491
    %557 = vmatprep.subr.bf16.mxu0 %v494
    %558 = vmatpush1.bf16.msra.mxu0 %v493
    %559 = vmatprep.subr.bf16.mxu0 %v496
    %560 = vmatpush1.bf16.msra.mxu0 %v495
    %561 = vmatprep.subr.bf16.mxu0 %v498
    %562 = vmatpush1.bf16.msra.mxu0 %v497
    %563 = vmatprep.mubr.bf16.mxu0 %v308
    %564 = vmatmul.mubr.bf16.gmra.mrb[0].mxu0 %v307
    %v565 = vpop.f32.mrb[0].mxu0
    %v566 = vadd.f32 0.0, %v565
    %v567 = vpop.f32.mrb[0].mxu0
    %v568 = vadd.f32 0.0, %v567
    %v569 = vpop.f32.mrb[0].mxu0
    %v570 = vadd.f32 0.0, %v569
    %v571 = vpop.f32.mrb[0].mxu0
    %v572 = vadd.f32 0.0, %v571
    %573 = vmatprep.mubr.bf16.mxu0 %v310
    %574 = vmatmul.mubr.bf16.gmra.mrb[0].mxu0 %v309
    %v575 = vpop.f32.mrb[0].mxu0
    %v576 = vadd.f32 0.0, %v575
    %v577 = vpop.f32.mrb[0].mxu0
    %v578 = vadd.f32 0.0, %v577
    %v579 = vpop.f32.mrb[0].mxu0
    %v580 = vadd.f32 0.0, %v579
    %v581 = vpop.f32.mrb[0].mxu0
    %v582 = vadd.f32 0.0, %v581
    %583 = vmatprep.mubr.bf16.mxu0 %v312
    %584 = vmatmul.mubr.bf16.gmra.mrb[0].mxu0 %v311
    %v585 = vpop.f32.mrb[0].mxu0
    %v586 = vadd.f32 0.0, %v585
    %v587 = vpop.f32.mrb[0].mxu0
    %v588 = vadd.f32 0.0, %v587
    %v589 = vpop.f32.mrb[0].mxu0
    %v590 = vadd.f32 0.0, %v589
    %v591 = vpop.f32.mrb[0].mxu0
    %v592 = vadd.f32 0.0, %v591
    %593 = vmatprep.mubr.bf16.mxu0 %v314
    %594 = vmatmul.mubr.bf16.gmra.mrb[0].mxu0 %v313
    %v595 = vpop.f32.mrb[0].mxu0
    %v596 = vadd.f32 0.0, %v595
    %v597 = vpop.f32.mrb[0].mxu0
    %v598 = vadd.f32 0.0, %v597
    %v599 = vpop.f32.mrb[0].mxu0
    %v600 = vadd.f32 0.0, %v599
    %v601 = vpop.f32.mrb[0].mxu0
    %v602 = vadd.f32 0.0, %v601
    %603 = vmatprep.mubr.bf16.mxu0 %v316
    %604 = vmatmul.mubr.bf16.gmra.mrb[0].mxu0 %v315
    %v605 = vpop.f32.mrb[0].mxu0
    %v606 = vadd.f32 0.0, %v605
    %v607 = vpop.f32.mrb[0].mxu0
    %v608 = vadd.f32 0.0, %v607
    %v609 = vpop.f32.mrb[0].mxu0
    %v610 = vadd.f32 0.0, %v609
    %v611 = vpop.f32.mrb[0].mxu0
    %v612 = vadd.f32 0.0, %v611
    %613 = vmatprep.mubr.bf16.mxu0 %v318
    %614 = vmatmul.mubr.bf16.gmra.mrb[0].mxu0 %v317
    %v615 = vpop.f32.mrb[0].mxu0
    %v616 = vadd.f32 0.0, %v615
    %v617 = vpop.f32.mrb[0].mxu0
    %v618 = vadd.f32 0.0, %v617
    %v619 = vpop.f32.mrb[0].mxu0
    %v620 = vadd.f32 0.0, %v619
    %v621 = vpop.f32.mrb[0].mxu0
    %v622 = vadd.f32 0.0, %v621
    %623 = vmatprep.mubr.bf16.mxu0 %v320
    %624 = vmatmul.mubr.bf16.gmra.mrb[0].mxu0 %v319
    %v625 = vpop.f32.mrb[0].mxu0
    %v626 = vadd.f32 0.0, %v625
    %v627 = vpop.f32.mrb[0].mxu0
    %v628 = vadd.f32 0.0, %v627
    %v629 = vpop.f32.mrb[0].mxu0
    %v630 = vadd.f32 0.0, %v629
    %v631 = vpop.f32.mrb[0].mxu0
    %v632 = vadd.f32 0.0, %v631
    %633 = vmatprep.mubr.bf16.mxu0 %v322
    %634 = vmatmul.mubr.bf16.gmra.mrb[0].mxu0 %v321
    %v635 = vpop.f32.mrb[0].mxu0
    %v636 = vadd.f32 0.0, %v635
    %v637 = vpop.f32.mrb[0].mxu0
    %v638 = vadd.f32 0.0, %v637
    %v639 = vpop.f32.mrb[0].mxu0
    %v640 = vadd.f32 0.0, %v639
    %v641 = vpop.f32.mrb[0].mxu0
    %v642 = vadd.f32 0.0, %v641
    %643 = vmatprep.mubr.bf16.mxu0 %v324
    %644 = vmatmul.mubr.bf16.gmra.mrb[0].mxu0 %v323
    %v645 = vpop.f32.mrb[0].mxu0
    %v646 = vadd.f32 0.0, %v645
    %v647 = vpop.f32.mrb[0].mxu0
    %v648 = vadd.f32 0.0, %v647
    %v649 = vpop.f32.mrb[0].mxu0
    %v650 = vadd.f32 0.0, %v649
    %v651 = vpop.f32.mrb[0].mxu0
    %v652 = vadd.f32 0.0, %v651
    %653 = vmatprep.mubr.bf16.mxu0 %v326
    %654 = vmatmul.mubr.bf16.gmra.mrb[0].mxu0 %v325
    %v655 = vpop.f32.mrb[0].mxu0
    %v656 = vadd.f32 0.0, %v655
    %v657 = vpop.f32.mrb[0].mxu0
    %v658 = vadd.f32 0.0, %v657
    %v659 = vpop.f32.mrb[0].mxu0
    %v660 = vadd.f32 0.0, %v659
    %v661 = vpop.f32.mrb[0].mxu0
    %v662 = vadd.f32 0.0, %v661
    %663 = vmatprep.mubr.bf16.mxu0 %v328
    %664 = vmatmul.mubr.bf16.gmra.mrb[0].mxu0 %v327
    %v665 = vpop.f32.mrb[0].mxu0
    %v666 = vadd.f32 0.0, %v665
    %v667 = vpop.f32.mrb[0].mxu0
    %v668 = vadd.f32 0.0, %v667
    %v669 = vpop.f32.mrb[0].mxu0
    %v670 = vadd.f32 0.0, %v669
    %v671 = vpop.f32.mrb[0].mxu0
    %v672 = vadd.f32 0.0, %v671
    %673 = vmatprep.mubr.bf16.mxu0 %v330
    %674 = vmatmul.mubr.bf16.gmra.mrb[0].mxu0 %v329
    %v675 = vpop.f32.mrb[0].mxu0
    %v676 = vadd.f32 0.0, %v675
    %v677 = vpop.f32.mrb[0].mxu0
    %v678 = vadd.f32 0.0, %v677
    %v679 = vpop.f32.mrb[0].mxu0
    %v680 = vadd.f32 0.0, %v679
    %v681 = vpop.f32.mrb[0].mxu0
    %v682 = vadd.f32 0.0, %v681
    %683 = vmatprep.mubr.bf16.mxu0 %v332
    %684 = vmatmul.mubr.bf16.gmra.mrb[0].mxu0 %v331
    %v685 = vpop.f32.mrb[0].mxu0
    %v686 = vadd.f32 0.0, %v685
    %v687 = vpop.f32.mrb[0].mxu0
    %v688 = vadd.f32 0.0, %v687
    %v689 = vpop.f32.mrb[0].mxu0
    %v690 = vadd.f32 0.0, %v689
    %v691 = vpop.f32.mrb[0].mxu0
    %v692 = vadd.f32 0.0, %v691
    %693 = vmatprep.mubr.bf16.mxu0 %v334
    %694 = vmatmul.mubr.bf16.gmra.mrb[0].mxu0 %v333
    %v695 = vpop.f32.mrb[0].mxu0
    %v696 = vadd.f32 0.0, %v695
    %v697 = vpop.f32.mrb[0].mxu0
    %v698 = vadd.f32 0.0, %v697
    %v699 = vpop.f32.mrb[0].mxu0
    %v700 = vadd.f32 0.0, %v699
    %v701 = vpop.f32.mrb[0].mxu0
    %v702 = vadd.f32 0.0, %v701
    %703 = vmatprep.mubr.bf16.mxu0 %v336
    %704 = vmatmul.mubr.bf16.gmra.mrb[0].mxu0 %v335
    %v705 = vpop.f32.mrb[0].mxu0
    %v706 = vadd.f32 0.0, %v705
    %v707 = vpop.f32.mrb[0].mxu0
    %v708 = vadd.f32 0.0, %v707
    %v709 = vpop.f32.mrb[0].mxu0
    %v710 = vadd.f32 0.0, %v709
    %v711 = vpop.f32.mrb[0].mxu0
    %v712 = vadd.f32 0.0, %v711
    %713 = vmatprep.mubr.bf16.mxu0 %v338
    %714 = vmatmul.mubr.bf16.gmra.mrb[0].mxu0 %v337
    %v715 = vpop.f32.mrb[0].mxu0
    %v716 = vadd.f32 0.0, %v715
    %v717 = vpop.f32.mrb[0].mxu0
    %v718 = vadd.f32 0.0, %v717
    %v719 = vpop.f32.mrb[0].mxu0
    %v720 = vadd.f32 0.0, %v719
    %v721 = vpop.f32.mrb[0].mxu0
    %v722 = vadd.f32 0.0, %v721
    %723 = vdwg.mxu0
    %v724 = vadd.f32 %v83, %v566
    %v725 = vadd.f32 %v84, %v568
    %v726 = vadd.f32 %v85, %v570
    %v727 = vadd.f32 %v86, %v572
    %v728 = vadd.f32 %v87, %v576
    %v729 = vadd.f32 %v88, %v578
    %v730 = vadd.f32 %v89, %v580
    %v731 = vadd.f32 %v90, %v582
    %v732 = vadd.f32 %v91, %v586
    %v733 = vadd.f32 %v92, %v588
    %v734 = vadd.f32 %v93, %v590
    %v735 = vadd.f32 %v94, %v592
    %v736 = vadd.f32 %v95, %v596
    %v737 = vadd.f32 %v96, %v598
    %v738 = vadd.f32 %v97, %v600
    %v739 = vadd.f32 %v98, %v602
    %v740 = vadd.f32 %v99, %v606
    %v741 = vadd.f32 %v100, %v608
    %v742 = vadd.f32 %v101, %v610
    %v743 = vadd.f32 %v102, %v612
    %v744 = vadd.f32 %v103, %v616
    %v745 = vadd.f32 %v104, %v618
    %v746 = vadd.f32 %v105, %v620
    %v747 = vadd.f32 %v106, %v622
    %v748 = vadd.f32 %v107, %v626
    %v749 = vadd.f32 %v108, %v628
    %v750 = vadd.f32 %v109, %v630
    %v751 = vadd.f32 %v110, %v632
    %v752 = vadd.f32 %v111, %v636
    %v753 = vadd.f32 %v112, %v638
    %v754 = vadd.f32 %v113, %v640
    %v755 = vadd.f32 %v114, %v642
    %v756 = vadd.f32 %v115, %v646
    %v757 = vadd.f32 %v116, %v648
    %v758 = vadd.f32 %v117, %v650
    %v759 = vadd.f32 %v118, %v652
    %v760 = vadd.f32 %v119, %v656
    %v761 = vadd.f32 %v120, %v658
    %v762 = vadd.f32 %v121, %v660
    %v763 = vadd.f32 %v122, %v662
    %v764 = vadd.f32 %v123, %v666
    %v765 = vadd.f32 %v124, %v668
    %v766 = vadd.f32 %v125, %v670
    %v767 = vadd.f32 %v126, %v672
    %v768 = vadd.f32 %v127, %v676
    %v769 = vadd.f32 %v128, %v678
    %v770 = vadd.f32 %v129, %v680
    %v771 = vadd.f32 %v130, %v682
    %v772 = vadd.f32 %v131, %v686
    %v773 = vadd.f32 %v132, %v688
    %v774 = vadd.f32 %v133, %v690
    %v775 = vadd.f32 %v134, %v692
    %v776 = vadd.f32 %v135, %v696
    %v777 = vadd.f32 %v136, %v698
    %v778 = vadd.f32 %v137, %v700
    %v779 = vadd.f32 %v138, %v702
    %v780 = vadd.f32 %v139, %v706
    %v781 = vadd.f32 %v140, %v708
    %v782 = vadd.f32 %v141, %v710
    %v783 = vadd.f32 %v142, %v712
    %v784 = vadd.f32 %v143, %v716
    %v785 = vadd.f32 %v144, %v718
    %v786 = vadd.f32 %v145, %v720
    %v787 = vadd.f32 %v146, %v722
    %788 = vst [vmem:[#allocation2] sm:$0xff] %v724
    %789 = vst [vmem:[#allocation2 + $0x8] sm:$0xff] %v725
    %790 = vst [vmem:[#allocation2 + $0x10] sm:$0xff] %v726
    %791 = vst [vmem:[#allocation2 + $0x18] sm:$0xff] %v727
    %792 = vst [vmem:[#allocation2 + $0x20] sm:$0xff] %v728
    %793 = vst [vmem:[#allocation2 + $0x28] sm:$0xff] %v729
    %794 = vst [vmem:[#allocation2 + $0x30] sm:$0xff] %v730
    %795 = vst [vmem:[#allocation2 + $0x38] sm:$0xff] %v731
    %796 = vst [vmem:[#allocation2 + $0x40] sm:$0xff] %v732
    %797 = vst [vmem:[#allocation2 + $0x48] sm:$0xff] %v733
    %798 = vst [vmem:[#allocation2 + $0x50] sm:$0xff] %v734
    %799 = vst [vmem:[#allocation2 + $0x58] sm:$0xff] %v735
    %800 = vst [vmem:[#allocation2 + $0x60] sm:$0xff] %v736
    %801 = vst [vmem:[#allocation2 + $0x68] sm:$0xff] %v737
    %802 = vst [vmem:[#allocation2 + $0x70] sm:$0xff] %v738
    %803 = vst [vmem:[#allocation2 + $0x78] sm:$0xff] %v739
    %804 = vst [vmem:[#allocation2 + $0x80] sm:$0xff] %v740
    %805 = vst [vmem:[#allocation2 + $0x88] sm:$0xff] %v741
    %806 = vst [vmem:[#allocation2 + $0x90] sm:$0xff] %v742
    %807 = vst [vmem:[#allocation2 + $0x98] sm:$0xff] %v743
    %808 = vst [vmem:[#allocation2 + $0xa0] sm:$0xff] %v744
    %809 = vst [vmem:[#allocation2 + $0xa8] sm:$0xff] %v745
    %810 = vst [vmem:[#allocation2 + $0xb0] sm:$0xff] %v746
    %811 = vst [vmem:[#allocation2 + $0xb8] sm:$0xff] %v747
    %812 = vst [vmem:[#allocation2 + $0xc0] sm:$0xff] %v748
    %813 = vst [vmem:[#allocation2 + $0xc8] sm:$0xff] %v749
    %814 = vst [vmem:[#allocation2 + $0xd0] sm:$0xff] %v750
    %815 = vst [vmem:[#allocation2 + $0xd8] sm:$0xff] %v751
    %816 = vst [vmem:[#allocation2 + $0xe0] sm:$0xff] %v752
    %817 = vst [vmem:[#allocation2 + $0xe8] sm:$0xff] %v753
    %818 = vst [vmem:[#allocation2 + $0xf0] sm:$0xff] %v754
    %819 = vst [vmem:[#allocation2 + $0xf8] sm:$0xff] %v755
    %820 = vst [vmem:[#allocation2 + $0x100] sm:$0xff] %v756
    %821 = vst [vmem:[#allocation2 + $0x108] sm:$0xff] %v757
    %822 = vst [vmem:[#allocation2 + $0x110] sm:$0xff] %v758
    %823 = vst [vmem:[#allocation2 + $0x118] sm:$0xff] %v759
    %824 = vst [vmem:[#allocation2 + $0x120] sm:$0xff] %v760
    %825 = vst [vmem:[#allocation2 + $0x128] sm:$0xff] %v761
    %826 = vst [vmem:[#allocation2 + $0x130] sm:$0xff] %v762
    %827 = vst [vmem:[#allocation2 + $0x138] sm:$0xff] %v763
    %828 = vst [vmem:[#allocation2 + $0x140] sm:$0xff] %v764
    %829 = vst [vmem:[#allocation2 + $0x148] sm:$0xff] %v765
    %830 = vst [vmem:[#allocation2 + $0x150] sm:$0xff] %v766
    %831 = vst [vmem:[#allocation2 + $0x158] sm:$0xff] %v767
    %832 = vst [vmem:[#allocation2 + $0x160] sm:$0xff] %v768
    %833 = vst [vmem:[#allocation2 + $0x168] sm:$0xff] %v769
    %834 = vst [vmem:[#allocation2 + $0x170] sm:$0xff] %v770
    %835 = vst [vmem:[#allocation2 + $0x178] sm:$0xff] %v771
    %836 = vst [vmem:[#allocation2 + $0x180] sm:$0xff] %v772
    %837 = vst [vmem:[#allocation2 + $0x188] sm:$0xff] %v773
    %838 = vst [vmem:[#allocation2 + $0x190] sm:$0xff] %v774
    %839 = vst [vmem:[#allocation2 + $0x198] sm:$0xff] %v775
    %840 = vst [vmem:[#allocation2 + $0x1a0] sm:$0xff] %v776
    %841 = vst [vmem:[#allocation2 + $0x1a8] sm:$0xff] %v777
    %842 = vst [vmem:[#allocation2 + $0x1b0] sm:$0xff] %v778
    %843 = vst [vmem:[#allocation2 + $0x1b8] sm:$0xff] %v779
    %844 = vst [vmem:[#allocation2 + $0x1c0] sm:$0xff] %v780
    %845 = vst [vmem:[#allocation2 + $0x1c8] sm:$0xff] %v781
    %846 = vst [vmem:[#allocation2 + $0x1d0] sm:$0xff] %v782
    %847 = vst [vmem:[#allocation2 + $0x1d8] sm:$0xff] %v783
    %848 = vst [vmem:[#allocation2 + $0x1e0] sm:$0xff] %v784
    %849 = vst [vmem:[#allocation2 + $0x1e8] sm:$0xff] %v785
    %850 = vst [vmem:[#allocation2 + $0x1f0] sm:$0xff] %v786
    %851 = vst [vmem:[#allocation2 + $0x1f8] sm:$0xff] %v787
    // Predicated region
    $region18: #{self_attention_forward.5} parent=1 // pred_check
      %p852 = pneg %p15
    $region19: #{self_attention_forward.5} parent=1 // pred_check_branch
      %854 = sbr.rel (%p852) target = $region21
    $region20: #{self_attention_forward.5} parent=1 // pred_region
      %v855 = vld [vmem:[#allocation2] sm:$0xff]
      %v856 = vld [vmem:[#allocation2 + $0x8] sm:$0xff]
      %v857 = vld [vmem:[#allocation2 + $0x10] sm:$0xff]
      %v858 = vld [vmem:[#allocation2 + $0x18] sm:$0xff]
      %v859 = vld [vmem:[#allocation2 + $0x20] sm:$0xff]
      %v860 = vld [vmem:[#allocation2 + $0x28] sm:$0xff]
      %v861 = vld [vmem:[#allocation2 + $0x30] sm:$0xff]
      %v862 = vld [vmem:[#allocation2 + $0x38] sm:$0xff]
      %v863 = vld [vmem:[#allocation2 + $0x40] sm:$0xff]
      %v864 = vld [vmem:[#allocation2 + $0x48] sm:$0xff]
      %v865 = vld [vmem:[#allocation2 + $0x50] sm:$0xff]
      %v866 = vld [vmem:[#allocation2 + $0x58] sm:$0xff]
      %v867 = vld [vmem:[#allocation2 + $0x60] sm:$0xff]
      %v868 = vld [vmem:[#allocation2 + $0x68] sm:$0xff]
      %v869 = vld [vmem:[#allocation2 + $0x70] sm:$0xff]
      %v870 = vld [vmem:[#allocation2 + $0x78] sm:$0xff]
      %v871 = vld [vmem:[#allocation2 + $0x80] sm:$0xff]
      %v872 = vld [vmem:[#allocation2 + $0x88] sm:$0xff]
      %v873 = vld [vmem:[#allocation2 + $0x90] sm:$0xff]
      %v874 = vld [vmem:[#allocation2 + $0x98] sm:$0xff]
      %v875 = vld [vmem:[#allocation2 + $0xa0] sm:$0xff]
      %v876 = vld [vmem:[#allocation2 + $0xa8] sm:$0xff]
      %v877 = vld [vmem:[#allocation2 + $0xb0] sm:$0xff]
      %v878 = vld [vmem:[#allocation2 + $0xb8] sm:$0xff]
      %v879 = vld [vmem:[#allocation2 + $0xc0] sm:$0xff]
      %v880 = vld [vmem:[#allocation2 + $0xc8] sm:$0xff]
      %v881 = vld [vmem:[#allocation2 + $0xd0] sm:$0xff]
      %v882 = vld [vmem:[#allocation2 + $0xd8] sm:$0xff]
      %v883 = vld [vmem:[#allocation2 + $0xe0] sm:$0xff]
      %v884 = vld [vmem:[#allocation2 + $0xe8] sm:$0xff]
      %v885 = vld [vmem:[#allocation2 + $0xf0] sm:$0xff]
      %v886 = vld [vmem:[#allocation2 + $0xf8] sm:$0xff]
      %v887 = vld [vmem:[#allocation2 + $0x100] sm:$0xff]
      %v888 = vld [vmem:[#allocation2 + $0x108] sm:$0xff]
      %v889 = vld [vmem:[#allocation2 + $0x110] sm:$0xff]
      %v890 = vld [vmem:[#allocation2 + $0x118] sm:$0xff]
      %v891 = vld [vmem:[#allocation2 + $0x120] sm:$0xff]
      %v892 = vld [vmem:[#allocation2 + $0x128] sm:$0xff]
      %v893 = vld [vmem:[#allocation2 + $0x130] sm:$0xff]
      %v894 = vld [vmem:[#allocation2 + $0x138] sm:$0xff]
      %v895 = vld [vmem:[#allocation2 + $0x140] sm:$0xff]
      %v896 = vld [vmem:[#allocation2 + $0x148] sm:$0xff]
      %v897 = vld [vmem:[#allocation2 + $0x150] sm:$0xff]
      %v898 = vld [vmem:[#allocation2 + $0x158] sm:$0xff]
      %v899 = vld [vmem:[#allocation2 + $0x160] sm:$0xff]
      %v900 = vld [vmem:[#allocation2 + $0x168] sm:$0xff]
      %v901 = vld [vmem:[#allocation2 + $0x170] sm:$0xff]
      %v902 = vld [vmem:[#allocation2 + $0x178] sm:$0xff]
      %v903 = vld [vmem:[#allocation2 + $0x180] sm:$0xff]
      %v904 = vld [vmem:[#allocation2 + $0x188] sm:$0xff]
      %v905 = vld [vmem:[#allocation2 + $0x190] sm:$0xff]
      %v906 = vld [vmem:[#allocation2 + $0x198] sm:$0xff]
      %v907 = vld [vmem:[#allocation2 + $0x1a0] sm:$0xff]
      %v908 = vld [vmem:[#allocation2 + $0x1a8] sm:$0xff]
      %v909 = vld [vmem:[#allocation2 + $0x1b0] sm:$0xff]
      %v910 = vld [vmem:[#allocation2 + $0x1b8] sm:$0xff]
      %v911 = vld [vmem:[#allocation2 + $0x1c0] sm:$0xff]
      %v912 = vld [vmem:[#allocation2 + $0x1c8] sm:$0xff]
      %v913 = vld [vmem:[#allocation2 + $0x1d0] sm:$0xff]
      %v914 = vld [vmem:[#allocation2 + $0x1d8] sm:$0xff]
      %v915 = vld [vmem:[#allocation2 + $0x1e0] sm:$0xff]
      %v916 = vld [vmem:[#allocation2 + $0x1e8] sm:$0xff]
      %v917 = vld [vmem:[#allocation2 + $0x1f0] sm:$0xff]
      %v918 = vld [vmem:[#allocation2 + $0x1f8] sm:$0xff]
      %v919 = vld [vmem:[%s2] sm:$0x3]
      %v921 = vlaneseq
      %v922 = vshrl.u32 %v921, 7
      %v923 = vsub.s32 0, %v922
      %v924 = vrot.slane %v919, %v923
      %v925 = vlaneseq
      %v926 = vshrl.u32 %v925, 7
      %v927 = vsub.s32 1, %v926
      %v928 = vrot.slane %v919, %v927
      %v931 = vadd.f32 %v855, %v924
      %v932 = vadd.f32 %v856, %v928
      %v933 = vadd.f32 %v857, %v924
      %v934 = vadd.f32 %v858, %v928
      %v935 = vadd.f32 %v859, %v924
      %v936 = vadd.f32 %v860, %v928
      %v937 = vadd.f32 %v861, %v924
      %v938 = vadd.f32 %v862, %v928
      %v939 = vadd.f32 %v863, %v924
      %v940 = vadd.f32 %v864, %v928
      %v941 = vadd.f32 %v865, %v924
      %v942 = vadd.f32 %v866, %v928
      %v943 = vadd.f32 %v867, %v924
      %v944 = vadd.f32 %v868, %v928
      %v945 = vadd.f32 %v869, %v924
      %v946 = vadd.f32 %v870, %v928
      %v947 = vadd.f32 %v871, %v924
      %v948 = vadd.f32 %v872, %v928
      %v949 = vadd.f32 %v873, %v924
      %v950 = vadd.f32 %v874, %v928
      %v951 = vadd.f32 %v875, %v924
      %v952 = vadd.f32 %v876, %v928
      %v953 = vadd.f32 %v877, %v924
      %v954 = vadd.f32 %v878, %v928
      %v955 = vadd.f32 %v879, %v924
      %v956 = vadd.f32 %v880, %v928
      %v957 = vadd.f32 %v881, %v924
      %v958 = vadd.f32 %v882, %v928
      %v959 = vadd.f32 %v883, %v924
      %v960 = vadd.f32 %v884, %v928
      %v961 = vadd.f32 %v885, %v924
      %v962 = vadd.f32 %v886, %v928
      %v963 = vadd.f32 %v887, %v924
      %v964 = vadd.f32 %v888, %v928
      %v965 = vadd.f32 %v889, %v924
      %v966 = vadd.f32 %v890, %v928
      %v967 = vadd.f32 %v891, %v924
      %v968 = vadd.f32 %v892, %v928
      %v969 = vadd.f32 %v893, %v924
      %v970 = vadd.f32 %v894, %v928
      %v971 = vadd.f32 %v895, %v924
      %v972 = vadd.f32 %v896, %v928
      %v973 = vadd.f32 %v897, %v924
      %v974 = vadd.f32 %v898, %v928
      %v975 = vadd.f32 %v899, %v924
      %v976 = vadd.f32 %v900, %v928
      %v977 = vadd.f32 %v901, %v924
      %v978 = vadd.f32 %v902, %v928
      %v979 = vadd.f32 %v903, %v924
      %v980 = vadd.f32 %v904, %v928
      %v981 = vadd.f32 %v905, %v924
      %v982 = vadd.f32 %v906, %v928
      %v983 = vadd.f32 %v907, %v924
      %v984 = vadd.f32 %v908, %v928
      %v985 = vadd.f32 %v909, %v924
      %v986 = vadd.f32 %v910, %v928
      %v987 = vadd.f32 %v911, %v924
      %v988 = vadd.f32 %v912, %v928
      %v989 = vadd.f32 %v913, %v924
      %v990 = vadd.f32 %v914, %v928
      %v991 = vadd.f32 %v915, %v924
      %v992 = vadd.f32 %v916, %v928
      %v993 = vadd.f32 %v917, %v924
      %v994 = vadd.f32 %v918, %v928
      %995 = vst [vmem:[#allocation3] sm:$0xff] %v931
      %996 = vst [vmem:[#allocation3 + $0x8] sm:$0xff] %v932
      %997 = vst [vmem:[#allocation3 + $0x10] sm:$0xff] %v933
      %998 = vst [vmem:[#allocation3 + $0x18] sm:$0xff] %v934
      %999 = vst [vmem:[#allocation3 + $0x20] sm:$0xff] %v935
      %1000 = vst [vmem:[#allocation3 + $0x28] sm:$0xff] %v936
      %1001 = vst [vmem:[#allocation3 + $0x30] sm:$0xff] %v937
      %1002 = vst [vmem:[#allocation3 + $0x38] sm:$0xff] %v938
      %1003 = vst [vmem:[#allocation3 + $0x40] sm:$0xff] %v939
      %1004 = vst [vmem:[#allocation3 + $0x48] sm:$0xff] %v940
      %1005 = vst [vmem:[#allocation3 + $0x50] sm:$0xff] %v941
      %1006 = vst [vmem:[#allocation3 + $0x58] sm:$0xff] %v942
      %1007 = vst [vmem:[#allocation3 + $0x60] sm:$0xff] %v943
      %1008 = vst [vmem:[#allocation3 + $0x68] sm:$0xff] %v944
      %1009 = vst [vmem:[#allocation3 + $0x70] sm:$0xff] %v945
      %1010 = vst [vmem:[#allocation3 + $0x78] sm:$0xff] %v946
      %1011 = vst [vmem:[#allocation3 + $0x80] sm:$0xff] %v947
      %1012 = vst [vmem:[#allocation3 + $0x88] sm:$0xff] %v948
      %1013 = vst [vmem:[#allocation3 + $0x90] sm:$0xff] %v949
      %1014 = vst [vmem:[#allocation3 + $0x98] sm:$0xff] %v950
      %1015 = vst [vmem:[#allocation3 + $0xa0] sm:$0xff] %v951
      %1016 = vst [vmem:[#allocation3 + $0xa8] sm:$0xff] %v952
      %1017 = vst [vmem:[#allocation3 + $0xb0] sm:$0xff] %v953
      %1018 = vst [vmem:[#allocation3 + $0xb8] sm:$0xff] %v954
      %1019 = vst [vmem:[#allocation3 + $0xc0] sm:$0xff] %v955
      %1020 = vst [vmem:[#allocation3 + $0xc8] sm:$0xff] %v956
      %1021 = vst [vmem:[#allocation3 + $0xd0] sm:$0xff] %v957
      %1022 = vst [vmem:[#allocation3 + $0xd8] sm:$0xff] %v958
      %1023 = vst [vmem:[#allocation3 + $0xe0] sm:$0xff] %v959
      %1024 = vst [vmem:[#allocation3 + $0xe8] sm:$0xff] %v960
      %1025 = vst [vmem:[#allocation3 + $0xf0] sm:$0xff] %v961
      %1026 = vst [vmem:[#allocation3 + $0xf8] sm:$0xff] %v962
      %1027 = vst [vmem:[#allocation3 + $0x100] sm:$0xff] %v963
      %1028 = vst [vmem:[#allocation3 + $0x108] sm:$0xff] %v964
      %1029 = vst [vmem:[#allocation3 + $0x110] sm:$0xff] %v965
      %1030 = vst [vmem:[#allocation3 + $0x118] sm:$0xff] %v966
      %1031 = vst [vmem:[#allocation3 + $0x120] sm:$0xff] %v967
      %1032 = vst [vmem:[#allocation3 + $0x128] sm:$0xff] %v968
      %1033 = vst [vmem:[#allocation3 + $0x130] sm:$0xff] %v969
      %1034 = vst [vmem:[#allocation3 + $0x138] sm:$0xff] %v970
      %1035 = vst [vmem:[#allocation3 + $0x140] sm:$0xff] %v971
      %1036 = vst [vmem:[#allocation3 + $0x148] sm:$0xff] %v972
      %1037 = vst [vmem:[#allocation3 + $0x150] sm:$0xff] %v973
      %1038 = vst [vmem:[#allocation3 + $0x158] sm:$0xff] %v974
      %1039 = vst [vmem:[#allocation3 + $0x160] sm:$0xff] %v975
      %1040 = vst [vmem:[#allocation3 + $0x168] sm:$0xff] %v976
      %1041 = vst [vmem:[#allocation3 + $0x170] sm:$0xff] %v977
      %1042 = vst [vmem:[#allocation3 + $0x178] sm:$0xff] %v978
      %1043 = vst [vmem:[#allocation3 + $0x180] sm:$0xff] %v979
      %1044 = vst [vmem:[#allocation3 + $0x188] sm:$0xff] %v980
      %1045 = vst [vmem:[#allocation3 + $0x190] sm:$0xff] %v981
      %1046 = vst [vmem:[#allocation3 + $0x198] sm:$0xff] %v982
      %1047 = vst [vmem:[#allocation3 + $0x1a0] sm:$0xff] %v983
      %1048 = vst [vmem:[#allocation3 + $0x1a8] sm:$0xff] %v984
      %1049 = vst [vmem:[#allocation3 + $0x1b0] sm:$0xff] %v985
      %1050 = vst [vmem:[#allocation3 + $0x1b8] sm:$0xff] %v986
      %1051 = vst [vmem:[#allocation3 + $0x1c0] sm:$0xff] %v987
      %1052 = vst [vmem:[#allocation3 + $0x1c8] sm:$0xff] %v988
      %1053 = vst [vmem:[#allocation3 + $0x1d0] sm:$0xff] %v989
      %1054 = vst [vmem:[#allocation3 + $0x1d8] sm:$0xff] %v990
      %1055 = vst [vmem:[#allocation3 + $0x1e0] sm:$0xff] %v991
      %1056 = vst [vmem:[#allocation3 + $0x1e8] sm:$0xff] %v992
      %1057 = vst [vmem:[#allocation3 + $0x1f0] sm:$0xff] %v993
      %1058 = vst [vmem:[#allocation3 + $0x1f8] sm:$0xff] %v994
    $region21: #{self_attention_forward.5} parent=1 // pred_fallthru
      _
    // Predicated region
    $region22: #{self_attention_forward.5} parent=1 // pred_check
      _
    $region23: #{self_attention_forward.5} parent=1 // pred_check_branch
      %1060 = sbr.rel (0) target = $region25
    $region24: #{self_attention_forward.5} parent=1 // pred_region
      %s1062 = ssub.s32 8192, 8192
      %1063 = vsyncadd [#allocation4], %s1062
      %s1064 = sshll.u32 [#allocation3], 4
      %s1065 = int_to_ptr.vmem [resolvable:$true] %s1064
      %1070 = dma.vmem_to_hbm [thread:$0]  %s1065, 8192, %s3, [#allocation4], 256, 256, 16
    $region25: #{self_attention_forward.5} parent=1 // pred_fallthru
      _
    // Predicated region
    $region26: #{self_attention_forward.5} parent=1 // pred_check
      _
    $region27: #{self_attention_forward.5} parent=1 // pred_check_branch
      %1072 = sbr.rel (0) target = $region29
    $region28: #{self_attention_forward.5} parent=1 // pred_region
      %1073 = dma.done [#allocation4], 8192
    $region29: #{self_attention_forward.5} parent=1 // pred_fallthru
      _
    %1074 = vsyncpa [#allocation4], 1

// kernel: self_attention_forward.3
$region0: #{self_attention_forward.3}
  #allocation0 [shape = 'u32[]', space=smem, size = 0x4, offset = 0x4, fixed_abs, tag = 'smem constant byte address 0x4 - core index']
  #allocation1 [shape = 'u32[144,128]{1,0:T(1,128)}', space=vmem, size = 0x12000, scoped, tag = 'internal scratch']
  #allocation2 [shape = 'f32[256,256]{1,0:T(8,128)}', space=vmem, size = 0x40000, scoped, tag = 'scratch operand']
  %s0 = inlined_call_operand.hbm [shape: f32[256,256], index: 0, kind: input, shape index: {}]
  %s1 = inlined_call_operand.hbm [shape: bf16[256,768], index: 1, kind: input, shape index: {}]
  %s2 = inlined_call_operand.vmem [shape: f32[1,768], index: 2, kind: input, shape index: {}]
  %s3 = inlined_call_operand.vmem [shape: bf16[256,768], index: 3, kind: output, shape index: {}]
  %s4 = sld [smem:[#allocation0]]
  $region95: #{self_attention_forward.3} parent=0
    _
  %s6 = ssub.s32 1, %s4
  %s7 = scalar_select 0, %s6, %s4
  $region1: #{self_attention_forward.3} parent=0
    #allocation3 [shape = 'u8[262144]{0}', space=vmem, size = 0x40000, scoped, tag = 'input window, operand 0, single buffered']
    #allocation4 [shape = 's32[2]{0}', space=sflag, size = 0x8, scoped, tag = 'scoped memory for self_attention_forward.3']
    #allocation5 [shape = 'u8[262144]{0}', space=vmem, size = 0x40000, scoped, tag = 'input window, operand 1']
    #allocation6 [shape = 's32[2]{0}', space=sflag, size = 0x8, scoped, tag = 'scoped memory for self_attention_forward.3']
    #allocation7 [shape = 'u8[262144]{0}', space=vmem, size = 0x40000, scoped, tag = 'output window, operand 0']
    %8 = vsyncpa [#allocation4], 0
    %9 = vsyncpa [#allocation6], 0
    %s10 = scalar_lea.sflag [#allocation6], 1
    %11 = vsyncpa %s10, 0
    loop: start=0, step=1, limit=5
    $region2: #{self_attention_forward.3} parent=1 // loop_pre_header
      _
    $region3: #{self_attention_forward.3} parent=1 // loop_header
      %s13 = sphi 0, %s17
      %p14 = scmp.ge.s32.totalorder %s13, 5
      %s20 = sphi 0, %s39
      %s21 = sphi 0, %s35
      %s22 = sphi 0, %s31
      %s23 = sphi 0, %s20
      %s24 = sphi 0, %s21
      %s25 = sphi 0, %s22
      %s26 = sphi 0, %s23
      %s27 = sphi 0, %s24
      %s28 = sphi 0, %s25
      %s44 = sphi 0, %s46
      %s47 = sphi 0, %s44
      %s48 = sphi 0, %s47
      %s64 = sphi 0, %s48
      %s72 = sphi 0, %s74
      %s75 = sphi 0, %s72
      %s76 = sphi 0, %s75
      %s92 = sphi 0, %s76
      %s98 = sphi 0, %s100
      %s101 = sphi 0, %s98
      %s102 = sphi 0, %s101
      %s118 = sphi 0, %s102
      %s126 = sphi 0, %s128
      %s129 = sphi 0, %s126
      %s130 = sphi 0, %s129
      %s146 = sphi 0, %s130
    $region4: #{self_attention_forward.3} parent=1 // loop_header_branch
      %16 = sbr.rel (%p14) target = $region8
    $region5: #{self_attention_forward.3} parent=1 // loop_body
      %s18 = ssub.s32 %s13, 1
      %s19 = ssub.s32 %s13, 2
      %s29 = sadd.s32 1, %s22
      %p30 = scmp.ge.s32.totalorder %s29, 1
      %s31 = scalar_select %p30, 0, %s29
      %s32 = sadd.s32 1, %s21
      %s33 = scalar_select %p30, %s32, %s21
      %p34 = scmp.ge.s32.totalorder %s33, 3
      %s35 = scalar_select %p34, 0, %s33
      %s36 = sadd.s32 1, %s20
      %s37 = scalar_select %p34, %s36, %s20
      %p38 = scmp.ge.s32.totalorder %s37, 1
      %s39 = scalar_select %p38, 0, %s37
      %s40 = ssub.s32 %s20, %s39
      %s41 = ssub.s32 %s22, %s31
      %s42 = sor.u32 %s40, %s41
      %p43 = scmp.eq.s32.totalorder %s42, 0
      %s45 = sadd.s32 %s44, 1
      %s46 = scalar_select %p43, %s44, %s45
      %p49 = pneg %p43
      %p50 = scmp.eq.s32.totalorder %s13, 2
      %p51 = por %p49, %p50
      %p52 = scmp.ne.s32.totalorder %s44, %s47
      %p53 = scmp.eq.s32.totalorder %s13, 0
      %p54 = por %p52, %p53
      %p55 = scmp.ne.s32.totalorder %s44, %s47
      %p56 = scmp.eq.s32.totalorder %s18, 2
      %p57 = por %p55, %p56
      %p58 = scmp.ne.s32.totalorder %s47, %s48
      %p59 = scmp.eq.s32.totalorder %s18, 0
      %p60 = por %p58, %p59
      %p61 = scmp.ne.s32.totalorder %s47, %s48
      %p62 = scmp.eq.s32.totalorder %s19, 2
      %p63 = por %p61, %p62
      %p65 = scmp.ne.s32.totalorder %s48, %s64
      %p66 = scmp.eq.s32.totalorder %s19, 0
      %p67 = por %p65, %p66
      %s68 = ssub.s32 %s22, %s31
      %s69 = ssub.s32 %s21, %s35
      %s70 = sor.u32 %s68, %s69
      %p71 = scmp.eq.s32.totalorder %s70, 0
      %s73 = sadd.s32 %s72, 1
      %s74 = scalar_select %p71, %s72, %s73
      %p77 = pneg %p71
      %p78 = scmp.eq.s32.totalorder %s13, 2
      %p79 = por %p77, %p78
      %p80 = scmp.ne.s32.totalorder %s72, %s75
      %p81 = scmp.eq.s32.totalorder %s13, 0
      %p82 = por %p80, %p81
      %p83 = scmp.ne.s32.totalorder %s72, %s75
      %p84 = scmp.eq.s32.totalorder %s18, 2
      %p85 = por %p83, %p84
      %p86 = scmp.ne.s32.totalorder %s75, %s76
      %p87 = scmp.eq.s32.totalorder %s18, 0
      %p88 = por %p86, %p87
      %p89 = scmp.ne.s32.totalorder %s75, %s76
      %p90 = scmp.eq.s32.totalorder %s19, 2
      %p91 = por %p89, %p90
      %p93 = scmp.ne.s32.totalorder %s76, %s92
      %p94 = scmp.eq.s32.totalorder %s19, 0
      %p95 = por %p93, %p94
      %s96 = ssub.s32 %s21, %s35
      %p97 = scmp.eq.s32.totalorder %s96, 0
      %s99 = sadd.s32 %s98, 1
      %s100 = scalar_select %p97, %s98, %s99
      %p103 = pneg %p97
      %p104 = scmp.eq.s32.totalorder %s13, 2
      %p105 = por %p103, %p104
      %p106 = scmp.ne.s32.totalorder %s98, %s101
      %p107 = scmp.eq.s32.totalorder %s13, 0
      %p108 = por %p106, %p107
      %p109 = scmp.ne.s32.totalorder %s98, %s101
      %p110 = scmp.eq.s32.totalorder %s18, 2
      %p111 = por %p109, %p110
      %p112 = scmp.ne.s32.totalorder %s101, %s102
      %p113 = scmp.eq.s32.totalorder %s18, 0
      %p114 = por %p112, %p113
      %p115 = scmp.ne.s32.totalorder %s101, %s102
      %p116 = scmp.eq.s32.totalorder %s19, 2
      %p117 = por %p115, %p116
      %p119 = scmp.ne.s32.totalorder %s102, %s118
      %p120 = scmp.eq.s32.totalorder %s19, 0
      %p121 = por %p119, %p120
      %s122 = ssub.s32 %s20, %s39
      %s123 = ssub.s32 %s21, %s35
      %s124 = sor.u32 %s122, %s123
      %p125 = scmp.eq.s32.totalorder %s124, 0
      %s127 = sadd.s32 %s126, 1
      %s128 = scalar_select %p125, %s126, %s127
      %p131 = pneg %p125
      %p132 = scmp.eq.s32.totalorder %s13, 2
      %p133 = por %p131, %p132
      %p134 = scmp.ne.s32.totalorder %s126, %s129
      %p135 = scmp.eq.s32.totalorder %s13, 0
      %p136 = por %p134, %p135
      %p137 = scmp.ne.s32.totalorder %s126, %s129
      %p138 = scmp.eq.s32.totalorder %s18, 2
      %p139 = por %p137, %p138
      %p140 = scmp.ne.s32.totalorder %s129, %s130
      %p141 = scmp.eq.s32.totalorder %s18, 0
      %p142 = por %p140, %p141
      %p143 = scmp.ne.s32.totalorder %s129, %s130
      %p144 = scmp.eq.s32.totalorder %s19, 2
      %p145 = por %p143, %p144
      %p147 = scmp.ne.s32.totalorder %s130, %s146
      %p148 = scmp.eq.s32.totalorder %s19, 0
      %p149 = por %p147, %p148
      %p150 = scmp.le.s32.totalorder 1, %s13
      %p151 = scmp.lt.s32.totalorder %s13, 4
      %p152 = pnand %p150, %p151
      %p153 = pneg %p152
      // Predicated region
      $region9: #{self_attention_forward.3} parent=5 // pred_check
        _
      $region10: #{self_attention_forward.3} parent=5 // pred_check_branch
        %155 = sbr.rel (%p152) target = $region12
      $region11: #{self_attention_forward.3} parent=5 // pred_region
        %s156 = ssub.s32 %s13, 1
        // Predicated region
        $region13: #{self_attention_forward.3} parent=11 // pred_check
          %p157 = pneg %p60
        $region14: #{self_attention_forward.3} parent=11 // pred_check_branch
          %159 = sbr.rel (%p157) target = $region16
        $region15: #{self_attention_forward.3} parent=11 // pred_region
          %s160 = smul.u32 32, %s23
          %s161 = smul.u32 2, %s25
          %s163 = ssub.s32 8192, 8192
          %164 = vsyncadd [#allocation4], %s163
          %s165 = smul.addr %s160, 2
          %s166 = sadd.s32 %s161, %s165
          %s167 = smul.addr %s166, 128
          %s168 = scalar_lea.hbm %s0, %s167
          %s169 = sshll.u32 [#allocation3], 4
          %s170 = int_to_ptr.vmem [resolvable:$true] %s169
          %175 = dma.hbm_to_vmem [thread:$0]  %s168, 8192, %s170, [#allocation4], 256, 256, 16
        $region16: #{self_attention_forward.3} parent=11 // pred_fallthru
          _
      $region12: #{self_attention_forward.3} parent=5 // pred_fallthru
        _
      %p176 = scmp.lt.s32.totalorder %s13, 3
      // Predicated region
      $region17: #{self_attention_forward.3} parent=5 // pred_check
        %p177 = pneg %p176
      $region18: #{self_attention_forward.3} parent=5 // pred_check_branch
        %179 = sbr.rel (%p177) target = $region20
      $region19: #{self_attention_forward.3} parent=5 // pred_region
        // Predicated region
        $region21: #{self_attention_forward.3} parent=19 // pred_check
          %p180 = pneg %p82
        $region22: #{self_attention_forward.3} parent=19 // pred_check_branch
          %182 = sbr.rel (%p180) target = $region24
        $region23: #{self_attention_forward.3} parent=19 // pred_region
          %s183 = sand.u32 %s72, 1
          %s184 = scalar_lea.sflag [#allocation6], %s183
          %s185 = sand.u32 %s72, 1
          %s186 = smul.addr %s185, 256
          %s187 = scalar_lea.vmem [#allocation5], %s186
          %s188 = smul.u32 32, %s22
          %s189 = smul.u32 2, %s21
          %s191 = ssub.s32 4096, 4096
          %192 = vsyncadd %s184, %s191
          %s193 = smul.addr %s188, 6
          %s194 = sadd.s32 %s189, %s193
          %s195 = smul.addr %s194, 64
          %s196 = scalar_lea.hbm %s1, %s195
          %s197 = sshll.u32 %s187, 4
          %s198 = int_to_ptr.vmem [resolvable:$true] %s197
          %203 = dma.hbm_to_vmem [thread:$0]  %s196, 4096, %s198, %s184, 384, 128, 8
        $region24: #{self_attention_forward.3} parent=19 // pred_fallthru
          _
        // Predicated region
        $region25: #{self_attention_forward.3} parent=19 // pred_check
          %p204 = pneg %p108
        $region26: #{self_attention_forward.3} parent=19 // pred_check_branch
          %206 = sbr.rel (%p204) target = $region28
        $region27: #{self_attention_forward.3} parent=19 // pred_region
          %s207 = smul.u32 2, %s21
          %p208 = scmp.lt.s32.totalorder %s207, 5
          %s209 = scalar_select %p208, %s207, 5
          %s210 = scalar_lea.vmem %s2, %s209
          %s211 = smul.u32 2, %s21
        $region28: #{self_attention_forward.3} parent=19 // pred_fallthru
          _
      $region20: #{self_attention_forward.3} parent=5 // pred_fallthru
        _
      %p212 = scmp.le.s32.totalorder 1, %s13
      %p213 = scmp.lt.s32.totalorder %s13, 4
      %p214 = pnand %p212, %p213
      %p215 = pneg %p214
      // Predicated region
      $region29: #{self_attention_forward.3} parent=5 // pred_check
        _
      $region30: #{self_attention_forward.3} parent=5 // pred_check_branch
        %217 = sbr.rel (%p214) target = $region32
      $region31: #{self_attention_forward.3} parent=5 // pred_region
        %s218 = ssub.s32 %s13, 1
        // Predicated region
        $region33: #{self_attention_forward.3} parent=31 // pred_check
          %p219 = pneg %p60
        $region34: #{self_attention_forward.3} parent=31 // pred_check_branch
          %221 = sbr.rel (%p219) target = $region36
        $region35: #{self_attention_forward.3} parent=31 // pred_region
          %222 = dma.done [#allocation4], 8192
        $region36: #{self_attention_forward.3} parent=31 // pred_fallthru
          _
        %s223 = sand.u32 %s75, 1
        %s224 = scalar_lea.sflag [#allocation6], %s223
        %s225 = sand.u32 %s75, 1
        %s226 = smul.addr %s225, 256
        %s227 = scalar_lea.vmem [#allocation5], %s226
        // Predicated region
        $region37: #{self_attention_forward.3} parent=31 // pred_check
          %p228 = pneg %p88
        $region38: #{self_attention_forward.3} parent=31 // pred_check_branch
          %230 = sbr.rel (%p228) target = $region40
        $region39: #{self_attention_forward.3} parent=31 // pred_region
          %231 = dma.done %s224, 4096
        $region40: #{self_attention_forward.3} parent=31 // pred_fallthru
          _
        %p232 = pneg %p60
        %p233 = pneg %p57
        %s234 = sand.u32 %s75, 1
        %s235 = scalar_lea.sflag [#allocation6], %s234
        %s236 = sand.u32 %s75, 1
        %s237 = smul.addr %s236, 256
        %s238 = scalar_lea.vmem [#allocation5], %s237
        %p239 = pneg %p88
        %p240 = pneg %p85
        %s241 = smul.u32 2, %s24
        %p242 = scmp.lt.s32.totalorder %s241, 5
        %s243 = scalar_select %p242, %s241, 5
        %s244 = scalar_lea.vmem %s2, %s243
        %p245 = pneg %p114
        %p246 = pneg %p111
        %p247 = pneg %p142
        %p248 = pneg %p139
        %s249 = sand.u32 %s129, 1
        %s250 = sand.u32 %s129, 1
        %s251 = smul.addr %s250, 256
        %s252 = scalar_lea.vmem [#allocation7], %s251
        %s253 = smul.u32 32, %s23
        %s254 = smul.u32 2, %s25
        %s255 = smul.u32 32, %s25
        %s256 = smul.u32 2, %s24
        %s257 = smul.u32 2, %s24
        %p258 = scmp.lt.s32.totalorder %s257, 5
        %s259 = scalar_select %p258, %s257, 5
        %s260 = scalar_lea.vmem %s2, %s259
        %s261 = smul.u32 2, %s24
        %s262 = smul.u32 32, %s23
        %s263 = smul.u32 2, %s24
        %p264 = scmp.eq.s32.totalorder %s25, 0
        // Predicated region
        $region41: #{self_attention_forward.3} parent=31 // pred_check
          %p265 = pneg %p264
        $region42: #{self_attention_forward.3} parent=31 // pred_check_branch
          %267 = sbr.rel (%p265) target = $region44
        $region43: #{self_attention_forward.3} parent=31 // pred_region
          %268 = vst [vmem:[#allocation2] sm:$0xff] 0.0
          %269 = vst [vmem:[#allocation2 + $0x8] sm:$0xff] 0.0
          %270 = vst [vmem:[#allocation2 + $0x10] sm:$0xff] 0.0
          %271 = vst [vmem:[#allocation2 + $0x18] sm:$0xff] 0.0
          %272 = vst [vmem:[#allocation2 + $0x20] sm:$0xff] 0.0
          %273 = vst [vmem:[#allocation2 + $0x28] sm:$0xff] 0.0
          %274 = vst [vmem:[#allocation2 + $0x30] sm:$0xff] 0.0
          %275 = vst [vmem:[#allocation2 + $0x38] sm:$0xff] 0.0
          %276 = vst [vmem:[#allocation2 + $0x40] sm:$0xff] 0.0
          %277 = vst [vmem:[#allocation2 + $0x48] sm:$0xff] 0.0
          %278 = vst [vmem:[#allocation2 + $0x50] sm:$0xff] 0.0
          %279 = vst [vmem:[#allocation2 + $0x58] sm:$0xff] 0.0
          %280 = vst [vmem:[#allocation2 + $0x60] sm:$0xff] 0.0
          %281 = vst [vmem:[#allocation2 + $0x68] sm:$0xff] 0.0
          %282 = vst [vmem:[#allocation2 + $0x70] sm:$0xff] 0.0
          %283 = vst [vmem:[#allocation2 + $0x78] sm:$0xff] 0.0
          %284 = vst [vmem:[#allocation2 + $0x80] sm:$0xff] 0.0
          %285 = vst [vmem:[#allocation2 + $0x88] sm:$0xff] 0.0
          %286 = vst [vmem:[#allocation2 + $0x90] sm:$0xff] 0.0
          %287 = vst [vmem:[#allocation2 + $0x98] sm:$0xff] 0.0
          %288 = vst [vmem:[#allocation2 + $0xa0] sm:$0xff] 0.0
          %289 = vst [vmem:[#allocation2 + $0xa8] sm:$0xff] 0.0
          %290 = vst [vmem:[#allocation2 + $0xb0] sm:$0xff] 0.0
          %291 = vst [vmem:[#allocation2 + $0xb8] sm:$0xff] 0.0
          %292 = vst [vmem:[#allocation2 + $0xc0] sm:$0xff] 0.0
          %293 = vst [vmem:[#allocation2 + $0xc8] sm:$0xff] 0.0
          %294 = vst [vmem:[#allocation2 + $0xd0] sm:$0xff] 0.0
          %295 = vst [vmem:[#allocation2 + $0xd8] sm:$0xff] 0.0
          %296 = vst [vmem:[#allocation2 + $0xe0] sm:$0xff] 0.0
          %297 = vst [vmem:[#allocation2 + $0xe8] sm:$0xff] 0.0
          %298 = vst [vmem:[#allocation2 + $0xf0] sm:$0xff] 0.0
          %299 = vst [vmem:[#allocation2 + $0xf8] sm:$0xff] 0.0
          %300 = vst [vmem:[#allocation2 + $0x100] sm:$0xff] 0.0
          %301 = vst [vmem:[#allocation2 + $0x108] sm:$0xff] 0.0
          %302 = vst [vmem:[#allocation2 + $0x110] sm:$0xff] 0.0
          %303 = vst [vmem:[#allocation2 + $0x118] sm:$0xff] 0.0
          %304 = vst [vmem:[#allocation2 + $0x120] sm:$0xff] 0.0
          %305 = vst [vmem:[#allocation2 + $0x128] sm:$0xff] 0.0
          %306 = vst [vmem:[#allocation2 + $0x130] sm:$0xff] 0.0
          %307 = vst [vmem:[#allocation2 + $0x138] sm:$0xff] 0.0
          %308 = vst [vmem:[#allocation2 + $0x140] sm:$0xff] 0.0
          %309 = vst [vmem:[#allocation2 + $0x148] sm:$0xff] 0.0
          %310 = vst [vmem:[#allocation2 + $0x150] sm:$0xff] 0.0
          %311 = vst [vmem:[#allocation2 + $0x158] sm:$0xff] 0.0
          %312 = vst [vmem:[#allocation2 + $0x160] sm:$0xff] 0.0
          %313 = vst [vmem:[#allocation2 + $0x168] sm:$0xff] 0.0
          %314 = vst [vmem:[#allocation2 + $0x170] sm:$0xff] 0.0
          %315 = vst [vmem:[#allocation2 + $0x178] sm:$0xff] 0.0
          %316 = vst [vmem:[#allocation2 + $0x180] sm:$0xff] 0.0
          %317 = vst [vmem:[#allocation2 + $0x188] sm:$0xff] 0.0
          %318 = vst [vmem:[#allocation2 + $0x190] sm:$0xff] 0.0
          %319 = vst [vmem:[#allocation2 + $0x198] sm:$0xff] 0.0
          %320 = vst [vmem:[#allocation2 + $0x1a0] sm:$0xff] 0.0
          %321 = vst [vmem:[#allocation2 + $0x1a8] sm:$0xff] 0.0
          %322 = vst [vmem:[#allocation2 + $0x1b0] sm:$0xff] 0.0
          %323 = vst [vmem:[#allocation2 + $0x1b8] sm:$0xff] 0.0
          %324 = vst [vmem:[#allocation2 + $0x1c0] sm:$0xff] 0.0
          %325 = vst [vmem:[#allocation2 + $0x1c8] sm:$0xff] 0.0
          %326 = vst [vmem:[#allocation2 + $0x1d0] sm:$0xff] 0.0
          %327 = vst [vmem:[#allocation2 + $0x1d8] sm:$0xff] 0.0
          %328 = vst [vmem:[#allocation2 + $0x1e0] sm:$0xff] 0.0
          %329 = vst [vmem:[#allocation2 + $0x1e8] sm:$0xff] 0.0
          %330 = vst [vmem:[#allocation2 + $0x1f0] sm:$0xff] 0.0
          %331 = vst [vmem:[#allocation2 + $0x1f8] sm:$0xff] 0.0
        $region44: #{self_attention_forward.3} parent=31 // pred_fallthru
          _
        %v332 = vld [vmem:[#allocation2] sm:$0xff]
        %v333 = vld [vmem:[#allocation2 + $0x8] sm:$0xff]
        %v334 = vld [vmem:[#allocation2 + $0x10] sm:$0xff]
        %v335 = vld [vmem:[#allocation2 + $0x18] sm:$0xff]
        %v336 = vld [vmem:[#allocation2 + $0x20] sm:$0xff]
        %v337 = vld [vmem:[#allocation2 + $0x28] sm:$0xff]
        %v338 = vld [vmem:[#allocation2 + $0x30] sm:$0xff]
        %v339 = vld [vmem:[#allocation2 + $0x38] sm:$0xff]
        %v340 = vld [vmem:[#allocation2 + $0x40] sm:$0xff]
        %v341 = vld [vmem:[#allocation2 + $0x48] sm:$0xff]
        %v342 = vld [vmem:[#allocation2 + $0x50] sm:$0xff]
        %v343 = vld [vmem:[#allocation2 + $0x58] sm:$0xff]
        %v344 = vld [vmem:[#allocation2 + $0x60] sm:$0xff]
        %v345 = vld [vmem:[#allocation2 + $0x68] sm:$0xff]
        %v346 = vld [vmem:[#allocation2 + $0x70] sm:$0xff]
        %v347 = vld [vmem:[#allocation2 + $0x78] sm:$0xff]
        %v348 = vld [vmem:[#allocation2 + $0x80] sm:$0xff]
        %v349 = vld [vmem:[#allocation2 + $0x88] sm:$0xff]
        %v350 = vld [vmem:[#allocation2 + $0x90] sm:$0xff]
        %v351 = vld [vmem:[#allocation2 + $0x98] sm:$0xff]
        %v352 = vld [vmem:[#allocation2 + $0xa0] sm:$0xff]
        %v353 = vld [vmem:[#allocation2 + $0xa8] sm:$0xff]
        %v354 = vld [vmem:[#allocation2 + $0xb0] sm:$0xff]
        %v355 = vld [vmem:[#allocation2 + $0xb8] sm:$0xff]
        %v356 = vld [vmem:[#allocation2 + $0xc0] sm:$0xff]
        %v357 = vld [vmem:[#allocation2 + $0xc8] sm:$0xff]
        %v358 = vld [vmem:[#allocation2 + $0xd0] sm:$0xff]
        %v359 = vld [vmem:[#allocation2 + $0xd8] sm:$0xff]
        %v360 = vld [vmem:[#allocation2 + $0xe0] sm:$0xff]
        %v361 = vld [vmem:[#allocation2 + $0xe8] sm:$0xff]
        %v362 = vld [vmem:[#allocation2 + $0xf0] sm:$0xff]
        %v363 = vld [vmem:[#allocation2 + $0xf8] sm:$0xff]
        %v364 = vld [vmem:[#allocation2 + $0x100] sm:$0xff]
        %v365 = vld [vmem:[#allocation2 + $0x108] sm:$0xff]
        %v366 = vld [vmem:[#allocation2 + $0x110] sm:$0xff]
        %v367 = vld [vmem:[#allocation2 + $0x118] sm:$0xff]
        %v368 = vld [vmem:[#allocation2 + $0x120] sm:$0xff]
        %v369 = vld [vmem:[#allocation2 + $0x128] sm:$0xff]
        %v370 = vld [vmem:[#allocation2 + $0x130] sm:$0xff]
        %v371 = vld [vmem:[#allocation2 + $0x138] sm:$0xff]
        %v372 = vld [vmem:[#allocation2 + $0x140] sm:$0xff]
        %v373 = vld [vmem:[#allocation2 + $0x148] sm:$0xff]
        %v374 = vld [vmem:[#allocation2 + $0x150] sm:$0xff]
        %v375 = vld [vmem:[#allocation2 + $0x158] sm:$0xff]
        %v376 = vld [vmem:[#allocation2 + $0x160] sm:$0xff]
        %v377 = vld [vmem:[#allocation2 + $0x168] sm:$0xff]
        %v378 = vld [vmem:[#allocation2 + $0x170] sm:$0xff]
        %v379 = vld [vmem:[#allocation2 + $0x178] sm:$0xff]
        %v380 = vld [vmem:[#allocation2 + $0x180] sm:$0xff]
        %v381 = vld [vmem:[#allocation2 + $0x188] sm:$0xff]
        %v382 = vld [vmem:[#allocation2 + $0x190] sm:$0xff]
        %v383 = vld [vmem:[#allocation2 + $0x198] sm:$0xff]
        %v384 = vld [vmem:[#allocation2 + $0x1a0] sm:$0xff]
        %v385 = vld [vmem:[#allocation2 + $0x1a8] sm:$0xff]
        %v386 = vld [vmem:[#allocation2 + $0x1b0] sm:$0xff]
        %v387 = vld [vmem:[#allocation2 + $0x1b8] sm:$0xff]
        %v388 = vld [vmem:[#allocation2 + $0x1c0] sm:$0xff]
        %v389 = vld [vmem:[#allocation2 + $0x1c8] sm:$0xff]
        %v390 = vld [vmem:[#allocation2 + $0x1d0] sm:$0xff]
        %v391 = vld [vmem:[#allocation2 + $0x1d8] sm:$0xff]
        %v392 = vld [vmem:[#allocation2 + $0x1e0] sm:$0xff]
        %v393 = vld [vmem:[#allocation2 + $0x1e8] sm:$0xff]
        %v394 = vld [vmem:[#allocation2 + $0x1f0] sm:$0xff]
        %v395 = vld [vmem:[#allocation2 + $0x1f8] sm:$0xff]
        %v396 = vld [vmem:[#allocation3] sm:$0xff]
        %v397 = vld [vmem:[#allocation3 + $0x8] sm:$0xff]
        %v398 = vld [vmem:[#allocation3 + $0x10] sm:$0xff]
        %v399 = vld [vmem:[#allocation3 + $0x18] sm:$0xff]
        %v400 = vld [vmem:[#allocation3 + $0x20] sm:$0xff]
        %v401 = vld [vmem:[#allocation3 + $0x28] sm:$0xff]
        %v402 = vld [vmem:[#allocation3 + $0x30] sm:$0xff]
        %v403 = vld [vmem:[#allocation3 + $0x38] sm:$0xff]
        %v404 = vld [vmem:[#allocation3 + $0x40] sm:$0xff]
        %v405 = vld [vmem:[#allocation3 + $0x48] sm:$0xff]
        %v406 = vld [vmem:[#allocation3 + $0x50] sm:$0xff]
        %v407 = vld [vmem:[#allocation3 + $0x58] sm:$0xff]
        %v408 = vld [vmem:[#allocation3 + $0x60] sm:$0xff]
        %v409 = vld [vmem:[#allocation3 + $0x68] sm:$0xff]
        %v410 = vld [vmem:[#allocation3 + $0x70] sm:$0xff]
        %v411 = vld [vmem:[#allocation3 + $0x78] sm:$0xff]
        %v412 = vld [vmem:[#allocation3 + $0x80] sm:$0xff]
        %v413 = vld [vmem:[#allocation3 + $0x88] sm:$0xff]
        %v414 = vld [vmem:[#allocation3 + $0x90] sm:$0xff]
        %v415 = vld [vmem:[#allocation3 + $0x98] sm:$0xff]
        %v416 = vld [vmem:[#allocation3 + $0xa0] sm:$0xff]
        %v417 = vld [vmem:[#allocation3 + $0xa8] sm:$0xff]
        %v418 = vld [vmem:[#allocation3 + $0xb0] sm:$0xff]
        %v419 = vld [vmem:[#allocation3 + $0xb8] sm:$0xff]
        %v420 = vld [vmem:[#allocation3 + $0xc0] sm:$0xff]
        %v421 = vld [vmem:[#allocation3 + $0xc8] sm:$0xff]
        %v422 = vld [vmem:[#allocation3 + $0xd0] sm:$0xff]
        %v423 = vld [vmem:[#allocation3 + $0xd8] sm:$0xff]
        %v424 = vld [vmem:[#allocation3 + $0xe0] sm:$0xff]
        %v425 = vld [vmem:[#allocation3 + $0xe8] sm:$0xff]
        %v426 = vld [vmem:[#allocation3 + $0xf0] sm:$0xff]
        %v427 = vld [vmem:[#allocation3 + $0xf8] sm:$0xff]
        %v428 = vld [vmem:[#allocation3 + $0x100] sm:$0xff]
        %v429 = vld [vmem:[#allocation3 + $0x108] sm:$0xff]
        %v430 = vld [vmem:[#allocation3 + $0x110] sm:$0xff]
        %v431 = vld [vmem:[#allocation3 + $0x118] sm:$0xff]
        %v432 = vld [vmem:[#allocation3 + $0x120] sm:$0xff]
        %v433 = vld [vmem:[#allocation3 + $0x128] sm:$0xff]
        %v434 = vld [vmem:[#allocation3 + $0x130] sm:$0xff]
        %v435 = vld [vmem:[#allocation3 + $0x138] sm:$0xff]
        %v436 = vld [vmem:[#allocation3 + $0x140] sm:$0xff]
        %v437 = vld [vmem:[#allocation3 + $0x148] sm:$0xff]
        %v438 = vld [vmem:[#allocation3 + $0x150] sm:$0xff]
        %v439 = vld [vmem:[#allocation3 + $0x158] sm:$0xff]
        %v440 = vld [vmem:[#allocation3 + $0x160] sm:$0xff]
        %v441 = vld [vmem:[#allocation3 + $0x168] sm:$0xff]
        %v442 = vld [vmem:[#allocation3 + $0x170] sm:$0xff]
        %v443 = vld [vmem:[#allocation3 + $0x178] sm:$0xff]
        %v444 = vld [vmem:[#allocation3 + $0x180] sm:$0xff]
        %v445 = vld [vmem:[#allocation3 + $0x188] sm:$0xff]
        %v446 = vld [vmem:[#allocation3 + $0x190] sm:$0xff]
        %v447 = vld [vmem:[#allocation3 + $0x198] sm:$0xff]
        %v448 = vld [vmem:[#allocation3 + $0x1a0] sm:$0xff]
        %v449 = vld [vmem:[#allocation3 + $0x1a8] sm:$0xff]
        %v450 = vld [vmem:[#allocation3 + $0x1b0] sm:$0xff]
        %v451 = vld [vmem:[#allocation3 + $0x1b8] sm:$0xff]
        %v452 = vld [vmem:[#allocation3 + $0x1c0] sm:$0xff]
        %v453 = vld [vmem:[#allocation3 + $0x1c8] sm:$0xff]
        %v454 = vld [vmem:[#allocation3 + $0x1d0] sm:$0xff]
        %v455 = vld [vmem:[#allocation3 + $0x1d8] sm:$0xff]
        %v456 = vld [vmem:[#allocation3 + $0x1e0] sm:$0xff]
        %v457 = vld [vmem:[#allocation3 + $0x1e8] sm:$0xff]
        %v458 = vld [vmem:[#allocation3 + $0x1f0] sm:$0xff]
        %v459 = vld [vmem:[#allocation3 + $0x1f8] sm:$0xff]
        %v460 = vpack.c.bf16 %v398, %v396
        %v461 = vpack.c.bf16 %v399, %v397
        %v462 = vpack.c.bf16 %v402, %v400
        %v463 = vpack.c.bf16 %v403, %v401
        %v464 = vpack.c.bf16 %v406, %v404
        %v465 = vpack.c.bf16 %v407, %v405
        %v466 = vpack.c.bf16 %v410, %v408
        %v467 = vpack.c.bf16 %v411, %v409
        %v468 = vpack.c.bf16 %v414, %v412
        %v469 = vpack.c.bf16 %v415, %v413
        %v470 = vpack.c.bf16 %v418, %v416
        %v471 = vpack.c.bf16 %v419, %v417
        %v472 = vpack.c.bf16 %v422, %v420
        %v473 = vpack.c.bf16 %v423, %v421
        %v474 = vpack.c.bf16 %v426, %v424
        %v475 = vpack.c.bf16 %v427, %v425
        %v476 = vpack.c.bf16 %v430, %v428
        %v477 = vpack.c.bf16 %v431, %v429
        %v478 = vpack.c.bf16 %v434, %v432
        %v479 = vpack.c.bf16 %v435, %v433
        %v480 = vpack.c.bf16 %v438, %v436
        %v481 = vpack.c.bf16 %v439, %v437
        %v482 = vpack.c.bf16 %v442, %v440
        %v483 = vpack.c.bf16 %v443, %v441
        %v484 = vpack.c.bf16 %v446, %v444
        %v485 = vpack.c.bf16 %v447, %v445
        %v486 = vpack.c.bf16 %v450, %v448
        %v487 = vpack.c.bf16 %v451, %v449
        %v488 = vpack.c.bf16 %v454, %v452
        %v489 = vpack.c.bf16 %v455, %v453
        %v490 = vpack.c.bf16 %v458, %v456
        %v491 = vpack.c.bf16 %v459, %v457
        %v492 = vld [vmem:[%s227] sm:$0xff]
        %v493 = vld [vmem:[%s227 + $0x8] sm:$0xff]
        %v494 = vld [vmem:[%s227 + $0x10] sm:$0xff]
        %v495 = vld [vmem:[%s227 + $0x18] sm:$0xff]
        %v496 = vld [vmem:[%s227 + $0x20] sm:$0xff]
        %v497 = vld [vmem:[%s227 + $0x28] sm:$0xff]
        %v498 = vld [vmem:[%s227 + $0x30] sm:$0xff]
        %v499 = vld [vmem:[%s227 + $0x38] sm:$0xff]
        %v500 = vld [vmem:[%s227 + $0x40] sm:$0xff]
        %v501 = vld [vmem:[%s227 + $0x48] sm:$0xff]
        %v502 = vld [vmem:[%s227 + $0x50] sm:$0xff]
        %v503 = vld [vmem:[%s227 + $0x58] sm:$0xff]
        %v504 = vld [vmem:[%s227 + $0x60] sm:$0xff]
        %v505 = vld [vmem:[%s227 + $0x68] sm:$0xff]
        %v506 = vld [vmem:[%s227 + $0x70] sm:$0xff]
        %v507 = vld [vmem:[%s227 + $0x78] sm:$0xff]
        %v508 = vld [vmem:[%s227 + $0x80] sm:$0xff]
        %v509 = vld [vmem:[%s227 + $0x88] sm:$0xff]
        %v510 = vld [vmem:[%s227 + $0x90] sm:$0xff]
        %v511 = vld [vmem:[%s227 + $0x98] sm:$0xff]
        %v512 = vld [vmem:[%s227 + $0xa0] sm:$0xff]
        %v513 = vld [vmem:[%s227 + $0xa8] sm:$0xff]
        %v514 = vld [vmem:[%s227 + $0xb0] sm:$0xff]
        %v515 = vld [vmem:[%s227 + $0xb8] sm:$0xff]
        %v516 = vld [vmem:[%s227 + $0xc0] sm:$0xff]
        %v517 = vld [vmem:[%s227 + $0xc8] sm:$0xff]
        %v518 = vld [vmem:[%s227 + $0xd0] sm:$0xff]
        %v519 = vld [vmem:[%s227 + $0xd8] sm:$0xff]
        %v520 = vld [vmem:[%s227 + $0xe0] sm:$0xff]
        %v521 = vld [vmem:[%s227 + $0xe8] sm:$0xff]
        %v522 = vld [vmem:[%s227 + $0xf0] sm:$0xff]
        %v523 = vld [vmem:[%s227 + $0xf8] sm:$0xff]
        %v556 = vunpack.c.l.b16 %v492
        %v557 = vunpack.c.h.b16 %v492
        %v558 = vunpack.c.l.b16 %v493
        %v559 = vunpack.c.h.b16 %v493
        %v560 = vunpack.c.l.b16 %v494
        %v561 = vunpack.c.h.b16 %v494
        %v562 = vunpack.c.l.b16 %v495
        %v563 = vunpack.c.h.b16 %v495
        %v564 = vunpack.c.l.b16 %v496
        %v565 = vunpack.c.h.b16 %v496
        %v566 = vunpack.c.l.b16 %v497
        %v567 = vunpack.c.h.b16 %v497
        %v568 = vunpack.c.l.b16 %v498
        %v569 = vunpack.c.h.b16 %v498
        %v570 = vunpack.c.l.b16 %v499
        %v571 = vunpack.c.h.b16 %v499
        %v572 = vunpack.c.l.b16 %v500
        %v573 = vunpack.c.h.b16 %v500
        %v574 = vunpack.c.l.b16 %v501
        %v575 = vunpack.c.h.b16 %v501
        %v576 = vunpack.c.l.b16 %v502
        %v577 = vunpack.c.h.b16 %v502
        %v578 = vunpack.c.l.b16 %v503
        %v579 = vunpack.c.h.b16 %v503
        %v580 = vunpack.c.l.b16 %v504
        %v581 = vunpack.c.h.b16 %v504
        %v582 = vunpack.c.l.b16 %v505
        %v583 = vunpack.c.h.b16 %v505
        %v584 = vunpack.c.l.b16 %v506
        %v585 = vunpack.c.h.b16 %v506
        %v586 = vunpack.c.l.b16 %v507
        %v587 = vunpack.c.h.b16 %v507
        %v588 = vunpack.c.l.b16 %v508
        %v589 = vunpack.c.h.b16 %v508
        %v590 = vunpack.c.l.b16 %v509
        %v591 = vunpack.c.h.b16 %v509
        %v592 = vunpack.c.l.b16 %v510
        %v593 = vunpack.c.h.b16 %v510
        %v594 = vunpack.c.l.b16 %v511
        %v595 = vunpack.c.h.b16 %v511
        %v596 = vunpack.c.l.b16 %v512
        %v597 = vunpack.c.h.b16 %v512
        %v598 = vunpack.c.l.b16 %v513
        %v599 = vunpack.c.h.b16 %v513
        %v600 = vunpack.c.l.b16 %v514
        %v601 = vunpack.c.h.b16 %v514
        %v602 = vunpack.c.l.b16 %v515
        %v603 = vunpack.c.h.b16 %v515
        %v604 = vunpack.c.l.b16 %v516
        %v605 = vunpack.c.h.b16 %v516
        %v606 = vunpack.c.l.b16 %v517
        %v607 = vunpack.c.h.b16 %v517
        %v608 = vunpack.c.l.b16 %v518
        %v609 = vunpack.c.h.b16 %v518
        %v610 = vunpack.c.l.b16 %v519
        %v611 = vunpack.c.h.b16 %v519
        %v612 = vunpack.c.l.b16 %v520
        %v613 = vunpack.c.h.b16 %v520
        %v614 = vunpack.c.l.b16 %v521
        %v615 = vunpack.c.h.b16 %v521
        %v616 = vunpack.c.l.b16 %v522
        %v617 = vunpack.c.h.b16 %v522
        %v618 = vunpack.c.l.b16 %v523
        %v619 = vunpack.c.h.b16 %v523
        %v620 = vpack.c.b16 %v558, %v556
        %v621 = vpack.c.b16 %v559, %v557
        %v622 = vpack.c.b16 %v562, %v560
        %v623 = vpack.c.b16 %v563, %v561
        %v624 = vpack.c.b16 %v566, %v564
        %v625 = vpack.c.b16 %v567, %v565
        %v626 = vpack.c.b16 %v570, %v568
        %v627 = vpack.c.b16 %v571, %v569
        %v628 = vpack.c.b16 %v574, %v572
        %v629 = vpack.c.b16 %v575, %v573
        %v630 = vpack.c.b16 %v578, %v576
        %v631 = vpack.c.b16 %v579, %v577
        %v632 = vpack.c.b16 %v582, %v580
        %v633 = vpack.c.b16 %v583, %v581
        %v634 = vpack.c.b16 %v586, %v584
        %v635 = vpack.c.b16 %v587, %v585
        %v636 = vpack.c.b16 %v590, %v588
        %v637 = vpack.c.b16 %v591, %v589
        %v638 = vpack.c.b16 %v594, %v592
        %v639 = vpack.c.b16 %v595, %v593
        %v640 = vpack.c.b16 %v598, %v596
        %v641 = vpack.c.b16 %v599, %v597
        %v642 = vpack.c.b16 %v602, %v600
        %v643 = vpack.c.b16 %v603, %v601
        %v644 = vpack.c.b16 %v606, %v604
        %v645 = vpack.c.b16 %v607, %v605
        %v646 = vpack.c.b16 %v610, %v608
        %v647 = vpack.c.b16 %v611, %v609
        %v648 = vpack.c.b16 %v614, %v612
        %v649 = vpack.c.b16 %v615, %v613
        %v650 = vpack.c.b16 %v618, %v616
        %v651 = vpack.c.b16 %v619, %v617
        %684 = vmatprep.subr.bf16.mxu0 %v621
        %685 = vmatpush1.bf16.msra.mxu0 %v620
        %686 = vmatprep.subr.bf16.mxu0 %v623
        %687 = vmatpush1.bf16.msra.mxu0 %v622
        %688 = vmatprep.subr.bf16.mxu0 %v625
        %689 = vmatpush1.bf16.msra.mxu0 %v624
        %690 = vmatprep.subr.bf16.mxu0 %v627
        %691 = vmatpush1.bf16.msra.mxu0 %v626
        %692 = vmatprep.subr.bf16.mxu0 %v629
        %693 = vmatpush1.bf16.msra.mxu0 %v628
        %694 = vmatprep.subr.bf16.mxu0 %v631
        %695 = vmatpush1.bf16.msra.mxu0 %v630
        %696 = vmatprep.subr.bf16.mxu0 %v633
        %697 = vmatpush1.bf16.msra.mxu0 %v632
        %698 = vmatprep.subr.bf16.mxu0 %v635
        %699 = vmatpush1.bf16.msra.mxu0 %v634
        %700 = vmatprep.subr.bf16.mxu0 %v637
        %701 = vmatpush1.bf16.msra.mxu0 %v636
        %702 = vmatprep.subr.bf16.mxu0 %v639
        %703 = vmatpush1.bf16.msra.mxu0 %v638
        %704 = vmatprep.subr.bf16.mxu0 %v641
        %705 = vmatpush1.bf16.msra.mxu0 %v640
        %706 = vmatprep.subr.bf16.mxu0 %v643
        %707 = vmatpush1.bf16.msra.mxu0 %v642
        %708 = vmatprep.subr.bf16.mxu0 %v645
        %709 = vmatpush1.bf16.msra.mxu0 %v644
        %710 = vmatprep.subr.bf16.mxu0 %v647
        %711 = vmatpush1.bf16.msra.mxu0 %v646
        %712 = vmatprep.subr.bf16.mxu0 %v649
        %713 = vmatpush1.bf16.msra.mxu0 %v648
        %714 = vmatprep.subr.bf16.mxu0 %v651
        %715 = vmatpush1.bf16.msra.mxu0 %v650
        %716 = vmatprep.mubr.bf16.mxu0 %v461
        %717 = vmatmul.mubr.bf16.gmra.mrb[0].mxu0 %v460
        %v718 = vpop.f32.mrb[0].mxu0
        %v719 = vadd.f32 0.0, %v718
        %v720 = vpop.f32.mrb[0].mxu0
        %v721 = vadd.f32 0.0, %v720
        %v722 = vpop.f32.mrb[0].mxu0
        %v723 = vadd.f32 0.0, %v722
        %v724 = vpop.f32.mrb[0].mxu0
        %v725 = vadd.f32 0.0, %v724
        %726 = vmatprep.mubr.bf16.mxu0 %v463
        %727 = vmatmul.mubr.bf16.gmra.mrb[0].mxu0 %v462
        %v728 = vpop.f32.mrb[0].mxu0
        %v729 = vadd.f32 0.0, %v728
        %v730 = vpop.f32.mrb[0].mxu0
        %v731 = vadd.f32 0.0, %v730
        %v732 = vpop.f32.mrb[0].mxu0
        %v733 = vadd.f32 0.0, %v732
        %v734 = vpop.f32.mrb[0].mxu0
        %v735 = vadd.f32 0.0, %v734
        %736 = vmatprep.mubr.bf16.mxu0 %v465
        %737 = vmatmul.mubr.bf16.gmra.mrb[0].mxu0 %v464
        %v738 = vpop.f32.mrb[0].mxu0
        %v739 = vadd.f32 0.0, %v738
        %v740 = vpop.f32.mrb[0].mxu0
        %v741 = vadd.f32 0.0, %v740
        %v742 = vpop.f32.mrb[0].mxu0
        %v743 = vadd.f32 0.0, %v742
        %v744 = vpop.f32.mrb[0].mxu0
        %v745 = vadd.f32 0.0, %v744
        %746 = vmatprep.mubr.bf16.mxu0 %v467
        %747 = vmatmul.mubr.bf16.gmra.mrb[0].mxu0 %v466
        %v748 = vpop.f32.mrb[0].mxu0
        %v749 = vadd.f32 0.0, %v748
        %v750 = vpop.f32.mrb[0].mxu0
        %v751 = vadd.f32 0.0, %v750
        %v752 = vpop.f32.mrb[0].mxu0
        %v753 = vadd.f32 0.0, %v752
        %v754 = vpop.f32.mrb[0].mxu0
        %v755 = vadd.f32 0.0, %v754
        %756 = vmatprep.mubr.bf16.mxu0 %v469
        %757 = vmatmul.mubr.bf16.gmra.mrb[0].mxu0 %v468
        %v758 = vpop.f32.mrb[0].mxu0
        %v759 = vadd.f32 0.0, %v758
        %v760 = vpop.f32.mrb[0].mxu0
        %v761 = vadd.f32 0.0, %v760
        %v762 = vpop.f32.mrb[0].mxu0
        %v763 = vadd.f32 0.0, %v762
        %v764 = vpop.f32.mrb[0].mxu0
        %v765 = vadd.f32 0.0, %v764
        %766 = vmatprep.mubr.bf16.mxu0 %v471
        %767 = vmatmul.mubr.bf16.gmra.mrb[0].mxu0 %v470
        %v768 = vpop.f32.mrb[0].mxu0
        %v769 = vadd.f32 0.0, %v768
        %v770 = vpop.f32.mrb[0].mxu0
        %v771 = vadd.f32 0.0, %v770
        %v772 = vpop.f32.mrb[0].mxu0
        %v773 = vadd.f32 0.0, %v772
        %v774 = vpop.f32.mrb[0].mxu0
        %v775 = vadd.f32 0.0, %v774
        %776 = vmatprep.mubr.bf16.mxu0 %v473
        %777 = vmatmul.mubr.bf16.gmra.mrb[0].mxu0 %v472
        %v778 = vpop.f32.mrb[0].mxu0
        %v779 = vadd.f32 0.0, %v778
        %v780 = vpop.f32.mrb[0].mxu0
        %v781 = vadd.f32 0.0, %v780
        %v782 = vpop.f32.mrb[0].mxu0
        %v783 = vadd.f32 0.0, %v782
        %v784 = vpop.f32.mrb[0].mxu0
        %v785 = vadd.f32 0.0, %v784
        %786 = vmatprep.mubr.bf16.mxu0 %v475
        %787 = vmatmul.mubr.bf16.gmra.mrb[0].mxu0 %v474
        %v788 = vpop.f32.mrb[0].mxu0
        %v789 = vadd.f32 0.0, %v788
        %v790 = vpop.f32.mrb[0].mxu0
        %v791 = vadd.f32 0.0, %v790
        %v792 = vpop.f32.mrb[0].mxu0
        %v793 = vadd.f32 0.0, %v792
        %v794 = vpop.f32.mrb[0].mxu0
        %v795 = vadd.f32 0.0, %v794
        %796 = vmatprep.mubr.bf16.mxu0 %v477
        %797 = vmatmul.mubr.bf16.gmra.mrb[0].mxu0 %v476
        %v798 = vpop.f32.mrb[0].mxu0
        %v799 = vadd.f32 0.0, %v798
        %v800 = vpop.f32.mrb[0].mxu0
        %v801 = vadd.f32 0.0, %v800
        %v802 = vpop.f32.mrb[0].mxu0
        %v803 = vadd.f32 0.0, %v802
        %v804 = vpop.f32.mrb[0].mxu0
        %v805 = vadd.f32 0.0, %v804
        %806 = vmatprep.mubr.bf16.mxu0 %v479
        %807 = vmatmul.mubr.bf16.gmra.mrb[0].mxu0 %v478
        %v808 = vpop.f32.mrb[0].mxu0
        %v809 = vadd.f32 0.0, %v808
        %v810 = vpop.f32.mrb[0].mxu0
        %v811 = vadd.f32 0.0, %v810
        %v812 = vpop.f32.mrb[0].mxu0
        %v813 = vadd.f32 0.0, %v812
        %v814 = vpop.f32.mrb[0].mxu0
        %v815 = vadd.f32 0.0, %v814
        %816 = vmatprep.mubr.bf16.mxu0 %v481
        %817 = vmatmul.mubr.bf16.gmra.mrb[0].mxu0 %v480
        %v818 = vpop.f32.mrb[0].mxu0
        %v819 = vadd.f32 0.0, %v818
        %v820 = vpop.f32.mrb[0].mxu0
        %v821 = vadd.f32 0.0, %v820
        %v822 = vpop.f32.mrb[0].mxu0
        %v823 = vadd.f32 0.0, %v822
        %v824 = vpop.f32.mrb[0].mxu0
        %v825 = vadd.f32 0.0, %v824
        %826 = vmatprep.mubr.bf16.mxu0 %v483
        %827 = vmatmul.mubr.bf16.gmra.mrb[0].mxu0 %v482
        %v828 = vpop.f32.mrb[0].mxu0
        %v829 = vadd.f32 0.0, %v828
        %v830 = vpop.f32.mrb[0].mxu0
        %v831 = vadd.f32 0.0, %v830
        %v832 = vpop.f32.mrb[0].mxu0
        %v833 = vadd.f32 0.0, %v832
        %v834 = vpop.f32.mrb[0].mxu0
        %v835 = vadd.f32 0.0, %v834
        %836 = vmatprep.mubr.bf16.mxu0 %v485
        %837 = vmatmul.mubr.bf16.gmra.mrb[0].mxu0 %v484
        %v838 = vpop.f32.mrb[0].mxu0
        %v839 = vadd.f32 0.0, %v838
        %v840 = vpop.f32.mrb[0].mxu0
        %v841 = vadd.f32 0.0, %v840
        %v842 = vpop.f32.mrb[0].mxu0
        %v843 = vadd.f32 0.0, %v842
        %v844 = vpop.f32.mrb[0].mxu0
        %v845 = vadd.f32 0.0, %v844
        %846 = vmatprep.mubr.bf16.mxu0 %v487
        %847 = vmatmul.mubr.bf16.gmra.mrb[0].mxu0 %v486
        %v848 = vpop.f32.mrb[0].mxu0
        %v849 = vadd.f32 0.0, %v848
        %v850 = vpop.f32.mrb[0].mxu0
        %v851 = vadd.f32 0.0, %v850
        %v852 = vpop.f32.mrb[0].mxu0
        %v853 = vadd.f32 0.0, %v852
        %v854 = vpop.f32.mrb[0].mxu0
        %v855 = vadd.f32 0.0, %v854
        %856 = vmatprep.mubr.bf16.mxu0 %v489
        %857 = vmatmul.mubr.bf16.gmra.mrb[0].mxu0 %v488
        %v858 = vpop.f32.mrb[0].mxu0
        %v859 = vadd.f32 0.0, %v858
        %v860 = vpop.f32.mrb[0].mxu0
        %v861 = vadd.f32 0.0, %v860
        %v862 = vpop.f32.mrb[0].mxu0
        %v863 = vadd.f32 0.0, %v862
        %v864 = vpop.f32.mrb[0].mxu0
        %v865 = vadd.f32 0.0, %v864
        %866 = vmatprep.mubr.bf16.mxu0 %v491
        %867 = vmatmul.mubr.bf16.gmra.mrb[0].mxu0 %v490
        %v868 = vpop.f32.mrb[0].mxu0
        %v869 = vadd.f32 0.0, %v868
        %v870 = vpop.f32.mrb[0].mxu0
        %v871 = vadd.f32 0.0, %v870
        %v872 = vpop.f32.mrb[0].mxu0
        %v873 = vadd.f32 0.0, %v872
        %v874 = vpop.f32.mrb[0].mxu0
        %v875 = vadd.f32 0.0, %v874
        %876 = vdwg.mxu0
        %v877 = vadd.f32 %v332, %v719
        %v878 = vadd.f32 %v333, %v721
        %v879 = vadd.f32 %v334, %v723
        %v880 = vadd.f32 %v335, %v725
        %v881 = vadd.f32 %v336, %v729
        %v882 = vadd.f32 %v337, %v731
        %v883 = vadd.f32 %v338, %v733
        %v884 = vadd.f32 %v339, %v735
        %v885 = vadd.f32 %v340, %v739
        %v886 = vadd.f32 %v341, %v741
        %v887 = vadd.f32 %v342, %v743
        %v888 = vadd.f32 %v343, %v745
        %v889 = vadd.f32 %v344, %v749
        %v890 = vadd.f32 %v345, %v751
        %v891 = vadd.f32 %v346, %v753
        %v892 = vadd.f32 %v347, %v755
        %v893 = vadd.f32 %v348, %v759
        %v894 = vadd.f32 %v349, %v761
        %v895 = vadd.f32 %v350, %v763
        %v896 = vadd.f32 %v351, %v765
        %v897 = vadd.f32 %v352, %v769
        %v898 = vadd.f32 %v353, %v771
        %v899 = vadd.f32 %v354, %v773
        %v900 = vadd.f32 %v355, %v775
        %v901 = vadd.f32 %v356, %v779
        %v902 = vadd.f32 %v357, %v781
        %v903 = vadd.f32 %v358, %v783
        %v904 = vadd.f32 %v359, %v785
        %v905 = vadd.f32 %v360, %v789
        %v906 = vadd.f32 %v361, %v791
        %v907 = vadd.f32 %v362, %v793
        %v908 = vadd.f32 %v363, %v795
        %v909 = vadd.f32 %v364, %v799
        %v910 = vadd.f32 %v365, %v801
        %v911 = vadd.f32 %v366, %v803
        %v912 = vadd.f32 %v367, %v805
        %v913 = vadd.f32 %v368, %v809
        %v914 = vadd.f32 %v369, %v811
        %v915 = vadd.f32 %v370, %v813
        %v916 = vadd.f32 %v371, %v815
        %v917 = vadd.f32 %v372, %v819
        %v918 = vadd.f32 %v373, %v821
        %v919 = vadd.f32 %v374, %v823
        %v920 = vadd.f32 %v375, %v825
        %v921 = vadd.f32 %v376, %v829
        %v922 = vadd.f32 %v377, %v831
        %v923 = vadd.f32 %v378, %v833
        %v924 = vadd.f32 %v379, %v835
        %v925 = vadd.f32 %v380, %v839
        %v926 = vadd.f32 %v381, %v841
        %v927 = vadd.f32 %v382, %v843
        %v928 = vadd.f32 %v383, %v845
        %v929 = vadd.f32 %v384, %v849
        %v930 = vadd.f32 %v385, %v851
        %v931 = vadd.f32 %v386, %v853
        %v932 = vadd.f32 %v387, %v855
        %v933 = vadd.f32 %v388, %v859
        %v934 = vadd.f32 %v389, %v861
        %v935 = vadd.f32 %v390, %v863
        %v936 = vadd.f32 %v391, %v865
        %v937 = vadd.f32 %v392, %v869
        %v938 = vadd.f32 %v393, %v871
        %v939 = vadd.f32 %v394, %v873
        %v940 = vadd.f32 %v395, %v875
        %941 = vst [vmem:[#allocation2] sm:$0xff] %v877
        %942 = vst [vmem:[#allocation2 + $0x8] sm:$0xff] %v878
        %943 = vst [vmem:[#allocation2 + $0x10] sm:$0xff] %v879
        %944 = vst [vmem:[#allocation2 + $0x18] sm:$0xff] %v880
        %945 = vst [vmem:[#allocation2 + $0x20] sm:$0xff] %v881
        %946 = vst [vmem:[#allocation2 + $0x28] sm:$0xff] %v882
        %947 = vst [vmem:[#allocation2 + $0x30] sm:$0xff] %v883
        %948 = vst [vmem:[#allocation2 + $0x38] sm:$0xff] %v884
        %949 = vst [vmem:[#allocation2 + $0x40] sm:$0xff] %v885
        %950 = vst [vmem:[#allocation2 + $0x48] sm:$0xff] %v886
        %951 = vst [vmem:[#allocation2 + $0x50] sm:$0xff] %v887
        %952 = vst [vmem:[#allocation2 + $0x58] sm:$0xff] %v888
        %953 = vst [vmem:[#allocation2 + $0x60] sm:$0xff] %v889
        %954 = vst [vmem:[#allocation2 + $0x68] sm:$0xff] %v890
        %955 = vst [vmem:[#allocation2 + $0x70] sm:$0xff] %v891
        %956 = vst [vmem:[#allocation2 + $0x78] sm:$0xff] %v892
        %957 = vst [vmem:[#allocation2 + $0x80] sm:$0xff] %v893
        %958 = vst [vmem:[#allocation2 + $0x88] sm:$0xff] %v894
        %959 = vst [vmem:[#allocation2 + $0x90] sm:$0xff] %v895
        %960 = vst [vmem:[#allocation2 + $0x98] sm:$0xff] %v896
        %961 = vst [vmem:[#allocation2 + $0xa0] sm:$0xff] %v897
        %962 = vst [vmem:[#allocation2 + $0xa8] sm:$0xff] %v898
        %963 = vst [vmem:[#allocation2 + $0xb0] sm:$0xff] %v899
        %964 = vst [vmem:[#allocation2 + $0xb8] sm:$0xff] %v900
        %965 = vst [vmem:[#allocation2 + $0xc0] sm:$0xff] %v901
        %966 = vst [vmem:[#allocation2 + $0xc8] sm:$0xff] %v902
        %967 = vst [vmem:[#allocation2 + $0xd0] sm:$0xff] %v903
        %968 = vst [vmem:[#allocation2 + $0xd8] sm:$0xff] %v904
        %969 = vst [vmem:[#allocation2 + $0xe0] sm:$0xff] %v905
        %970 = vst [vmem:[#allocation2 + $0xe8] sm:$0xff] %v906
        %971 = vst [vmem:[#allocation2 + $0xf0] sm:$0xff] %v907
        %972 = vst [vmem:[#allocation2 + $0xf8] sm:$0xff] %v908
        %973 = vst [vmem:[#allocation2 + $0x100] sm:$0xff] %v909
        %974 = vst [vmem:[#allocation2 + $0x108] sm:$0xff] %v910
        %975 = vst [vmem:[#allocation2 + $0x110] sm:$0xff] %v911
        %976 = vst [vmem:[#allocation2 + $0x118] sm:$0xff] %v912
        %977 = vst [vmem:[#allocation2 + $0x120] sm:$0xff] %v913
        %978 = vst [vmem:[#allocation2 + $0x128] sm:$0xff] %v914
        %979 = vst [vmem:[#allocation2 + $0x130] sm:$0xff] %v915
        %980 = vst [vmem:[#allocation2 + $0x138] sm:$0xff] %v916
        %981 = vst [vmem:[#allocation2 + $0x140] sm:$0xff] %v917
        %982 = vst [vmem:[#allocation2 + $0x148] sm:$0xff] %v918
        %983 = vst [vmem:[#allocation2 + $0x150] sm:$0xff] %v919
        %984 = vst [vmem:[#allocation2 + $0x158] sm:$0xff] %v920
        %985 = vst [vmem:[#allocation2 + $0x160] sm:$0xff] %v921
        %986 = vst [vmem:[#allocation2 + $0x168] sm:$0xff] %v922
        %987 = vst [vmem:[#allocation2 + $0x170] sm:$0xff] %v923
        %988 = vst [vmem:[#allocation2 + $0x178] sm:$0xff] %v924
        %989 = vst [vmem:[#allocation2 + $0x180] sm:$0xff] %v925
        %990 = vst [vmem:[#allocation2 + $0x188] sm:$0xff] %v926
        %991 = vst [vmem:[#allocation2 + $0x190] sm:$0xff] %v927
        %992 = vst [vmem:[#allocation2 + $0x198] sm:$0xff] %v928
        %993 = vst [vmem:[#allocation2 + $0x1a0] sm:$0xff] %v929
        %994 = vst [vmem:[#allocation2 + $0x1a8] sm:$0xff] %v930
        %995 = vst [vmem:[#allocation2 + $0x1b0] sm:$0xff] %v931
        %996 = vst [vmem:[#allocation2 + $0x1b8] sm:$0xff] %v932
        %997 = vst [vmem:[#allocation2 + $0x1c0] sm:$0xff] %v933
        %998 = vst [vmem:[#allocation2 + $0x1c8] sm:$0xff] %v934
        %999 = vst [vmem:[#allocation2 + $0x1d0] sm:$0xff] %v935
        %1000 = vst [vmem:[#allocation2 + $0x1d8] sm:$0xff] %v936
        %1001 = vst [vmem:[#allocation2 + $0x1e0] sm:$0xff] %v937
        %1002 = vst [vmem:[#allocation2 + $0x1e8] sm:$0xff] %v938
        %1003 = vst [vmem:[#allocation2 + $0x1f0] sm:$0xff] %v939
        %1004 = vst [vmem:[#allocation2 + $0x1f8] sm:$0xff] %v940
        // Predicated region
        $region45: #{self_attention_forward.3} parent=31 // pred_check
          %p1005 = pneg %p264
        $region46: #{self_attention_forward.3} parent=31 // pred_check_branch
          %1007 = sbr.rel (%p1005) target = $region48
        $region47: #{self_attention_forward.3} parent=31 // pred_region
          %v1008 = vld [vmem:[#allocation2] sm:$0xff]
          %v1009 = vld [vmem:[#allocation2 + $0x8] sm:$0xff]
          %v1010 = vld [vmem:[#allocation2 + $0x10] sm:$0xff]
          %v1011 = vld [vmem:[#allocation2 + $0x18] sm:$0xff]
          %v1012 = vld [vmem:[#allocation2 + $0x20] sm:$0xff]
          %v1013 = vld [vmem:[#allocation2 + $0x28] sm:$0xff]
          %v1014 = vld [vmem:[#allocation2 + $0x30] sm:$0xff]
          %v1015 = vld [vmem:[#allocation2 + $0x38] sm:$0xff]
          %v1016 = vld [vmem:[#allocation2 + $0x40] sm:$0xff]
          %v1017 = vld [vmem:[#allocation2 + $0x48] sm:$0xff]
          %v1018 = vld [vmem:[#allocation2 + $0x50] sm:$0xff]
          %v1019 = vld [vmem:[#allocation2 + $0x58] sm:$0xff]
          %v1020 = vld [vmem:[#allocation2 + $0x60] sm:$0xff]
          %v1021 = vld [vmem:[#allocation2 + $0x68] sm:$0xff]
          %v1022 = vld [vmem:[#allocation2 + $0x70] sm:$0xff]
          %v1023 = vld [vmem:[#allocation2 + $0x78] sm:$0xff]
          %v1024 = vld [vmem:[#allocation2 + $0x80] sm:$0xff]
          %v1025 = vld [vmem:[#allocation2 + $0x88] sm:$0xff]
          %v1026 = vld [vmem:[#allocation2 + $0x90] sm:$0xff]
          %v1027 = vld [vmem:[#allocation2 + $0x98] sm:$0xff]
          %v1028 = vld [vmem:[#allocation2 + $0xa0] sm:$0xff]
          %v1029 = vld [vmem:[#allocation2 + $0xa8] sm:$0xff]
          %v1030 = vld [vmem:[#allocation2 + $0xb0] sm:$0xff]
          %v1031 = vld [vmem:[#allocation2 + $0xb8] sm:$0xff]
          %v1032 = vld [vmem:[#allocation2 + $0xc0] sm:$0xff]
          %v1033 = vld [vmem:[#allocation2 + $0xc8] sm:$0xff]
          %v1034 = vld [vmem:[#allocation2 + $0xd0] sm:$0xff]
          %v1035 = vld [vmem:[#allocation2 + $0xd8] sm:$0xff]
          %v1036 = vld [vmem:[#allocation2 + $0xe0] sm:$0xff]
          %v1037 = vld [vmem:[#allocation2 + $0xe8] sm:$0xff]
          %v1038 = vld [vmem:[#allocation2 + $0xf0] sm:$0xff]
          %v1039 = vld [vmem:[#allocation2 + $0xf8] sm:$0xff]
          %v1040 = vld [vmem:[#allocation2 + $0x100] sm:$0xff]
          %v1041 = vld [vmem:[#allocation2 + $0x108] sm:$0xff]
          %v1042 = vld [vmem:[#allocation2 + $0x110] sm:$0xff]
          %v1043 = vld [vmem:[#allocation2 + $0x118] sm:$0xff]
          %v1044 = vld [vmem:[#allocation2 + $0x120] sm:$0xff]
          %v1045 = vld [vmem:[#allocation2 + $0x128] sm:$0xff]
          %v1046 = vld [vmem:[#allocation2 + $0x130] sm:$0xff]
          %v1047 = vld [vmem:[#allocation2 + $0x138] sm:$0xff]
          %v1048 = vld [vmem:[#allocation2 + $0x140] sm:$0xff]
          %v1049 = vld [vmem:[#allocation2 + $0x148] sm:$0xff]
          %v1050 = vld [vmem:[#allocation2 + $0x150] sm:$0xff]
          %v1051 = vld [vmem:[#allocation2 + $0x158] sm:$0xff]
          %v1052 = vld [vmem:[#allocation2 + $0x160] sm:$0xff]
          %v1053 = vld [vmem:[#allocation2 + $0x168] sm:$0xff]
          %v1054 = vld [vmem:[#allocation2 + $0x170] sm:$0xff]
          %v1055 = vld [vmem:[#allocation2 + $0x178] sm:$0xff]
          %v1056 = vld [vmem:[#allocation2 + $0x180] sm:$0xff]
          %v1057 = vld [vmem:[#allocation2 + $0x188] sm:$0xff]
          %v1058 = vld [vmem:[#allocation2 + $0x190] sm:$0xff]
          %v1059 = vld [vmem:[#allocation2 + $0x198] sm:$0xff]
          %v1060 = vld [vmem:[#allocation2 + $0x1a0] sm:$0xff]
          %v1061 = vld [vmem:[#allocation2 + $0x1a8] sm:$0xff]
          %v1062 = vld [vmem:[#allocation2 + $0x1b0] sm:$0xff]
          %v1063 = vld [vmem:[#allocation2 + $0x1b8] sm:$0xff]
          %v1064 = vld [vmem:[#allocation2 + $0x1c0] sm:$0xff]
          %v1065 = vld [vmem:[#allocation2 + $0x1c8] sm:$0xff]
          %v1066 = vld [vmem:[#allocation2 + $0x1d0] sm:$0xff]
          %v1067 = vld [vmem:[#allocation2 + $0x1d8] sm:$0xff]
          %v1068 = vld [vmem:[#allocation2 + $0x1e0] sm:$0xff]
          %v1069 = vld [vmem:[#allocation2 + $0x1e8] sm:$0xff]
          %v1070 = vld [vmem:[#allocation2 + $0x1f0] sm:$0xff]
          %v1071 = vld [vmem:[#allocation2 + $0x1f8] sm:$0xff]
          %v1072 = vld [vmem:[%s260] sm:$0x3]
          %v1074 = vlaneseq
          %v1075 = vshrl.u32 %v1074, 7
          %v1076 = vsub.s32 0, %v1075
          %v1077 = vrot.slane %v1072, %v1076
          %v1078 = vlaneseq
          %v1079 = vshrl.u32 %v1078, 7
          %v1080 = vsub.s32 1, %v1079
          %v1081 = vrot.slane %v1072, %v1080
          %v1084 = vadd.f32 %v1008, %v1077
          %v1085 = vadd.f32 %v1009, %v1081
          %v1086 = vadd.f32 %v1010, %v1077
          %v1087 = vadd.f32 %v1011, %v1081
          %v1088 = vadd.f32 %v1012, %v1077
          %v1089 = vadd.f32 %v1013, %v1081
          %v1090 = vadd.f32 %v1014, %v1077
          %v1091 = vadd.f32 %v1015, %v1081
          %v1092 = vadd.f32 %v1016, %v1077
          %v1093 = vadd.f32 %v1017, %v1081
          %v1094 = vadd.f32 %v1018, %v1077
          %v1095 = vadd.f32 %v1019, %v1081
          %v1096 = vadd.f32 %v1020, %v1077
          %v1097 = vadd.f32 %v1021, %v1081
          %v1098 = vadd.f32 %v1022, %v1077
          %v1099 = vadd.f32 %v1023, %v1081
          %v1100 = vadd.f32 %v1024, %v1077
          %v1101 = vadd.f32 %v1025, %v1081
          %v1102 = vadd.f32 %v1026, %v1077
          %v1103 = vadd.f32 %v1027, %v1081
          %v1104 = vadd.f32 %v1028, %v1077
          %v1105 = vadd.f32 %v1029, %v1081
          %v1106 = vadd.f32 %v1030, %v1077
          %v1107 = vadd.f32 %v1031, %v1081
          %v1108 = vadd.f32 %v1032, %v1077
          %v1109 = vadd.f32 %v1033, %v1081
          %v1110 = vadd.f32 %v1034, %v1077
          %v1111 = vadd.f32 %v1035, %v1081
          %v1112 = vadd.f32 %v1036, %v1077
          %v1113 = vadd.f32 %v1037, %v1081
          %v1114 = vadd.f32 %v1038, %v1077
          %v1115 = vadd.f32 %v1039, %v1081
          %v1116 = vadd.f32 %v1040, %v1077
          %v1117 = vadd.f32 %v1041, %v1081
          %v1118 = vadd.f32 %v1042, %v1077
          %v1119 = vadd.f32 %v1043, %v1081
          %v1120 = vadd.f32 %v1044, %v1077
          %v1121 = vadd.f32 %v1045, %v1081
          %v1122 = vadd.f32 %v1046, %v1077
          %v1123 = vadd.f32 %v1047, %v1081
          %v1124 = vadd.f32 %v1048, %v1077
          %v1125 = vadd.f32 %v1049, %v1081
          %v1126 = vadd.f32 %v1050, %v1077
          %v1127 = vadd.f32 %v1051, %v1081
          %v1128 = vadd.f32 %v1052, %v1077
          %v1129 = vadd.f32 %v1053, %v1081
          %v1130 = vadd.f32 %v1054, %v1077
          %v1131 = vadd.f32 %v1055, %v1081
          %v1132 = vadd.f32 %v1056, %v1077
          %v1133 = vadd.f32 %v1057, %v1081
          %v1134 = vadd.f32 %v1058, %v1077
          %v1135 = vadd.f32 %v1059, %v1081
          %v1136 = vadd.f32 %v1060, %v1077
          %v1137 = vadd.f32 %v1061, %v1081
          %v1138 = vadd.f32 %v1062, %v1077
          %v1139 = vadd.f32 %v1063, %v1081
          %v1140 = vadd.f32 %v1064, %v1077
          %v1141 = vadd.f32 %v1065, %v1081
          %v1142 = vadd.f32 %v1066, %v1077
          %v1143 = vadd.f32 %v1067, %v1081
          %v1144 = vadd.f32 %v1068, %v1077
          %v1145 = vadd.f32 %v1069, %v1081
          %v1146 = vadd.f32 %v1070, %v1077
          %v1147 = vadd.f32 %v1071, %v1081
          %v1148 = vpack.c.bf16 %v1086, %v1084
          %v1149 = vpack.c.bf16 %v1087, %v1085
          %v1150 = vpack.c.bf16 %v1090, %v1088
          %v1151 = vpack.c.bf16 %v1091, %v1089
          %v1152 = vpack.c.bf16 %v1094, %v1092
          %v1153 = vpack.c.bf16 %v1095, %v1093
          %v1154 = vpack.c.bf16 %v1098, %v1096
          %v1155 = vpack.c.bf16 %v1099, %v1097
          %v1156 = vpack.c.bf16 %v1102, %v1100
          %v1157 = vpack.c.bf16 %v1103, %v1101
          %v1158 = vpack.c.bf16 %v1106, %v1104
          %v1159 = vpack.c.bf16 %v1107, %v1105
          %v1160 = vpack.c.bf16 %v1110, %v1108
          %v1161 = vpack.c.bf16 %v1111, %v1109
          %v1162 = vpack.c.bf16 %v1114, %v1112
          %v1163 = vpack.c.bf16 %v1115, %v1113
          %v1164 = vpack.c.bf16 %v1118, %v1116
          %v1165 = vpack.c.bf16 %v1119, %v1117
          %v1166 = vpack.c.bf16 %v1122, %v1120
          %v1167 = vpack.c.bf16 %v1123, %v1121
          %v1168 = vpack.c.bf16 %v1126, %v1124
          %v1169 = vpack.c.bf16 %v1127, %v1125
          %v1170 = vpack.c.bf16 %v1130, %v1128
          %v1171 = vpack.c.bf16 %v1131, %v1129
          %v1172 = vpack.c.bf16 %v1134, %v1132
          %v1173 = vpack.c.bf16 %v1135, %v1133
          %v1174 = vpack.c.bf16 %v1138, %v1136
          %v1175 = vpack.c.bf16 %v1139, %v1137
          %v1176 = vpack.c.bf16 %v1142, %v1140
          %v1177 = vpack.c.bf16 %v1143, %v1141
          %v1178 = vpack.c.bf16 %v1146, %v1144
          %v1179 = vpack.c.bf16 %v1147, %v1145
          %v1212 = vunpack.c.l.b16 %v1148
          %v1213 = vunpack.c.l.b16 %v1149
          %v1214 = vunpack.c.h.b16 %v1148
          %v1215 = vunpack.c.h.b16 %v1149
          %v1216 = vunpack.c.l.b16 %v1150
          %v1217 = vunpack.c.l.b16 %v1151
          %v1218 = vunpack.c.h.b16 %v1150
          %v1219 = vunpack.c.h.b16 %v1151
          %v1220 = vunpack.c.l.b16 %v1152
          %v1221 = vunpack.c.l.b16 %v1153
          %v1222 = vunpack.c.h.b16 %v1152
          %v1223 = vunpack.c.h.b16 %v1153
          %v1224 = vunpack.c.l.b16 %v1154
          %v1225 = vunpack.c.l.b16 %v1155
          %v1226 = vunpack.c.h.b16 %v1154
          %v1227 = vunpack.c.h.b16 %v1155
          %v1228 = vunpack.c.l.b16 %v1156
          %v1229 = vunpack.c.l.b16 %v1157
          %v1230 = vunpack.c.h.b16 %v1156
          %v1231 = vunpack.c.h.b16 %v1157
          %v1232 = vunpack.c.l.b16 %v1158
          %v1233 = vunpack.c.l.b16 %v1159
          %v1234 = vunpack.c.h.b16 %v1158
          %v1235 = vunpack.c.h.b16 %v1159
          %v1236 = vunpack.c.l.b16 %v1160
          %v1237 = vunpack.c.l.b16 %v1161
          %v1238 = vunpack.c.h.b16 %v1160
          %v1239 = vunpack.c.h.b16 %v1161
          %v1240 = vunpack.c.l.b16 %v1162
          %v1241 = vunpack.c.l.b16 %v1163
          %v1242 = vunpack.c.h.b16 %v1162
          %v1243 = vunpack.c.h.b16 %v1163
          %v1244 = vunpack.c.l.b16 %v1164
          %v1245 = vunpack.c.l.b16 %v1165
          %v1246 = vunpack.c.h.b16 %v1164
          %v1247 = vunpack.c.h.b16 %v1165
          %v1248 = vunpack.c.l.b16 %v1166
          %v1249 = vunpack.c.l.b16 %v1167
          %v1250 = vunpack.c.h.b16 %v1166
          %v1251 = vunpack.c.h.b16 %v1167
          %v1252 = vunpack.c.l.b16 %v1168
          %v1253 = vunpack.c.l.b16 %v1169
          %v1254 = vunpack.c.h.b16 %v1168
          %v1255 = vunpack.c.h.b16 %v1169
          %v1256 = vunpack.c.l.b16 %v1170
          %v1257 = vunpack.c.l.b16 %v1171
          %v1258 = vunpack.c.h.b16 %v1170
          %v1259 = vunpack.c.h.b16 %v1171
          %v1260 = vunpack.c.l.b16 %v1172
          %v1261 = vunpack.c.l.b16 %v1173
          %v1262 = vunpack.c.h.b16 %v1172
          %v1263 = vunpack.c.h.b16 %v1173
          %v1264 = vunpack.c.l.b16 %v1174
          %v1265 = vunpack.c.l.b16 %v1175
          %v1266 = vunpack.c.h.b16 %v1174
          %v1267 = vunpack.c.h.b16 %v1175
          %v1268 = vunpack.c.l.b16 %v1176
          %v1269 = vunpack.c.l.b16 %v1177
          %v1270 = vunpack.c.h.b16 %v1176
          %v1271 = vunpack.c.h.b16 %v1177
          %v1272 = vunpack.c.l.b16 %v1178
          %v1273 = vunpack.c.l.b16 %v1179
          %v1274 = vunpack.c.h.b16 %v1178
          %v1275 = vunpack.c.h.b16 %v1179
          %v1276 = vpack.c.b16 %v1213, %v1212
          %v1277 = vpack.c.b16 %v1215, %v1214
          %v1278 = vpack.c.b16 %v1217, %v1216
          %v1279 = vpack.c.b16 %v1219, %v1218
          %v1280 = vpack.c.b16 %v1221, %v1220
          %v1281 = vpack.c.b16 %v1223, %v1222
          %v1282 = vpack.c.b16 %v1225, %v1224
          %v1283 = vpack.c.b16 %v1227, %v1226
          %v1284 = vpack.c.b16 %v1229, %v1228
          %v1285 = vpack.c.b16 %v1231, %v1230
          %v1286 = vpack.c.b16 %v1233, %v1232
          %v1287 = vpack.c.b16 %v1235, %v1234
          %v1288 = vpack.c.b16 %v1237, %v1236
          %v1289 = vpack.c.b16 %v1239, %v1238
          %v1290 = vpack.c.b16 %v1241, %v1240
          %v1291 = vpack.c.b16 %v1243, %v1242
          %v1292 = vpack.c.b16 %v1245, %v1244
          %v1293 = vpack.c.b16 %v1247, %v1246
          %v1294 = vpack.c.b16 %v1249, %v1248
          %v1295 = vpack.c.b16 %v1251, %v1250
          %v1296 = vpack.c.b16 %v1253, %v1252
          %v1297 = vpack.c.b16 %v1255, %v1254
          %v1298 = vpack.c.b16 %v1257, %v1256
          %v1299 = vpack.c.b16 %v1259, %v1258
          %v1300 = vpack.c.b16 %v1261, %v1260
          %v1301 = vpack.c.b16 %v1263, %v1262
          %v1302 = vpack.c.b16 %v1265, %v1264
          %v1303 = vpack.c.b16 %v1267, %v1266
          %v1304 = vpack.c.b16 %v1269, %v1268
          %v1305 = vpack.c.b16 %v1271, %v1270
          %v1306 = vpack.c.b16 %v1273, %v1272
          %v1307 = vpack.c.b16 %v1275, %v1274
          %1340 = vst [vmem:[%s252] sm:$0xff] %v1276
          %1341 = vst [vmem:[%s252 + $0x8] sm:$0xff] %v1277
          %1342 = vst [vmem:[%s252 + $0x10] sm:$0xff] %v1278
          %1343 = vst [vmem:[%s252 + $0x18] sm:$0xff] %v1279
          %1344 = vst [vmem:[%s252 + $0x20] sm:$0xff] %v1280
          %1345 = vst [vmem:[%s252 + $0x28] sm:$0xff] %v1281
          %1346 = vst [vmem:[%s252 + $0x30] sm:$0xff] %v1282
          %1347 = vst [vmem:[%s252 + $0x38] sm:$0xff] %v1283
          %1348 = vst [vmem:[%s252 + $0x40] sm:$0xff] %v1284
          %1349 = vst [vmem:[%s252 + $0x48] sm:$0xff] %v1285
          %1350 = vst [vmem:[%s252 + $0x50] sm:$0xff] %v1286
          %1351 = vst [vmem:[%s252 + $0x58] sm:$0xff] %v1287
          %1352 = vst [vmem:[%s252 + $0x60] sm:$0xff] %v1288
          %1353 = vst [vmem:[%s252 + $0x68] sm:$0xff] %v1289
          %1354 = vst [vmem:[%s252 + $0x70] sm:$0xff] %v1290
          %1355 = vst [vmem:[%s252 + $0x78] sm:$0xff] %v1291
          %1356 = vst [vmem:[%s252 + $0x80] sm:$0xff] %v1292
          %1357 = vst [vmem:[%s252 + $0x88] sm:$0xff] %v1293
          %1358 = vst [vmem:[%s252 + $0x90] sm:$0xff] %v1294
          %1359 = vst [vmem:[%s252 + $0x98] sm:$0xff] %v1295
          %1360 = vst [vmem:[%s252 + $0xa0] sm:$0xff] %v1296
          %1361 = vst [vmem:[%s252 + $0xa8] sm:$0xff] %v1297
          %1362 = vst [vmem:[%s252 + $0xb0] sm:$0xff] %v1298
          %1363 = vst [vmem:[%s252 + $0xb8] sm:$0xff] %v1299
          %1364 = vst [vmem:[%s252 + $0xc0] sm:$0xff] %v1300
          %1365 = vst [vmem:[%s252 + $0xc8] sm:$0xff] %v1301
          %1366 = vst [vmem:[%s252 + $0xd0] sm:$0xff] %v1302
          %1367 = vst [vmem:[%s252 + $0xd8] sm:$0xff] %v1303
          %1368 = vst [vmem:[%s252 + $0xe0] sm:$0xff] %v1304
          %1369 = vst [vmem:[%s252 + $0xe8] sm:$0xff] %v1305
          %1370 = vst [vmem:[%s252 + $0xf0] sm:$0xff] %v1306
          %1371 = vst [vmem:[%s252 + $0xf8] sm:$0xff] %v1307
        $region48: #{self_attention_forward.3} parent=31 // pred_fallthru
          _
        %s1372 = sand.u32 %s129, 1
        %s1373 = sand.u32 %s129, 1
        %s1374 = smul.addr %s1373, 256
        %s1375 = scalar_lea.vmem [#allocation7], %s1374
        // Predicated region
        $region49: #{self_attention_forward.3} parent=31 // pred_check
          %p1376 = pneg %p139
        $region50: #{self_attention_forward.3} parent=31 // pred_check_branch
          %1378 = sbr.rel (%p1376) target = $region52
        $region51: #{self_attention_forward.3} parent=31 // pred_region
          %s1379 = smul.u32 32, %s23
          %s1380 = smul.u32 2, %s24
          %s1381 = smul.addr %s1379, 6
          %s1382 = sadd.s32 %s1380, %s1381
          %s1383 = smul.addr %s1382, 4
          %s1384 = scalar_lea.vmem %s3, %s1383
          // Predicated region
          $region53: #{self_attention_forward.3} parent=51 // pred_check
            _
          $region54: #{self_attention_forward.3} parent=51 // pred_check_branch
            %1386 = sbr.rel (0) target = $region56
          $region55: #{self_attention_forward.3} parent=51 // pred_region
            // Predicated region
            $region57: #{self_attention_forward.3} parent=55 // pred_check
              _
            $region58: #{self_attention_forward.3} parent=55 // pred_check_branch
              %1388 = sbr.rel (0) target = $region60
            $region59: #{self_attention_forward.3} parent=55 // pred_region
              // Predicated region
              $region72: #{self_attention_forward.3} parent=59 // pred_check
                _
              $region73: #{self_attention_forward.3} parent=59 // pred_check_branch
                %1465 = sbr.rel (0) target = $region75
              $region74: #{self_attention_forward.3} parent=59 // pred_region
                loop: start=0, step=1, limit=1
                $region76: #{self_attention_forward.3} parent=74 // loop_pre_header
                  _
                $region77: #{self_attention_forward.3} parent=74 // loop_header
                  %s1467 = sphi 0, %s1471
                  %p1468 = scmp.ge.s32.totalorder %s1467, 1
                  %s1472 = sphi %s1375, %s1375
                  %s1473 = sphi %s1384, %s1384
                $region78: #{self_attention_forward.3} parent=74 // loop_header_branch
                  %1470 = sbr.rel (%p1468) target = $region82
                $region79: #{self_attention_forward.3} parent=74 // loop_body
                  %v1474 = vld [vmem:[%s1472] sm:$0xff]
                  %1475 = vst [vmem:[%s1473] sm:$0xff] %v1474
                  %v1476 = vld [vmem:[%s1472 + $0x8] sm:$0xff]
                  %1477 = vst [vmem:[%s1473 + $0x18] sm:$0xff] %v1476
                  %v1478 = vld [vmem:[%s1472 + $0x10] sm:$0xff]
                  %1479 = vst [vmem:[%s1473 + $0x30] sm:$0xff] %v1478
                  %v1480 = vld [vmem:[%s1472 + $0x18] sm:$0xff]
                  %1481 = vst [vmem:[%s1473 + $0x48] sm:$0xff] %v1480
                  %v1482 = vld [vmem:[%s1472 + $0x20] sm:$0xff]
                  %1483 = vst [vmem:[%s1473 + $0x60] sm:$0xff] %v1482
                  %v1484 = vld [vmem:[%s1472 + $0x28] sm:$0xff]
                  %1485 = vst [vmem:[%s1473 + $0x78] sm:$0xff] %v1484
                  %v1486 = vld [vmem:[%s1472 + $0x30] sm:$0xff]
                  %1487 = vst [vmem:[%s1473 + $0x90] sm:$0xff] %v1486
                  %v1488 = vld [vmem:[%s1472 + $0x38] sm:$0xff]
                  %1489 = vst [vmem:[%s1473 + $0xa8] sm:$0xff] %v1488
                  %v1490 = vld [vmem:[%s1472 + $0x40] sm:$0xff]
                  %1491 = vst [vmem:[%s1473 + $0xc0] sm:$0xff] %v1490
                  %v1492 = vld [vmem:[%s1472 + $0x48] sm:$0xff]
                  %1493 = vst [vmem:[%s1473 + $0xd8] sm:$0xff] %v1492
                  %v1494 = vld [vmem:[%s1472 + $0x50] sm:$0xff]
                  %1495 = vst [vmem:[%s1473 + $0xf0] sm:$0xff] %v1494
                  %v1496 = vld [vmem:[%s1472 + $0x58] sm:$0xff]
                  %1497 = vst [vmem:[%s1473 + $0x108] sm:$0xff] %v1496
                  %v1498 = vld [vmem:[%s1472 + $0x60] sm:$0xff]
                  %1499 = vst [vmem:[%s1473 + $0x120] sm:$0xff] %v1498
                  %v1500 = vld [vmem:[%s1472 + $0x68] sm:$0xff]
                  %1501 = vst [vmem:[%s1473 + $0x138] sm:$0xff] %v1500
                  %v1502 = vld [vmem:[%s1472 + $0x70] sm:$0xff]
                  %1503 = vst [vmem:[%s1473 + $0x150] sm:$0xff] %v1502
                  %v1504 = vld [vmem:[%s1472 + $0x78] sm:$0xff]
                  %1505 = vst [vmem:[%s1473 + $0x168] sm:$0xff] %v1504
                  %v1506 = vld [vmem:[%s1472 + $0x80] sm:$0xff]
                  %1507 = vst [vmem:[%s1473 + $0x180] sm:$0xff] %v1506
                  %v1508 = vld [vmem:[%s1472 + $0x88] sm:$0xff]
                  %1509 = vst [vmem:[%s1473 + $0x198] sm:$0xff] %v1508
                  %v1510 = vld [vmem:[%s1472 + $0x90] sm:$0xff]
                  %1511 = vst [vmem:[%s1473 + $0x1b0] sm:$0xff] %v1510
                  %v1512 = vld [vmem:[%s1472 + $0x98] sm:$0xff]
                  %1513 = vst [vmem:[%s1473 + $0x1c8] sm:$0xff] %v1512
                  %v1514 = vld [vmem:[%s1472 + $0xa0] sm:$0xff]
                  %1515 = vst [vmem:[%s1473 + $0x1e0] sm:$0xff] %v1514
                  %v1516 = vld [vmem:[%s1472 + $0xa8] sm:$0xff]
                  %1517 = vst [vmem:[%s1473 + $0x1f8] sm:$0xff] %v1516
                  %v1518 = vld [vmem:[%s1472 + $0xb0] sm:$0xff]
                  %1519 = vst [vmem:[%s1473 + $0x210] sm:$0xff] %v1518
                  %v1520 = vld [vmem:[%s1472 + $0xb8] sm:$0xff]
                  %1521 = vst [vmem:[%s1473 + $0x228] sm:$0xff] %v1520
                  %v1522 = vld [vmem:[%s1472 + $0xc0] sm:$0xff]
                  %1523 = vst [vmem:[%s1473 + $0x240] sm:$0xff] %v1522
                  %v1524 = vld [vmem:[%s1472 + $0xc8] sm:$0xff]
                  %1525 = vst [vmem:[%s1473 + $0x258] sm:$0xff] %v1524
                  %v1526 = vld [vmem:[%s1472 + $0xd0] sm:$0xff]
                  %1527 = vst [vmem:[%s1473 + $0x270] sm:$0xff] %v1526
                  %v1528 = vld [vmem:[%s1472 + $0xd8] sm:$0xff]
                  %1529 = vst [vmem:[%s1473 + $0x288] sm:$0xff] %v1528
                  %v1530 = vld [vmem:[%s1472 + $0xe0] sm:$0xff]
                  %1531 = vst [vmem:[%s1473 + $0x2a0] sm:$0xff] %v1530
                  %v1532 = vld [vmem:[%s1472 + $0xe8] sm:$0xff]
                  %1533 = vst [vmem:[%s1473 + $0x2b8] sm:$0xff] %v1532
                  %v1534 = vld [vmem:[%s1472 + $0xf0] sm:$0xff]
                  %1535 = vst [vmem:[%s1473 + $0x2d0] sm:$0xff] %v1534
                  %v1536 = vld [vmem:[%s1472 + $0xf8] sm:$0xff]
                  %1537 = vst [vmem:[%s1473 + $0x2e8] sm:$0xff] %v1536
                $region80: #{self_attention_forward.3} parent=74 // loop_footer
                  %s1471 = sadd.s32 1, %s1467
                $region81: #{self_attention_forward.3} parent=74 // loop_footer_branch
                  %1466 = sbr.rel target = $region77
                $region82: #{self_attention_forward.3} parent=74 // loop_exit
                  _
              $region75: #{self_attention_forward.3} parent=59 // pred_fallthru
                _
              // Predicated region
              $region83: #{self_attention_forward.3} parent=59 // pred_check
                _
              $region84: #{self_attention_forward.3} parent=59 // pred_check_branch
                %1539 = sbr.rel target = $region86
              $region85: #{self_attention_forward.3} parent=59 // pred_region
                _
              $region86: #{self_attention_forward.3} parent=59 // pred_fallthru
                _
            $region60: #{self_attention_forward.3} parent=55 // pred_fallthru
              _
            // Predicated region
            $region61: #{self_attention_forward.3} parent=55 // pred_check
              _
            $region62: #{self_attention_forward.3} parent=55 // pred_check_branch
              %1390 = sbr.rel target = $region64
            $region63: #{self_attention_forward.3} parent=55 // pred_region
              loop: start=0, step=1, limit=1
              $region65: #{self_attention_forward.3} parent=63 // loop_pre_header
                _
              $region66: #{self_attention_forward.3} parent=63 // loop_header
                %s1393 = sphi 0, %s1397
                %p1394 = scmp.ge.s32.totalorder %s1393, 1
                %s1398 = sphi %s1375, %s1375
                %s1399 = sphi %s1384, %s1384
              $region67: #{self_attention_forward.3} parent=63 // loop_header_branch
                %1396 = sbr.rel (%p1394) target = $region71
              $region68: #{self_attention_forward.3} parent=63 // loop_body
                %v1400 = vld [vmem:[%s1398] sm:$0xff]
                %1401 = vst [vmem:[%s1399] sm:$0xff] %v1400
                %v1402 = vld [vmem:[%s1398 + $0x8] sm:$0xff]
                %1403 = vst [vmem:[%s1399 + $0x18] sm:$0xff] %v1402
                %v1404 = vld [vmem:[%s1398 + $0x10] sm:$0xff]
                %1405 = vst [vmem:[%s1399 + $0x30] sm:$0xff] %v1404
                %v1406 = vld [vmem:[%s1398 + $0x18] sm:$0xff]
                %1407 = vst [vmem:[%s1399 + $0x48] sm:$0xff] %v1406
                %v1408 = vld [vmem:[%s1398 + $0x20] sm:$0xff]
                %1409 = vst [vmem:[%s1399 + $0x60] sm:$0xff] %v1408
                %v1410 = vld [vmem:[%s1398 + $0x28] sm:$0xff]
                %1411 = vst [vmem:[%s1399 + $0x78] sm:$0xff] %v1410
                %v1412 = vld [vmem:[%s1398 + $0x30] sm:$0xff]
                %1413 = vst [vmem:[%s1399 + $0x90] sm:$0xff] %v1412
                %v1414 = vld [vmem:[%s1398 + $0x38] sm:$0xff]
                %1415 = vst [vmem:[%s1399 + $0xa8] sm:$0xff] %v1414
                %v1416 = vld [vmem:[%s1398 + $0x40] sm:$0xff]
                %1417 = vst [vmem:[%s1399 + $0xc0] sm:$0xff] %v1416
                %v1418 = vld [vmem:[%s1398 + $0x48] sm:$0xff]
                %1419 = vst [vmem:[%s1399 + $0xd8] sm:$0xff] %v1418
                %v1420 = vld [vmem:[%s1398 + $0x50] sm:$0xff]
                %1421 = vst [vmem:[%s1399 + $0xf0] sm:$0xff] %v1420
                %v1422 = vld [vmem:[%s1398 + $0x58] sm:$0xff]
                %1423 = vst [vmem:[%s1399 + $0x108] sm:$0xff] %v1422
                %v1424 = vld [vmem:[%s1398 + $0x60] sm:$0xff]
                %1425 = vst [vmem:[%s1399 + $0x120] sm:$0xff] %v1424
                %v1426 = vld [vmem:[%s1398 + $0x68] sm:$0xff]
                %1427 = vst [vmem:[%s1399 + $0x138] sm:$0xff] %v1426
                %v1428 = vld [vmem:[%s1398 + $0x70] sm:$0xff]
                %1429 = vst [vmem:[%s1399 + $0x150] sm:$0xff] %v1428
                %v1430 = vld [vmem:[%s1398 + $0x78] sm:$0xff]
                %1431 = vst [vmem:[%s1399 + $0x168] sm:$0xff] %v1430
                %v1432 = vld [vmem:[%s1398 + $0x80] sm:$0xff]
                %1433 = vst [vmem:[%s1399 + $0x180] sm:$0xff] %v1432
                %v1434 = vld [vmem:[%s1398 + $0x88] sm:$0xff]
                %1435 = vst [vmem:[%s1399 + $0x198] sm:$0xff] %v1434
                %v1436 = vld [vmem:[%s1398 + $0x90] sm:$0xff]
                %1437 = vst [vmem:[%s1399 + $0x1b0] sm:$0xff] %v1436
                %v1438 = vld [vmem:[%s1398 + $0x98] sm:$0xff]
                %1439 = vst [vmem:[%s1399 + $0x1c8] sm:$0xff] %v1438
                %v1440 = vld [vmem:[%s1398 + $0xa0] sm:$0xff]
                %1441 = vst [vmem:[%s1399 + $0x1e0] sm:$0xff] %v1440
                %v1442 = vld [vmem:[%s1398 + $0xa8] sm:$0xff]
                %1443 = vst [vmem:[%s1399 + $0x1f8] sm:$0xff] %v1442
                %v1444 = vld [vmem:[%s1398 + $0xb0] sm:$0xff]
                %1445 = vst [vmem:[%s1399 + $0x210] sm:$0xff] %v1444
                %v1446 = vld [vmem:[%s1398 + $0xb8] sm:$0xff]
                %1447 = vst [vmem:[%s1399 + $0x228] sm:$0xff] %v1446
                %v1448 = vld [vmem:[%s1398 + $0xc0] sm:$0xff]
                %1449 = vst [vmem:[%s1399 + $0x240] sm:$0xff] %v1448
                %v1450 = vld [vmem:[%s1398 + $0xc8] sm:$0xff]
                %1451 = vst [vmem:[%s1399 + $0x258] sm:$0xff] %v1450
                %v1452 = vld [vmem:[%s1398 + $0xd0] sm:$0xff]
                %1453 = vst [vmem:[%s1399 + $0x270] sm:$0xff] %v1452
                %v1454 = vld [vmem:[%s1398 + $0xd8] sm:$0xff]
                %1455 = vst [vmem:[%s1399 + $0x288] sm:$0xff] %v1454
                %v1456 = vld [vmem:[%s1398 + $0xe0] sm:$0xff]
                %1457 = vst [vmem:[%s1399 + $0x2a0] sm:$0xff] %v1456
                %v1458 = vld [vmem:[%s1398 + $0xe8] sm:$0xff]
                %1459 = vst [vmem:[%s1399 + $0x2b8] sm:$0xff] %v1458
                %v1460 = vld [vmem:[%s1398 + $0xf0] sm:$0xff]
                %1461 = vst [vmem:[%s1399 + $0x2d0] sm:$0xff] %v1460
                %v1462 = vld [vmem:[%s1398 + $0xf8] sm:$0xff]
                %1463 = vst [vmem:[%s1399 + $0x2e8] sm:$0xff] %v1462
              $region69: #{self_attention_forward.3} parent=63 // loop_footer
                %s1397 = sadd.s32 1, %s1393
              $region70: #{self_attention_forward.3} parent=63 // loop_footer_branch
                %1392 = sbr.rel target = $region66
              $region71: #{self_attention_forward.3} parent=63 // loop_exit
                _
            $region64: #{self_attention_forward.3} parent=55 // pred_fallthru
              _
          $region56: #{self_attention_forward.3} parent=51 // pred_fallthru
            _
          %1540 = vnop
        $region52: #{self_attention_forward.3} parent=31 // pred_fallthru
          _
      $region32: #{self_attention_forward.3} parent=5 // pred_fallthru
        _
      %p1541 = scmp.le.s32.totalorder 2, %s13
      // Predicated region
      $region87: #{self_attention_forward.3} parent=5 // pred_check
        %p1542 = pneg %p1541
      $region88: #{self_attention_forward.3} parent=5 // pred_check_branch
        %1544 = sbr.rel (%p1542) target = $region90
      $region89: #{self_attention_forward.3} parent=5 // pred_region
        %s1545 = ssub.s32 %s13, 2
        // Predicated region
        $region91: #{self_attention_forward.3} parent=89 // pred_check
          %p1546 = pneg %p145
        $region92: #{self_attention_forward.3} parent=89 // pred_check_branch
          %1548 = sbr.rel (%p1546) target = $region94
        $region93: #{self_attention_forward.3} parent=89 // pred_region
          %s1549 = sand.u32 %s130, 1
          %s1550 = sand.u32 %s130, 1
          %s1551 = smul.addr %s1550, 256
          %s1552 = scalar_lea.vmem [#allocation7], %s1551
        $region94: #{self_attention_forward.3} parent=89 // pred_fallthru
          _
      $region90: #{self_attention_forward.3} parent=5 // pred_fallthru
        _
    $region6: #{self_attention_forward.3} parent=1 // loop_footer
      %s17 = sadd.s32 1, %s13
    $region7: #{self_attention_forward.3} parent=1 // loop_footer_branch
      %12 = sbr.rel target = $region3
    $region8: #{self_attention_forward.3} parent=1 // loop_exit
      _
    %1553 = vsyncpa [#allocation4], 1
    %s1554 = scalar_lea.sflag [#allocation4], 1
    %1555 = vsyncpa %s1554, 1
    %1556 = vsyncpa [#allocation6], 1
    %s1557 = scalar_lea.sflag [#allocation6], 1
    %1558 = vsyncpa %s1557, 1

</llo_original>
